<compile_context>
chip_gen: v5e
topology: v5e:2x2
jax: 0.10.0
libtpu: 0.0.40
codegen_flags: <defaults>
</compile_context>

<pallas_src>
import math
import numpy as np

import jax
import jax.numpy as jnp
from jax import lax
from jax.experimental import pallas as pl
from jax.experimental.pallas import tpu as pltpu

# ----------------- model hyper-parameters (compile-time constants) -----------------
N_HEADS = 4
D_K = 8
D_V = 8
D_MODEL = 32
D_FF = 64
LN_EPS = 1e-5

MASKED_BIAS = -1.0e9       # matches torch masked_fill_(mask, -1e9)
CROSS_HEAD_BIAS = -1.0e30  # kills cross-head blocks of the head-batched score matrix


# ================================ in-kernel helpers ================================

def _layernorm(v, g, b):
    mu = jnp.mean(v, axis=-1, keepdims=True)
    var = jnp.mean((v - mu) ** 2, axis=-1, keepdims=True)
    return (v - mu) * lax.rsqrt(var + LN_EPS) * g + b


def _split_heads(proj, rep_mat, chunk_mask, fold_mat):
    # proj:       (S, N*dh)   flat row-major projection
    # rep_mat:    (N*S, S)    R[r, s]  = [s == r // N]
    # chunk_mask: (N*S, N*dh) CM[r, c] = [c // dh == r % N]
    # fold_mat:   (N*dh, dh)  F[c, d]  = [c % dh == d]
    # result:     (N*S, dh), row n*S + s == (head n, position s) -- exactly the torch
    # `.view(batch, N, -1, dh)` reinterpretation, built from matmuls + an elementwise
    # mask only (no reshape/transpose/gather inside the kernel).
    rep = jnp.dot(rep_mat, proj, preferred_element_type=jnp.float32)
    return jnp.dot(rep * chunk_mask, fold_mat, preferred_element_type=jnp.float32)


def _heads_attention(q_all, k_all, v_all, bias):
    # q_all (N*Sq, dk), k_all/v_all (N*Sk, dk|dv), bias (N*Sq, N*Sk) additive.
    # All heads processed as one block-diagonal score matrix; cross-head blocks are
    # disabled by bias = -1e30, masked positions carry -1e9 (torch semantics).
    scores = lax.dot_general(
        q_all, k_all, (((1,), (1,)), ((), ())),
        preferred_element_type=jnp.float32) * (1.0 / math.sqrt(D_K))
    scores = scores + bias
    scores = scores - jnp.max(scores, axis=-1, keepdims=True)
    e = jnp.exp(scores)
    p = e * pl.reciprocal(jnp.sum(e, axis=-1, keepdims=True), approx=True)
    return jnp.dot(p, v_all, preferred_element_type=jnp.float32)   # (N*Sq, dv)


def _merge_heads_out_proj(attn_all, wo_ref, bo_ref, sq):
    # cat @ Wo == sum_n attn_head_n @ Wo[n*dv:(n+1)*dv]  -- folds the
    # `transpose(1,2).contiguous().view(...)` glue into per-head accumulation.
    acc = jnp.zeros((sq, wo_ref.shape[1]), jnp.float32)
    for n in range(N_HEADS):
        acc = acc + jnp.dot(attn_all[n * sq:(n + 1) * sq, :],
                            wo_ref[n * D_V:(n + 1) * D_V, :],
                            preferred_element_type=jnp.float32)
    return acc + bo_ref[...]


# ================================ fused kernel ================================

def decoder_sublayer_kernel(
    # per-batch blocks
    dec_ref, enc_ref, bias_self_ref, bias_cross_ref,
    # constant head-regroup matrices
    rq_ref, rkv_ref, cmq_ref, cmkv_ref, fold_ref,
    # MHA 1 (masked self-attention)
    wq1_ref, bq1_ref, wk1_ref, bk1_ref, wv1_ref, bv1_ref,
    wo1_ref, bo1_ref, g1_ref, be1_ref,
    # MHA 2 (cross-attention over encoder output)
    wq2_ref, bq2_ref, wk2_ref, bk2_ref, wv2_ref, bv2_ref,
    wo2_ref, bo2_ref, g2_ref, be2_ref,
    # FFN
    wf1_ref, bf1_ref, wf2_ref, bf2_ref, gf_ref, bef_ref,
    # output
    o_ref,
):
    f32 = jnp.float32
    x = dec_ref[...]            # (Sq, D)
    enc = enc_ref[...]          # (Sk, D)
    sq = x.shape[0]

    rq, cmq = rq_ref[...], cmq_ref[...]
    rkv, cmkv = rkv_ref[...], cmkv_ref[...]
    fold = fold_ref[...]

    # ---------------- MHA 1: self-attention (Q = K = V = decode input) ----------------
    qp = jnp.dot(x, wq1_ref[...], preferred_element_type=f32) + bq1_ref[...]
    kp = jnp.dot(x, wk1_ref[...], preferred_element_type=f32) + bk1_ref[...]
    vp = jnp.dot(x, wv1_ref[...], preferred_element_type=f32) + bv1_ref[...]
    q_all = _split_heads(qp, rq, cmq, fold)            # (N*Sq, dk)
    k_all = _split_heads(kp, rq, cmq, fold)            # (N*Sq, dk)
    v_all = _split_heads(vp, rq, cmq, fold)            # (N*Sq, dv)
    attn1 = _heads_attention(q_all, k_all, v_all, bias_self_ref[...])
    y1 = _merge_heads_out_proj(attn1, wo1_ref, bo1_ref, sq)
    x1 = _layernorm(y1 + x, g1_ref[...], be1_ref[...])

    # ---------------- MHA 2: cross-attention (Q from x1, K = V = encoder) ----------------
    qp2 = jnp.dot(x1, wq2_ref[...], preferred_element_type=f32) + bq2_ref[...]
    kp2 = jnp.dot(enc, wk2_ref[...], preferred_element_type=f32) + bk2_ref[...]
    vp2 = jnp.dot(enc, wv2_ref[...], preferred_element_type=f32) + bv2_ref[...]
    q_all2 = _split_heads(qp2, rq, cmq, fold)           # (N*Sq, dk)
    k_all2 = _split_heads(kp2, rkv, cmkv, fold)         # (N*Sk, dk)
    v_all2 = _split_heads(vp2, rkv, cmkv, fold)         # (N*Sk, dv)
    attn2 = _heads_attention(q_all2, k_all2, v_all2, bias_cross_ref[...])
    y2 = _merge_heads_out_proj(attn2, wo2_ref, bo2_ref, sq)
    x2 = _layernorm(y2 + x1, g2_ref[...], be2_ref[...])

    # ---------------- FFN ----------------
    h = jnp.maximum(jnp.dot(x2, wf1_ref[...], preferred_element_type=f32) + bf1_ref[...], 0.0)
    y3 = jnp.dot(h, wf2_ref[...], preferred_element_type=f32) + bf2_ref[...]
    o_ref[...] = _layernorm(y3 + x2, gf_ref[...], bef_ref[...])


# ================================ host-side constant builders ================================

def _repeat_matrix(seq, n):
    # (n*seq, seq): R[r, s] = 1 iff s == r // n
    r = np.arange(n * seq)
    return (np.arange(seq)[None, :] == (r // n)[:, None]).astype(np.float32)


def _chunk_mask(seq, n, dh):
    # (n*seq, n*dh): CM[r, c] = 1 iff c // dh == r % n
    r = np.arange(n * seq)
    c = np.arange(n * dh)
    return ((c[None, :] // dh) == (r[:, None] % n)).astype(np.float32)


def _fold_matrix(n, dh):
    # (n*dh, dh): F[c, d] = 1 iff c % dh == d
    c = np.arange(n * dh)
    return ((c[:, None] % dh) == np.arange(dh)[None, :]).astype(np.float32)


def _mask_to_bias(mask, n_heads):
    # mask: (B, Sq, Sk) int, nonzero == masked.  Returns (B, N*Sq, N*Sk) additive bias:
    # 0 keep / -1e9 masked on the per-head diagonal blocks, -1e30 on cross-head blocks.
    B, Sq, Sk = mask.shape
    user = jnp.where(mask != 0, jnp.float32(MASKED_BIAS), jnp.float32(0.0))  # (B, Sq, Sk)
    same_head = np.eye(n_heads, dtype=bool)[None, :, None, :, None]          # (1,N,1,N,1)
    bias = jnp.where(jnp.asarray(same_head), user[:, None, :, None, :],
                     jnp.float32(CROSS_HEAD_BIAS))                           # (B,N,Sq,N,Sk)
    return bias.reshape(B, n_heads * Sq, n_heads * Sk)


# ================================ module forward (single pallas_call) ================================

def decoder_sublayer(params, decode_input, encode_output, pad_mask, encode_mask):
    B, Sq, D = decode_input.shape
    Sk = encode_output.shape[1]

    bias_self = _mask_to_bias(encode_mask, N_HEADS)    # (B, N*Sq, N*Sq)
    bias_cross = _mask_to_bias(pad_mask, N_HEADS)      # (B, N*Sq, N*Sk)

    rq = jnp.asarray(_repeat_matrix(Sq, N_HEADS))      # (N*Sq, Sq)
    rkv = jnp.asarray(_repeat_matrix(Sk, N_HEADS))     # (N*Sk, Sk)
    cmq = jnp.asarray(_chunk_mask(Sq, N_HEADS, D_K))   # (N*Sq, N*dk)
    cmkv = jnp.asarray(_chunk_mask(Sk, N_HEADS, D_K))  # (N*Sk, N*dk)
    fold = jnp.asarray(_fold_matrix(N_HEADS, D_K))     # (N*dk, dk)

    p1, p2, pf = params["mha1"], params["mha2"], params["ffn"]

    batched = [decode_input, encode_output, bias_self, bias_cross]
    shared = [
        rq, rkv, cmq, cmkv, fold,
        p1["wq"], p1["bq"], p1["wk"], p1["bk"], p1["wv"], p1["bv"],
        p1["wo"], p1["bo"], p1["ln_g"], p1["ln_b"],
        p2["wq"], p2["bq"], p2["wk"], p2["bk"], p2["wv"], p2["bv"],
        p2["wo"], p2["bo"], p2["ln_g"], p2["ln_b"],
        pf["w1"], pf["b1"], pf["w2"], pf["b2"], pf["ln_g"], pf["ln_b"],
    ]

    def batched_spec(a):
        return pl.BlockSpec((None,) + tuple(a.shape[1:]), lambda b: (b, 0, 0))

    def shared_spec(a):
        nd = a.ndim
        return pl.BlockSpec(tuple(a.shape), lambda b, _nd=nd: (0,) * _nd)

    in_specs = [batched_spec(a) for a in batched] + [shared_spec(a) for a in shared]

    return pl.pallas_call(
        decoder_sublayer_kernel,
        out_shape=jax.ShapeDtypeStruct((B, Sq, D), jnp.float32),
        grid=(B,),
        in_specs=in_specs,
        out_specs=pl.BlockSpec((None, Sq, D), lambda b: (b, 0, 0)),
        compiler_params=pltpu.CompilerParams(dimension_semantics=("parallel",)),
    )(*batched, *shared)


# ================================ pure-JAX reference ================================

def _ref_ln(x, g, b):
    mu = jnp.mean(x, axis=-1, keepdims=True)
    var = jnp.mean((x - mu) ** 2, axis=-1, keepdims=True)
    return (x - mu) / jnp.sqrt(var + LN_EPS) * g + b


def _ref_mha(p, xq, xkv, mask):
    B, Sq, _ = xq.shape
    Sk = xkv.shape[1]
    q = xq @ p["wq"] + p["bq"]
    k = xkv @ p["wk"] + p["bk"]
    v = xkv @ p["wv"] + p["bv"]
    qv = q.reshape(B, N_HEADS, Sq, D_K)      # torch .view reinterpretation
    kv = k.reshape(B, N_HEADS, Sk, D_K)
    vv = v.reshape(B, N_HEADS, Sk, D_V)
    scores = jnp.einsum("bnqd,bnkd->bnqk", qv, kv) / math.sqrt(D_K)
    scores = jnp.where(mask[:, None, :, :] != 0, -1.0e9, scores)
    w = jax.nn.softmax(scores, axis=-1)
    av = jnp.einsum("bnqk,bnkd->bnqd", w, vv)
    cat = jnp.transpose(av, (0, 2, 1, 3)).reshape(B, Sq, N_HEADS * D_V)
    y = cat @ p["wo"] + p["bo"]
    return _ref_ln(y + xq, p["ln_g"], p["ln_b"])


def _ref_decoder(params, decode_input, encode_output, pad_mask, encode_mask):
    out = _ref_mha(params["mha1"], decode_input, decode_input, encode_mask)
    out = _ref_mha(params["mha2"], out, encode_output, pad_mask)
    h = jnp.maximum(out @ params["ffn"]["w1"] + params["ffn"]["b1"], 0.0)
    y = h @ params["ffn"]["w2"] + params["ffn"]["b2"]
    return _ref_ln(y + out, params["ffn"]["ln_g"], params["ffn"]["ln_b"])


# ================================ parameter init ================================

def _lin(key, din, dout):
    k1, k2 = jax.random.split(key)
    scale = 1.0 / math.sqrt(din)
    w = jax.random.uniform(k1, (din, dout), jnp.float32, -scale, scale)
    b = jax.random.uniform(k2, (1, dout), jnp.float32, -scale, scale)
    return w, b


def _mha_params(key):
    ks = jax.random.split(key, 4)
    wq, bq = _lin(ks[0], D_MODEL, N_HEADS * D_K)
    wk, bk = _lin(ks[1], D_MODEL, N_HEADS * D_K)
    wv, bv = _lin(ks[2], D_MODEL, N_HEADS * D_V)
    wo, bo = _lin(ks[3], N_HEADS * D_V, D_MODEL)
    return dict(
        wq=wq, bq=bq, wk=wk, bk=bk, wv=wv, bv=bv, wo=wo, bo=bo,
        ln_g=jnp.ones((1, D_MODEL), jnp.float32),
        ln_b=jnp.zeros((1, D_MODEL), jnp.float32),
    )


def init_params(key):
    k1, k2, k3 = jax.random.split(key, 3)
    kf1, kf2 = jax.random.split(k3)
    w1, b1 = _lin(kf1, D_MODEL, D_FF)
    w2, b2 = _lin(kf2, D_FF, D_MODEL)
    return dict(
        mha1=_mha_params(k1),
        mha2=_mha_params(k2),
        ffn=dict(
            w1=w1, b1=b1, w2=w2, b2=b2,
            ln_g=jnp.ones((1, D_MODEL), jnp.float32),
            ln_b=jnp.zeros((1, D_MODEL), jnp.float32),
        ),
    )


# ================================ main ================================

if __name__ == "__main__":
    key = jax.random.PRNGKey(0)
    kp, kd, ke = jax.random.split(key, 3)

    B, S_DEC, S_ENC = 2, 8, 16
    params = init_params(kp)
    decode_input = jax.random.normal(kd, (B, S_DEC, D_MODEL), jnp.float32)
    encode_output = jax.random.normal(ke, (B, S_ENC, D_MODEL), jnp.float32)

    # masks: nonzero == masked (torch masked_fill_ semantics)
    causal = (jnp.arange(S_DEC)[None, :] > jnp.arange(S_DEC)[:, None]).astype(jnp.int32)
    encode_mask = jnp.broadcast_to(causal[None, :, :], (B, S_DEC, S_DEC)).astype(jnp.int32)
    pad_row = (jnp.arange(S_ENC) >= S_ENC - 3).astype(jnp.int32)
    pad_mask = jnp.broadcast_to(pad_row[None, None, :], (B, S_DEC, S_ENC)).astype(jnp.int32)

    fwd = jax.jit(decoder_sublayer)
    out = fwd(params, decode_input, encode_output, pad_mask, encode_mask)
    out = jax.block_until_ready(out)

    ref = _ref_decoder(params, decode_input, encode_output, pad_mask, encode_mask)
    max_err = float(jnp.max(jnp.abs(out - ref)))
    assert out.shape == (B, S_DEC, D_MODEL)
    if max_err < 2e-2:
        print("KERNEL_OK")
    else:
        print(f"MISMATCH max_err={max_err}")
</pallas_src>

<mosaic_0001>
module attributes {stable_mosaic.version = 11 : i64} {
  func.func @decoder_sublayer_kernel(%arg0: i32, %arg1: memref<1x8x32xf32, #tpu.memory_space<vmem>>, %arg2: memref<1x16x32xf32, #tpu.memory_space<vmem>>, %arg3: memref<1x32x32xf32, #tpu.memory_space<vmem>>, %arg4: memref<1x32x64xf32, #tpu.memory_space<vmem>>, %arg5: memref<32x8xf32, #tpu.memory_space<vmem>>, %arg6: memref<64x16xf32, #tpu.memory_space<vmem>>, %arg7: memref<32x32xf32, #tpu.memory_space<vmem>>, %arg8: memref<64x32xf32, #tpu.memory_space<vmem>>, %arg9: memref<32x8xf32, #tpu.memory_space<vmem>>, %arg10: memref<32x32xf32, #tpu.memory_space<vmem>>, %arg11: memref<1x32xf32, #tpu.memory_space<vmem>>, %arg12: memref<32x32xf32, #tpu.memory_space<vmem>>, %arg13: memref<1x32xf32, #tpu.memory_space<vmem>>, %arg14: memref<32x32xf32, #tpu.memory_space<vmem>>, %arg15: memref<1x32xf32, #tpu.memory_space<vmem>>, %arg16: memref<32x32xf32, #tpu.memory_space<vmem>>, %arg17: memref<1x32xf32, #tpu.memory_space<vmem>>, %arg18: memref<1x32xf32, #tpu.memory_space<vmem>>, %arg19: memref<1x32xf32, #tpu.memory_space<vmem>>, %arg20: memref<32x32xf32, #tpu.memory_space<vmem>>, %arg21: memref<1x32xf32, #tpu.memory_space<vmem>>, %arg22: memref<32x32xf32, #tpu.memory_space<vmem>>, %arg23: memref<1x32xf32, #tpu.memory_space<vmem>>, %arg24: memref<32x32xf32, #tpu.memory_space<vmem>>, %arg25: memref<1x32xf32, #tpu.memory_space<vmem>>, %arg26: memref<32x32xf32, #tpu.memory_space<vmem>>, %arg27: memref<1x32xf32, #tpu.memory_space<vmem>>, %arg28: memref<1x32xf32, #tpu.memory_space<vmem>>, %arg29: memref<1x32xf32, #tpu.memory_space<vmem>>, %arg30: memref<32x64xf32, #tpu.memory_space<vmem>>, %arg31: memref<1x64xf32, #tpu.memory_space<vmem>>, %arg32: memref<64x32xf32, #tpu.memory_space<vmem>>, %arg33: memref<1x32xf32, #tpu.memory_space<vmem>>, %arg34: memref<1x32xf32, #tpu.memory_space<vmem>>, %arg35: memref<1x32xf32, #tpu.memory_space<vmem>>, %arg36: memref<1x8x32xf32, #tpu.memory_space<vmem>>) attributes {dimension_semantics = [#tpu.dimension_semantics<parallel>], iteration_bounds = array<i64: 2>, scalar_prefetch = 0 : i64, scratch_operands = 0 : i64, tpu.core_type = #tpu.core_type<tc>, window_params = [{transform_indices = @transform_0, window_bounds = array<i64: 1, 8, 32>}, {transform_indices = @transform_1, window_bounds = array<i64: 1, 16, 32>}, {transform_indices = @transform_2, window_bounds = array<i64: 1, 32, 32>}, {transform_indices = @transform_3, window_bounds = array<i64: 1, 32, 64>}, {pipeline_mode = #tpu.pipeline_mode<synchronous>, transform_indices = @transform_4, window_bounds = array<i64: 32, 8>}, {pipeline_mode = #tpu.pipeline_mode<synchronous>, transform_indices = @transform_5, window_bounds = array<i64: 64, 16>}, {pipeline_mode = #tpu.pipeline_mode<synchronous>, transform_indices = @transform_6, window_bounds = array<i64: 32, 32>}, {pipeline_mode = #tpu.pipeline_mode<synchronous>, transform_indices = @transform_7, window_bounds = array<i64: 64, 32>}, {pipeline_mode = #tpu.pipeline_mode<synchronous>, transform_indices = @transform_8, window_bounds = array<i64: 32, 8>}, {pipeline_mode = #tpu.pipeline_mode<synchronous>, transform_indices = @transform_9, window_bounds = array<i64: 32, 32>}, {pipeline_mode = #tpu.pipeline_mode<synchronous>, transform_indices = @transform_10, window_bounds = array<i64: 1, 32>}, {pipeline_mode = #tpu.pipeline_mode<synchronous>, transform_indices = @transform_11, window_bounds = array<i64: 32, 32>}, {pipeline_mode = #tpu.pipeline_mode<synchronous>, transform_indices = @transform_12, window_bounds = array<i64: 1, 32>}, {pipeline_mode = #tpu.pipeline_mode<synchronous>, transform_indices = @transform_13, window_bounds = array<i64: 32, 32>}, {pipeline_mode = #tpu.pipeline_mode<synchronous>, transform_indices = @transform_14, window_bounds = array<i64: 1, 32>}, {pipeline_mode = #tpu.pipeline_mode<synchronous>, transform_indices = @transform_15, window_bounds = array<i64: 32, 32>}, {pipeline_mode = #tpu.pipeline_mode<synchronous>, transform_indices = @transform_16, window_bounds = array<i64: 1, 32>}, {pipeline_mode = #tpu.pipeline_mode<synchronous>, transform_indices = @transform_17, window_bounds = array<i64: 1, 32>}, {pipeline_mode = #tpu.pipeline_mode<synchronous>, transform_indices = @transform_18, window_bounds = array<i64: 1, 32>}, {pipeline_mode = #tpu.pipeline_mode<synchronous>, transform_indices = @transform_19, window_bounds = array<i64: 32, 32>}, {pipeline_mode = #tpu.pipeline_mode<synchronous>, transform_indices = @transform_20, window_bounds = array<i64: 1, 32>}, {pipeline_mode = #tpu.pipeline_mode<synchronous>, transform_indices = @transform_21, window_bounds = array<i64: 32, 32>}, {pipeline_mode = #tpu.pipeline_mode<synchronous>, transform_indices = @transform_22, window_bounds = array<i64: 1, 32>}, {pipeline_mode = #tpu.pipeline_mode<synchronous>, transform_indices = @transform_23, window_bounds = array<i64: 32, 32>}, {pipeline_mode = #tpu.pipeline_mode<synchronous>, transform_indices = @transform_24, window_bounds = array<i64: 1, 32>}, {pipeline_mode = #tpu.pipeline_mode<synchronous>, transform_indices = @transform_25, window_bounds = array<i64: 32, 32>}, {pipeline_mode = #tpu.pipeline_mode<synchronous>, transform_indices = @transform_26, window_bounds = array<i64: 1, 32>}, {pipeline_mode = #tpu.pipeline_mode<synchronous>, transform_indices = @transform_27, window_bounds = array<i64: 1, 32>}, {pipeline_mode = #tpu.pipeline_mode<synchronous>, transform_indices = @transform_28, window_bounds = array<i64: 1, 32>}, {pipeline_mode = #tpu.pipeline_mode<synchronous>, transform_indices = @transform_29, window_bounds = array<i64: 32, 64>}, {pipeline_mode = #tpu.pipeline_mode<synchronous>, transform_indices = @transform_30, window_bounds = array<i64: 1, 64>}, {pipeline_mode = #tpu.pipeline_mode<synchronous>, transform_indices = @transform_31, window_bounds = array<i64: 64, 32>}, {pipeline_mode = #tpu.pipeline_mode<synchronous>, transform_indices = @transform_32, window_bounds = array<i64: 1, 32>}, {pipeline_mode = #tpu.pipeline_mode<synchronous>, transform_indices = @transform_33, window_bounds = array<i64: 1, 32>}, {pipeline_mode = #tpu.pipeline_mode<synchronous>, transform_indices = @transform_34, window_bounds = array<i64: 1, 32>}, {transform_indices = @transform_35, window_bounds = array<i64: 1, 8, 32>}]} {
    %c0 = arith.constant 0 : index
    %c0_0 = arith.constant 0 : index
    %c0_1 = arith.constant 0 : index
    %0 = vector.load %arg1[%c0, %c0_0, %c0_1] : memref<1x8x32xf32, #tpu.memory_space<vmem>>, vector<1x8x32xf32>
    %1 = vector.shape_cast %0 : vector<1x8x32xf32> to vector<8x32xf32>
    %c0_2 = arith.constant 0 : index
    %c0_3 = arith.constant 0 : index
    %c0_4 = arith.constant 0 : index
    %2 = vector.load %arg2[%c0_2, %c0_3, %c0_4] : memref<1x16x32xf32, #tpu.memory_space<vmem>>, vector<1x16x32xf32>
    %3 = vector.shape_cast %2 : vector<1x16x32xf32> to vector<16x32xf32>
    %c0_5 = arith.constant 0 : index
    %c0_6 = arith.constant 0 : index
    %4 = vector.load %arg5[%c0_5, %c0_6] : memref<32x8xf32, #tpu.memory_space<vmem>>, vector<32x8xf32>
    %c0_7 = arith.constant 0 : index
    %c0_8 = arith.constant 0 : index
    %5 = vector.load %arg7[%c0_7, %c0_8] : memref<32x32xf32, #tpu.memory_space<vmem>>, vector<32x32xf32>
    %c0_9 = arith.constant 0 : index
    %c0_10 = arith.constant 0 : index
    %6 = vector.load %arg6[%c0_9, %c0_10] : memref<64x16xf32, #tpu.memory_space<vmem>>, vector<64x16xf32>
    %c0_11 = arith.constant 0 : index
    %c0_12 = arith.constant 0 : index
    %7 = vector.load %arg8[%c0_11, %c0_12] : memref<64x32xf32, #tpu.memory_space<vmem>>, vector<64x32xf32>
    %c0_13 = arith.constant 0 : index
    %c0_14 = arith.constant 0 : index
    %8 = vector.load %arg9[%c0_13, %c0_14] : memref<32x8xf32, #tpu.memory_space<vmem>>, vector<32x8xf32>
    %c0_15 = arith.constant 0 : index
    %c0_16 = arith.constant 0 : index
    %9 = vector.load %arg10[%c0_15, %c0_16] : memref<32x32xf32, #tpu.memory_space<vmem>>, vector<32x32xf32>
    %cst = arith.constant dense<0.000000e+00> : vector<8x32xf32>
    %10 = tpu.matmul %1, %9, %cst {dimension_numbers = #tpu.dot_dimension_numbers<[1], [0], [0], [1], [0, 0, 1, 1], [], []>} : vector<8x32xf32>, vector<32x32xf32>, vector<8x32xf32> -> vector<8x32xf32>
    %c0_17 = arith.constant 0 : index
    %c0_18 = arith.constant 0 : index
    %11 = vector.load %arg11[%c0_17, %c0_18] : memref<1x32xf32, #tpu.memory_space<vmem>>, vector<1x32xf32>
    %12 = vector.broadcast %11 : vector<1x32xf32> to vector<8x32xf32>
    %13 = arith.addf %10, %12 : vector<8x32xf32>
    %c0_19 = arith.constant 0 : index
    %c0_20 = arith.constant 0 : index
    %14 = vector.load %arg12[%c0_19, %c0_20] : memref<32x32xf32, #tpu.memory_space<vmem>>, vector<32x32xf32>
    %cst_21 = arith.constant dense<0.000000e+00> : vector<8x32xf32>
    %15 = tpu.matmul %1, %14, %cst_21 {dimension_numbers = #tpu.dot_dimension_numbers<[1], [0], [0], [1], [0, 0, 1, 1], [], []>} : vector<8x32xf32>, vector<32x32xf32>, vector<8x32xf32> -> vector<8x32xf32>
    %c0_22 = arith.constant 0 : index
    %c0_23 = arith.constant 0 : index
    %16 = vector.load %arg13[%c0_22, %c0_23] : memref<1x32xf32, #tpu.memory_space<vmem>>, vector<1x32xf32>
    %17 = vector.broadcast %16 : vector<1x32xf32> to vector<8x32xf32>
    %18 = arith.addf %15, %17 : vector<8x32xf32>
    %c0_24 = arith.constant 0 : index
    %c0_25 = arith.constant 0 : index
    %19 = vector.load %arg14[%c0_24, %c0_25] : memref<32x32xf32, #tpu.memory_space<vmem>>, vector<32x32xf32>
    %cst_26 = arith.constant dense<0.000000e+00> : vector<8x32xf32>
    %20 = tpu.matmul %1, %19, %cst_26 {dimension_numbers = #tpu.dot_dimension_numbers<[1], [0], [0], [1], [0, 0, 1, 1], [], []>} : vector<8x32xf32>, vector<32x32xf32>, vector<8x32xf32> -> vector<8x32xf32>
    %c0_27 = arith.constant 0 : index
    %c0_28 = arith.constant 0 : index
    %21 = vector.load %arg15[%c0_27, %c0_28] : memref<1x32xf32, #tpu.memory_space<vmem>>, vector<1x32xf32>
    %22 = vector.broadcast %21 : vector<1x32xf32> to vector<8x32xf32>
    %23 = arith.addf %20, %22 : vector<8x32xf32>
    %cst_29 = arith.constant dense<0.000000e+00> : vector<32x32xf32>
    %24 = tpu.matmul %4, %13, %cst_29 {dimension_numbers = #tpu.dot_dimension_numbers<[1], [0], [0], [1], [0, 0, 1, 1], [], []>} : vector<32x8xf32>, vector<8x32xf32>, vector<32x32xf32> -> vector<32x32xf32>
    %25 = arith.mulf %24, %5 : vector<32x32xf32>
    %cst_30 = arith.constant dense<0.000000e+00> : vector<32x8xf32>
    %26 = tpu.matmul %25, %8, %cst_30 {dimension_numbers = #tpu.dot_dimension_numbers<[1], [0], [0], [1], [0, 0, 1, 1], [], []>} : vector<32x32xf32>, vector<32x8xf32>, vector<32x8xf32> -> vector<32x8xf32>
    %cst_31 = arith.constant dense<0.000000e+00> : vector<32x32xf32>
    %27 = tpu.matmul %4, %18, %cst_31 {dimension_numbers = #tpu.dot_dimension_numbers<[1], [0], [0], [1], [0, 0, 1, 1], [], []>} : vector<32x8xf32>, vector<8x32xf32>, vector<32x32xf32> -> vector<32x32xf32>
    %28 = arith.mulf %27, %5 : vector<32x32xf32>
    %cst_32 = arith.constant dense<0.000000e+00> : vector<32x8xf32>
    %29 = tpu.matmul %28, %8, %cst_32 {dimension_numbers = #tpu.dot_dimension_numbers<[1], [0], [0], [1], [0, 0, 1, 1], [], []>} : vector<32x32xf32>, vector<32x8xf32>, vector<32x8xf32> -> vector<32x8xf32>
    %cst_33 = arith.constant dense<0.000000e+00> : vector<32x32xf32>
    %30 = tpu.matmul %4, %23, %cst_33 {dimension_numbers = #tpu.dot_dimension_numbers<[1], [0], [0], [1], [0, 0, 1, 1], [], []>} : vector<32x8xf32>, vector<8x32xf32>, vector<32x32xf32> -> vector<32x32xf32>
    %31 = arith.mulf %30, %5 : vector<32x32xf32>
    %cst_34 = arith.constant dense<0.000000e+00> : vector<32x8xf32>
    %32 = tpu.matmul %31, %8, %cst_34 {dimension_numbers = #tpu.dot_dimension_numbers<[1], [0], [0], [1], [0, 0, 1, 1], [], []>} : vector<32x32xf32>, vector<32x8xf32>, vector<32x8xf32> -> vector<32x8xf32>
    %c0_35 = arith.constant 0 : index
    %c0_36 = arith.constant 0 : index
    %c0_37 = arith.constant 0 : index
    %33 = vector.load %arg3[%c0_35, %c0_36, %c0_37] : memref<1x32x32xf32, #tpu.memory_space<vmem>>, vector<1x32x32xf32>
    %34 = vector.shape_cast %33 : vector<1x32x32xf32> to vector<32x32xf32>
    %cst_38 = arith.constant dense<0.000000e+00> : vector<32x32xf32>
    %35 = tpu.matmul %26, %29, %cst_38 {dimension_numbers = #tpu.dot_dimension_numbers<[1], [1], [0], [0], [0, 0, 1, 0], [], []>} : vector<32x8xf32>, vector<32x8xf32>, vector<32x32xf32> -> vector<32x32xf32>
    %cst_39 = arith.constant 0.353553385 : f32
    %36 = vector.broadcast %cst_39 : f32 to vector<32x32xf32>
    %37 = arith.mulf %35, %36 : vector<32x32xf32>
    %38 = arith.addf %37, %34 : vector<32x32xf32>
    %cst_40 = arith.constant dense<0xFF800000> : vector<32xf32>
    %39 = vector.multi_reduction <maximumf>, %38, %cst_40 [1] : vector<32x32xf32> to vector<32xf32>
    %40 = vector.shape_cast %39 : vector<32xf32> to vector<32x1xf32>
    %41 = vector.broadcast %40 : vector<32x1xf32> to vector<32x32xf32>
    %42 = arith.subf %38, %41 : vector<32x32xf32>
    %43 = math.exp %42 : vector<32x32xf32>
    %cst_41 = arith.constant dense<0.000000e+00> : vector<32xf32>
    %44 = vector.multi_reduction <add>, %43, %cst_41 [1] : vector<32x32xf32> to vector<32xf32>
    %45 = vector.shape_cast %44 : vector<32xf32> to vector<32x1xf32>
    %46 = tpu.reciprocal %45 {approx = true} : vector<32x1xf32> -> vector<32x1xf32>
    %47 = vector.broadcast %46 : vector<32x1xf32> to vector<32x32xf32>
    %48 = arith.mulf %43, %47 : vector<32x32xf32>
    %cst_42 = arith.constant dense<0.000000e+00> : vector<32x8xf32>
    %49 = tpu.matmul %48, %32, %cst_42 {dimension_numbers = #tpu.dot_dimension_numbers<[1], [0], [0], [1], [0, 0, 1, 1], [], []>} : vector<32x32xf32>, vector<32x8xf32>, vector<32x8xf32> -> vector<32x8xf32>
    %cst_43 = arith.constant 0.000000e+00 : f32
    %50 = vector.broadcast %cst_43 : f32 to vector<8x32xf32>
    %51 = vector.extract_strided_slice %49 {offsets = [0, 0], sizes = [8, 8], strides = [1, 1]} : vector<32x8xf32> to vector<8x8xf32>
    %c0_44 = arith.constant 0 : index
    %c0_45 = arith.constant 0 : index
    %52 = vector.load %arg16[%c0_44, %c0_45] : memref<32x32xf32, #tpu.memory_space<vmem>>, vector<8x32xf32>
    %cst_46 = arith.constant dense<0.000000e+00> : vector<8x32xf32>
    %53 = tpu.matmul %51, %52, %cst_46 {dimension_numbers = #tpu.dot_dimension_numbers<[1], [0], [0], [1], [0, 0, 1, 1], [], []>} : vector<8x8xf32>, vector<8x32xf32>, vector<8x32xf32> -> vector<8x32xf32>
    %54 = arith.addf %50, %53 : vector<8x32xf32>
    %55 = vector.extract_strided_slice %49 {offsets = [8, 0], sizes = [8, 8], strides = [1, 1]} : vector<32x8xf32> to vector<8x8xf32>
    %c8 = arith.constant 8 : index
    %c0_47 = arith.constant 0 : index
    %56 = vector.load %arg16[%c8, %c0_47] : memref<32x32xf32, #tpu.memory_space<vmem>>, vector<8x32xf32>
    %cst_48 = arith.constant dense<0.000000e+00> : vector<8x32xf32>
    %57 = tpu.matmul %55, %56, %cst_48 {dimension_numbers = #tpu.dot_dimension_numbers<[1], [0], [0], [1], [0, 0, 1, 1], [], []>} : vector<8x8xf32>, vector<8x32xf32>, vector<8x32xf32> -> vector<8x32xf32>
    %58 = arith.addf %54, %57 : vector<8x32xf32>
    %59 = vector.extract_strided_slice %49 {offsets = [16, 0], sizes = [8, 8], strides = [1, 1]} : vector<32x8xf32> to vector<8x8xf32>
    %c16 = arith.constant 16 : index
    %c0_49 = arith.constant 0 : index
    %60 = vector.load %arg16[%c16, %c0_49] : memref<32x32xf32, #tpu.memory_space<vmem>>, vector<8x32xf32>
    %cst_50 = arith.constant dense<0.000000e+00> : vector<8x32xf32>
    %61 = tpu.matmul %59, %60, %cst_50 {dimension_numbers = #tpu.dot_dimension_numbers<[1], [0], [0], [1], [0, 0, 1, 1], [], []>} : vector<8x8xf32>, vector<8x32xf32>, vector<8x32xf32> -> vector<8x32xf32>
    %62 = arith.addf %58, %61 : vector<8x32xf32>
    %63 = vector.extract_strided_slice %49 {offsets = [24, 0], sizes = [8, 8], strides = [1, 1]} : vector<32x8xf32> to vector<8x8xf32>
    %c24 = arith.constant 24 : index
    %c0_51 = arith.constant 0 : index
    %64 = vector.load %arg16[%c24, %c0_51] : memref<32x32xf32, #tpu.memory_space<vmem>>, vector<8x32xf32>
    %cst_52 = arith.constant dense<0.000000e+00> : vector<8x32xf32>
    %65 = tpu.matmul %63, %64, %cst_52 {dimension_numbers = #tpu.dot_dimension_numbers<[1], [0], [0], [1], [0, 0, 1, 1], [], []>} : vector<8x8xf32>, vector<8x32xf32>, vector<8x32xf32> -> vector<8x32xf32>
    %66 = arith.addf %62, %65 : vector<8x32xf32>
    %c0_53 = arith.constant 0 : index
    %c0_54 = arith.constant 0 : index
    %67 = vector.load %arg17[%c0_53, %c0_54] : memref<1x32xf32, #tpu.memory_space<vmem>>, vector<1x32xf32>
    %68 = vector.broadcast %67 : vector<1x32xf32> to vector<8x32xf32>
    %69 = arith.addf %66, %68 : vector<8x32xf32>
    %70 = arith.addf %69, %1 : vector<8x32xf32>
    %c0_55 = arith.constant 0 : index
    %c0_56 = arith.constant 0 : index
    %71 = vector.load %arg18[%c0_55, %c0_56] : memref<1x32xf32, #tpu.memory_space<vmem>>, vector<1x32xf32>
    %c0_57 = arith.constant 0 : index
    %c0_58 = arith.constant 0 : index
    %72 = vector.load %arg19[%c0_57, %c0_58] : memref<1x32xf32, #tpu.memory_space<vmem>>, vector<1x32xf32>
    %cst_59 = arith.constant dense<0.000000e+00> : vector<8xf32>
    %73 = vector.multi_reduction <add>, %70, %cst_59 [1] : vector<8x32xf32> to vector<8xf32>
    %74 = vector.shape_cast %73 : vector<8xf32> to vector<8x1xf32>
    %cst_60 = arith.constant 3.200000e+01 : f32
    %75 = vector.broadcast %cst_60 : f32 to vector<8x1xf32>
    %76 = arith.divf %74, %75 : vector<8x1xf32>
    %77 = vector.broadcast %76 : vector<8x1xf32> to vector<8x32xf32>
    %78 = arith.subf %70, %77 : vector<8x32xf32>
    %79 = arith.mulf %78, %78 : vector<8x32xf32>
    %cst_61 = arith.constant dense<0.000000e+00> : vector<8xf32>
    %80 = vector.multi_reduction <add>, %79, %cst_61 [1] : vector<8x32xf32> to vector<8xf32>
    %81 = vector.shape_cast %80 : vector<8xf32> to vector<8x1xf32>
    %cst_62 = arith.constant 3.200000e+01 : f32
    %82 = vector.broadcast %cst_62 : f32 to vector<8x1xf32>
    %83 = arith.divf %81, %82 : vector<8x1xf32>
    %84 = vector.broadcast %76 : vector<8x1xf32> to vector<8x32xf32>
    %85 = arith.subf %70, %84 : vector<8x32xf32>
    %cst_63 = arith.constant 9.99999974E-6 : f32
    %86 = vector.broadcast %cst_63 : f32 to vector<8x1xf32>
    %87 = arith.addf %83, %86 : vector<8x1xf32>
    %88 = math.rsqrt %87 : vector<8x1xf32>
    %89 = vector.broadcast %88 : vector<8x1xf32> to vector<8x32xf32>
    %90 = arith.mulf %85, %89 : vector<8x32xf32>
    %91 = vector.broadcast %71 : vector<1x32xf32> to vector<8x32xf32>
    %92 = arith.mulf %90, %91 : vector<8x32xf32>
    %93 = vector.broadcast %72 : vector<1x32xf32> to vector<8x32xf32>
    %94 = arith.addf %92, %93 : vector<8x32xf32>
    %c0_64 = arith.constant 0 : index
    %c0_65 = arith.constant 0 : index
    %95 = vector.load %arg20[%c0_64, %c0_65] : memref<32x32xf32, #tpu.memory_space<vmem>>, vector<32x32xf32>
    %cst_66 = arith.constant dense<0.000000e+00> : vector<8x32xf32>
    %96 = tpu.matmul %94, %95, %cst_66 {dimension_numbers = #tpu.dot_dimension_numbers<[1], [0], [0], [1], [0, 0, 1, 1], [], []>} : vector<8x32xf32>, vector<32x32xf32>, vector<8x32xf32> -> vector<8x32xf32>
    %c0_67 = arith.constant 0 : index
    %c0_68 = arith.constant 0 : index
    %97 = vector.load %arg21[%c0_67, %c0_68] : memref<1x32xf32, #tpu.memory_space<vmem>>, vector<1x32xf32>
    %98 = vector.broadcast %97 : vector<1x32xf32> to vector<8x32xf32>
    %99 = arith.addf %96, %98 : vector<8x32xf32>
    %c0_69 = arith.constant 0 : index
    %c0_70 = arith.constant 0 : index
    %100 = vector.load %arg22[%c0_69, %c0_70] : memref<32x32xf32, #tpu.memory_space<vmem>>, vector<32x32xf32>
    %cst_71 = arith.constant dense<0.000000e+00> : vector<16x32xf32>
    %101 = tpu.matmul %3, %100, %cst_71 {dimension_numbers = #tpu.dot_dimension_numbers<[1], [0], [0], [1], [0, 0, 1, 1], [], []>} : vector<16x32xf32>, vector<32x32xf32>, vector<16x32xf32> -> vector<16x32xf32>
    %c0_72 = arith.constant 0 : index
    %c0_73 = arith.constant 0 : index
    %102 = vector.load %arg23[%c0_72, %c0_73] : memref<1x32xf32, #tpu.memory_space<vmem>>, vector<1x32xf32>
    %103 = vector.broadcast %102 : vector<1x32xf32> to vector<16x32xf32>
    %104 = arith.addf %101, %103 : vector<16x32xf32>
    %c0_74 = arith.constant 0 : index
    %c0_75 = arith.constant 0 : index
    %105 = vector.load %arg24[%c0_74, %c0_75] : memref<32x32xf32, #tpu.memory_space<vmem>>, vector<32x32xf32>
    %cst_76 = arith.constant dense<0.000000e+00> : vector<16x32xf32>
    %106 = tpu.matmul %3, %105, %cst_76 {dimension_numbers = #tpu.dot_dimension_numbers<[1], [0], [0], [1], [0, 0, 1, 1], [], []>} : vector<16x32xf32>, vector<32x32xf32>, vector<16x32xf32> -> vector<16x32xf32>
    %c0_77 = arith.constant 0 : index
    %c0_78 = arith.constant 0 : index
    %107 = vector.load %arg25[%c0_77, %c0_78] : memref<1x32xf32, #tpu.memory_space<vmem>>, vector<1x32xf32>
    %108 = vector.broadcast %107 : vector<1x32xf32> to vector<16x32xf32>
    %109 = arith.addf %106, %108 : vector<16x32xf32>
    %cst_79 = arith.constant dense<0.000000e+00> : vector<32x32xf32>
    %110 = tpu.matmul %4, %99, %cst_79 {dimension_numbers = #tpu.dot_dimension_numbers<[1], [0], [0], [1], [0, 0, 1, 1], [], []>} : vector<32x8xf32>, vector<8x32xf32>, vector<32x32xf32> -> vector<32x32xf32>
    %111 = arith.mulf %110, %5 : vector<32x32xf32>
    %cst_80 = arith.constant dense<0.000000e+00> : vector<32x8xf32>
    %112 = tpu.matmul %111, %8, %cst_80 {dimension_numbers = #tpu.dot_dimension_numbers<[1], [0], [0], [1], [0, 0, 1, 1], [], []>} : vector<32x32xf32>, vector<32x8xf32>, vector<32x8xf32> -> vector<32x8xf32>
    %cst_81 = arith.constant dense<0.000000e+00> : vector<64x32xf32>
    %113 = tpu.matmul %6, %104, %cst_81 {dimension_numbers = #tpu.dot_dimension_numbers<[1], [0], [0], [1], [0, 0, 1, 1], [], []>} : vector<64x16xf32>, vector<16x32xf32>, vector<64x32xf32> -> vector<64x32xf32>
    %114 = arith.mulf %113, %7 : vector<64x32xf32>
    %cst_82 = arith.constant dense<0.000000e+00> : vector<64x8xf32>
    %115 = tpu.matmul %114, %8, %cst_82 {dimension_numbers = #tpu.dot_dimension_numbers<[1], [0], [0], [1], [0, 0, 1, 1], [], []>} : vector<64x32xf32>, vector<32x8xf32>, vector<64x8xf32> -> vector<64x8xf32>
    %cst_83 = arith.constant dense<0.000000e+00> : vector<64x32xf32>
    %116 = tpu.matmul %6, %109, %cst_83 {dimension_numbers = #tpu.dot_dimension_numbers<[1], [0], [0], [1], [0, 0, 1, 1], [], []>} : vector<64x16xf32>, vector<16x32xf32>, vector<64x32xf32> -> vector<64x32xf32>
    %117 = arith.mulf %116, %7 : vector<64x32xf32>
    %cst_84 = arith.constant dense<0.000000e+00> : vector<64x8xf32>
    %118 = tpu.matmul %117, %8, %cst_84 {dimension_numbers = #tpu.dot_dimension_numbers<[1], [0], [0], [1], [0, 0, 1, 1], [], []>} : vector<64x32xf32>, vector<32x8xf32>, vector<64x8xf32> -> vector<64x8xf32>
    %c0_85 = arith.constant 0 : index
    %c0_86 = arith.constant 0 : index
    %c0_87 = arith.constant 0 : index
    %119 = vector.load %arg4[%c0_85, %c0_86, %c0_87] : memref<1x32x64xf32, #tpu.memory_space<vmem>>, vector<1x32x64xf32>
    %120 = vector.shape_cast %119 : vector<1x32x64xf32> to vector<32x64xf32>
    %cst_88 = arith.constant dense<0.000000e+00> : vector<32x64xf32>
    %121 = tpu.matmul %112, %115, %cst_88 {dimension_numbers = #tpu.dot_dimension_numbers<[1], [1], [0], [0], [0, 0, 1, 0], [], []>} : vector<32x8xf32>, vector<64x8xf32>, vector<32x64xf32> -> vector<32x64xf32>
    %cst_89 = arith.constant 0.353553385 : f32
    %122 = vector.broadcast %cst_89 : f32 to vector<32x64xf32>
    %123 = arith.mulf %121, %122 : vector<32x64xf32>
    %124 = arith.addf %123, %120 : vector<32x64xf32>
    %cst_90 = arith.constant dense<0xFF800000> : vector<32xf32>
    %125 = vector.multi_reduction <maximumf>, %124, %cst_90 [1] : vector<32x64xf32> to vector<32xf32>
    %126 = vector.shape_cast %125 : vector<32xf32> to vector<32x1xf32>
    %127 = vector.broadcast %126 : vector<32x1xf32> to vector<32x64xf32>
    %128 = arith.subf %124, %127 : vector<32x64xf32>
    %129 = math.exp %128 : vector<32x64xf32>
    %cst_91 = arith.constant dense<0.000000e+00> : vector<32xf32>
    %130 = vector.multi_reduction <add>, %129, %cst_91 [1] : vector<32x64xf32> to vector<32xf32>
    %131 = vector.shape_cast %130 : vector<32xf32> to vector<32x1xf32>
    %132 = tpu.reciprocal %131 {approx = true} : vector<32x1xf32> -> vector<32x1xf32>
    %133 = vector.broadcast %132 : vector<32x1xf32> to vector<32x64xf32>
    %134 = arith.mulf %129, %133 : vector<32x64xf32>
    %cst_92 = arith.constant dense<0.000000e+00> : vector<32x8xf32>
    %135 = tpu.matmul %134, %118, %cst_92 {dimension_numbers = #tpu.dot_dimension_numbers<[1], [0], [0], [1], [0, 0, 1, 1], [], []>} : vector<32x64xf32>, vector<64x8xf32>, vector<32x8xf32> -> vector<32x8xf32>
    %cst_93 = arith.constant 0.000000e+00 : f32
    %136 = vector.broadcast %cst_93 : f32 to vector<8x32xf32>
    %137 = vector.extract_strided_slice %135 {offsets = [0, 0], sizes = [8, 8], strides = [1, 1]} : vector<32x8xf32> to vector<8x8xf32>
    %c0_94 = arith.constant 0 : index
    %c0_95 = arith.constant 0 : index
    %138 = vector.load %arg26[%c0_94, %c0_95] : memref<32x32xf32, #tpu.memory_space<vmem>>, vector<8x32xf32>
    %cst_96 = arith.constant dense<0.000000e+00> : vector<8x32xf32>
    %139 = tpu.matmul %137, %138, %cst_96 {dimension_numbers = #tpu.dot_dimension_numbers<[1], [0], [0], [1], [0, 0, 1, 1], [], []>} : vector<8x8xf32>, vector<8x32xf32>, vector<8x32xf32> -> vector<8x32xf32>
    %140 = arith.addf %136, %139 : vector<8x32xf32>
    %141 = vector.extract_strided_slice %135 {offsets = [8, 0], sizes = [8, 8], strides = [1, 1]} : vector<32x8xf32> to vector<8x8xf32>
    %c8_97 = arith.constant 8 : index
    %c0_98 = arith.constant 0 : index
    %142 = vector.load %arg26[%c8_97, %c0_98] : memref<32x32xf32, #tpu.memory_space<vmem>>, vector<8x32xf32>
    %cst_99 = arith.constant dense<0.000000e+00> : vector<8x32xf32>
    %143 = tpu.matmul %141, %142, %cst_99 {dimension_numbers = #tpu.dot_dimension_numbers<[1], [0], [0], [1], [0, 0, 1, 1], [], []>} : vector<8x8xf32>, vector<8x32xf32>, vector<8x32xf32> -> vector<8x32xf32>
    %144 = arith.addf %140, %143 : vector<8x32xf32>
    %145 = vector.extract_strided_slice %135 {offsets = [16, 0], sizes = [8, 8], strides = [1, 1]} : vector<32x8xf32> to vector<8x8xf32>
    %c16_100 = arith.constant 16 : index
    %c0_101 = arith.constant 0 : index
    %146 = vector.load %arg26[%c16_100, %c0_101] : memref<32x32xf32, #tpu.memory_space<vmem>>, vector<8x32xf32>
    %cst_102 = arith.constant dense<0.000000e+00> : vector<8x32xf32>
    %147 = tpu.matmul %145, %146, %cst_102 {dimension_numbers = #tpu.dot_dimension_numbers<[1], [0], [0], [1], [0, 0, 1, 1], [], []>} : vector<8x8xf32>, vector<8x32xf32>, vector<8x32xf32> -> vector<8x32xf32>
    %148 = arith.addf %144, %147 : vector<8x32xf32>
    %149 = vector.extract_strided_slice %135 {offsets = [24, 0], sizes = [8, 8], strides = [1, 1]} : vector<32x8xf32> to vector<8x8xf32>
    %c24_103 = arith.constant 24 : index
    %c0_104 = arith.constant 0 : index
    %150 = vector.load %arg26[%c24_103, %c0_104] : memref<32x32xf32, #tpu.memory_space<vmem>>, vector<8x32xf32>
    %cst_105 = arith.constant dense<0.000000e+00> : vector<8x32xf32>
    %151 = tpu.matmul %149, %150, %cst_105 {dimension_numbers = #tpu.dot_dimension_numbers<[1], [0], [0], [1], [0, 0, 1, 1], [], []>} : vector<8x8xf32>, vector<8x32xf32>, vector<8x32xf32> -> vector<8x32xf32>
    %152 = arith.addf %148, %151 : vector<8x32xf32>
    %c0_106 = arith.constant 0 : index
    %c0_107 = arith.constant 0 : index
    %153 = vector.load %arg27[%c0_106, %c0_107] : memref<1x32xf32, #tpu.memory_space<vmem>>, vector<1x32xf32>
    %154 = vector.broadcast %153 : vector<1x32xf32> to vector<8x32xf32>
    %155 = arith.addf %152, %154 : vector<8x32xf32>
    %156 = arith.addf %155, %94 : vector<8x32xf32>
    %c0_108 = arith.constant 0 : index
    %c0_109 = arith.constant 0 : index
    %157 = vector.load %arg28[%c0_108, %c0_109] : memref<1x32xf32, #tpu.memory_space<vmem>>, vector<1x32xf32>
    %c0_110 = arith.constant 0 : index
    %c0_111 = arith.constant 0 : index
    %158 = vector.load %arg29[%c0_110, %c0_111] : memref<1x32xf32, #tpu.memory_space<vmem>>, vector<1x32xf32>
    %cst_112 = arith.constant dense<0.000000e+00> : vector<8xf32>
    %159 = vector.multi_reduction <add>, %156, %cst_112 [1] : vector<8x32xf32> to vector<8xf32>
    %160 = vector.shape_cast %159 : vector<8xf32> to vector<8x1xf32>
    %cst_113 = arith.constant 3.200000e+01 : f32
    %161 = vector.broadcast %cst_113 : f32 to vector<8x1xf32>
    %162 = arith.divf %160, %161 : vector<8x1xf32>
    %163 = vector.broadcast %162 : vector<8x1xf32> to vector<8x32xf32>
    %164 = arith.subf %156, %163 : vector<8x32xf32>
    %165 = arith.mulf %164, %164 : vector<8x32xf32>
    %cst_114 = arith.constant dense<0.000000e+00> : vector<8xf32>
    %166 = vector.multi_reduction <add>, %165, %cst_114 [1] : vector<8x32xf32> to vector<8xf32>
    %167 = vector.shape_cast %166 : vector<8xf32> to vector<8x1xf32>
    %cst_115 = arith.constant 3.200000e+01 : f32
    %168 = vector.broadcast %cst_115 : f32 to vector<8x1xf32>
    %169 = arith.divf %167, %168 : vector<8x1xf32>
    %170 = vector.broadcast %162 : vector<8x1xf32> to vector<8x32xf32>
    %171 = arith.subf %156, %170 : vector<8x32xf32>
    %cst_116 = arith.constant 9.99999974E-6 : f32
    %172 = vector.broadcast %cst_116 : f32 to vector<8x1xf32>
    %173 = arith.addf %169, %172 : vector<8x1xf32>
    %174 = math.rsqrt %173 : vector<8x1xf32>
    %175 = vector.broadcast %174 : vector<8x1xf32> to vector<8x32xf32>
    %176 = arith.mulf %171, %175 : vector<8x32xf32>
    %177 = vector.broadcast %157 : vector<1x32xf32> to vector<8x32xf32>
    %178 = arith.mulf %176, %177 : vector<8x32xf32>
    %179 = vector.broadcast %158 : vector<1x32xf32> to vector<8x32xf32>
    %180 = arith.addf %178, %179 : vector<8x32xf32>
    %c0_117 = arith.constant 0 : index
    %c0_118 = arith.constant 0 : index
    %181 = vector.load %arg30[%c0_117, %c0_118] : memref<32x64xf32, #tpu.memory_space<vmem>>, vector<32x64xf32>
    %cst_119 = arith.constant dense<0.000000e+00> : vector<8x64xf32>
    %182 = tpu.matmul %180, %181, %cst_119 {dimension_numbers = #tpu.dot_dimension_numbers<[1], [0], [0], [1], [0, 0, 1, 1], [], []>} : vector<8x32xf32>, vector<32x64xf32>, vector<8x64xf32> -> vector<8x64xf32>
    %c0_120 = arith.constant 0 : index
    %c0_121 = arith.constant 0 : index
    %183 = vector.load %arg31[%c0_120, %c0_121] : memref<1x64xf32, #tpu.memory_space<vmem>>, vector<1x64xf32>
    %184 = vector.broadcast %183 : vector<1x64xf32> to vector<8x64xf32>
    %185 = arith.addf %182, %184 : vector<8x64xf32>
    %cst_122 = arith.constant 0.000000e+00 : f32
    %186 = vector.broadcast %cst_122 : f32 to vector<8x64xf32>
    %187 = arith.maximumf %185, %186 : vector<8x64xf32>
    %c0_123 = arith.constant 0 : index
    %c0_124 = arith.constant 0 : index
    %188 = vector.load %arg32[%c0_123, %c0_124] : memref<64x32xf32, #tpu.memory_space<vmem>>, vector<64x32xf32>
    %cst_125 = arith.constant dense<0.000000e+00> : vector<8x32xf32>
    %189 = tpu.matmul %187, %188, %cst_125 {dimension_numbers = #tpu.dot_dimension_numbers<[1], [0], [0], [1], [0, 0, 1, 1], [], []>} : vector<8x64xf32>, vector<64x32xf32>, vector<8x32xf32> -> vector<8x32xf32>
    %c0_126 = arith.constant 0 : index
    %c0_127 = arith.constant 0 : index
    %190 = vector.load %arg33[%c0_126, %c0_127] : memref<1x32xf32, #tpu.memory_space<vmem>>, vector<1x32xf32>
    %191 = vector.broadcast %190 : vector<1x32xf32> to vector<8x32xf32>
    %192 = arith.addf %189, %191 : vector<8x32xf32>
    %193 = arith.addf %192, %180 : vector<8x32xf32>
    %c0_128 = arith.constant 0 : index
    %c0_129 = arith.constant 0 : index
    %194 = vector.load %arg34[%c0_128, %c0_129] : memref<1x32xf32, #tpu.memory_space<vmem>>, vector<1x32xf32>
    %c0_130 = arith.constant 0 : index
    %c0_131 = arith.constant 0 : index
    %195 = vector.load %arg35[%c0_130, %c0_131] : memref<1x32xf32, #tpu.memory_space<vmem>>, vector<1x32xf32>
    %cst_132 = arith.constant dense<0.000000e+00> : vector<8xf32>
    %196 = vector.multi_reduction <add>, %193, %cst_132 [1] : vector<8x32xf32> to vector<8xf32>
    %197 = vector.shape_cast %196 : vector<8xf32> to vector<8x1xf32>
    %cst_133 = arith.constant 3.200000e+01 : f32
    %198 = vector.broadcast %cst_133 : f32 to vector<8x1xf32>
    %199 = arith.divf %197, %198 : vector<8x1xf32>
    %200 = vector.broadcast %199 : vector<8x1xf32> to vector<8x32xf32>
    %201 = arith.subf %193, %200 : vector<8x32xf32>
    %202 = arith.mulf %201, %201 : vector<8x32xf32>
    %cst_134 = arith.constant dense<0.000000e+00> : vector<8xf32>
    %203 = vector.multi_reduction <add>, %202, %cst_134 [1] : vector<8x32xf32> to vector<8xf32>
    %204 = vector.shape_cast %203 : vector<8xf32> to vector<8x1xf32>
    %cst_135 = arith.constant 3.200000e+01 : f32
    %205 = vector.broadcast %cst_135 : f32 to vector<8x1xf32>
    %206 = arith.divf %204, %205 : vector<8x1xf32>
    %207 = vector.broadcast %199 : vector<8x1xf32> to vector<8x32xf32>
    %208 = arith.subf %193, %207 : vector<8x32xf32>
    %cst_136 = arith.constant 9.99999974E-6 : f32
    %209 = vector.broadcast %cst_136 : f32 to vector<8x1xf32>
    %210 = arith.addf %206, %209 : vector<8x1xf32>
    %211 = math.rsqrt %210 : vector<8x1xf32>
    %212 = vector.broadcast %211 : vector<8x1xf32> to vector<8x32xf32>
    %213 = arith.mulf %208, %212 : vector<8x32xf32>
    %214 = vector.broadcast %194 : vector<1x32xf32> to vector<8x32xf32>
    %215 = arith.mulf %213, %214 : vector<8x32xf32>
    %216 = vector.broadcast %195 : vector<1x32xf32> to vector<8x32xf32>
    %217 = arith.addf %215, %216 : vector<8x32xf32>
    %c0_137 = arith.constant 0 : index
    %c0_138 = arith.constant 0 : index
    %c0_139 = arith.constant 0 : index
    %218 = vector.load %arg36[%c0_137, %c0_138, %c0_139] : memref<1x8x32xf32, #tpu.memory_space<vmem>>, vector<1x8x32xf32>
    %219 = vector.shape_cast %218 : vector<1x8x32xf32> to vector<8x32xf32>
    %220 = vector.shape_cast %217 : vector<8x32xf32> to vector<1x8x32xf32>
    tpu.vector_store %arg36[%c0_137, %c0_138, %c0_139], %220 {strides = array<i32>} : memref<1x8x32xf32, #tpu.memory_space<vmem>>, vector<1x8x32xf32>,
    return
  }
  func.func @transform_0(%arg0: i32) -> (i32, i32, i32) {
    %c0_i32 = arith.constant 0 : i32
    %c0_i32_0 = arith.constant 0 : i32
    %c0_i32_1 = arith.constant 0 : i32
    return %arg0, %c0_i32, %c0_i32_0 : i32, i32, i32
  }
  func.func @transform_1(%arg0: i32) -> (i32, i32, i32) {
    %c0_i32 = arith.constant 0 : i32
    %c0_i32_0 = arith.constant 0 : i32
    %c0_i32_1 = arith.constant 0 : i32
    return %arg0, %c0_i32, %c0_i32_0 : i32, i32, i32
  }
  func.func @transform_2(%arg0: i32) -> (i32, i32, i32) {
    %c0_i32 = arith.constant 0 : i32
    %c0_i32_0 = arith.constant 0 : i32
    %c0_i32_1 = arith.constant 0 : i32
    return %arg0, %c0_i32, %c0_i32_0 : i32, i32, i32
  }
  func.func @transform_3(%arg0: i32) -> (i32, i32, i32) {
    %c0_i32 = arith.constant 0 : i32
    %c0_i32_0 = arith.constant 0 : i32
    %c0_i32_1 = arith.constant 0 : i32
    return %arg0, %c0_i32, %c0_i32_0 : i32, i32, i32
  }
  func.func @transform_4(%arg0: i32) -> (i32, i32) {
    %c0_i32 = arith.constant 0 : i32
    %c0_i32_0 = arith.constant 0 : i32
    %c0_i32_1 = arith.constant 0 : i32
    return %c0_i32, %c0_i32_0 : i32, i32
  }
  func.func @transform_5(%arg0: i32) -> (i32, i32) {
    %c0_i32 = arith.constant 0 : i32
    %c0_i32_0 = arith.constant 0 : i32
    %c0_i32_1 = arith.constant 0 : i32
    return %c0_i32, %c0_i32_0 : i32, i32
  }
  func.func @transform_6(%arg0: i32) -> (i32, i32) {
    %c0_i32 = arith.constant 0 : i32
    %c0_i32_0 = arith.constant 0 : i32
    %c0_i32_1 = arith.constant 0 : i32
    return %c0_i32, %c0_i32_0 : i32, i32
  }
  func.func @transform_7(%arg0: i32) -> (i32, i32) {
    %c0_i32 = arith.constant 0 : i32
    %c0_i32_0 = arith.constant 0 : i32
    %c0_i32_1 = arith.constant 0 : i32
    return %c0_i32, %c0_i32_0 : i32, i32
  }
  func.func @transform_8(%arg0: i32) -> (i32, i32) {
    %c0_i32 = arith.constant 0 : i32
    %c0_i32_0 = arith.constant 0 : i32
    %c0_i32_1 = arith.constant 0 : i32
    return %c0_i32, %c0_i32_0 : i32, i32
  }
  func.func @transform_9(%arg0: i32) -> (i32, i32) {
    %c0_i32 = arith.constant 0 : i32
    %c0_i32_0 = arith.constant 0 : i32
    %c0_i32_1 = arith.constant 0 : i32
    return %c0_i32, %c0_i32_0 : i32, i32
  }
  func.func @transform_10(%arg0: i32) -> (i32, i32) {
    %c0_i32 = arith.constant 0 : i32
    %c0_i32_0 = arith.constant 0 : i32
    %c0_i32_1 = arith.constant 0 : i32
    return %c0_i32, %c0_i32_0 : i32, i32
  }
  func.func @transform_11(%arg0: i32) -> (i32, i32) {
    %c0_i32 = arith.constant 0 : i32
    %c0_i32_0 = arith.constant 0 : i32
    %c0_i32_1 = arith.constant 0 : i32
    return %c0_i32, %c0_i32_0 : i32, i32
  }
  func.func @transform_12(%arg0: i32) -> (i32, i32) {
    %c0_i32 = arith.constant 0 : i32
    %c0_i32_0 = arith.constant 0 : i32
    %c0_i32_1 = arith.constant 0 : i32
    return %c0_i32, %c0_i32_0 : i32, i32
  }
  func.func @transform_13(%arg0: i32) -> (i32, i32) {
    %c0_i32 = arith.constant 0 : i32
    %c0_i32_0 = arith.constant 0 : i32
    %c0_i32_1 = arith.constant 0 : i32
    return %c0_i32, %c0_i32_0 : i32, i32
  }
  func.func @transform_14(%arg0: i32) -> (i32, i32) {
    %c0_i32 = arith.constant 0 : i32
    %c0_i32_0 = arith.constant 0 : i32
    %c0_i32_1 = arith.constant 0 : i32
    return %c0_i32, %c0_i32_0 : i32, i32
  }
  func.func @transform_15(%arg0: i32) -> (i32, i32) {
    %c0_i32 = arith.constant 0 : i32
    %c0_i32_0 = arith.constant 0 : i32
    %c0_i32_1 = arith.constant 0 : i32
    return %c0_i32, %c0_i32_0 : i32, i32
  }
  func.func @transform_16(%arg0: i32) -> (i32, i32) {
    %c0_i32 = arith.constant 0 : i32
    %c0_i32_0 = arith.constant 0 : i32
    %c0_i32_1 = arith.constant 0 : i32
    return %c0_i32, %c0_i32_0 : i32, i32
  }
  func.func @transform_17(%arg0: i32) -> (i32, i32) {
    %c0_i32 = arith.constant 0 : i32
    %c0_i32_0 = arith.constant 0 : i32
    %c0_i32_1 = arith.constant 0 : i32
    return %c0_i32, %c0_i32_0 : i32, i32
  }
  func.func @transform_18(%arg0: i32) -> (i32, i32) {
    %c0_i32 = arith.constant 0 : i32
    %c0_i32_0 = arith.constant 0 : i32
    %c0_i32_1 = arith.constant 0 : i32
    return %c0_i32, %c0_i32_0 : i32, i32
  }
  func.func @transform_19(%arg0: i32) -> (i32, i32) {
    %c0_i32 = arith.constant 0 : i32
    %c0_i32_0 = arith.constant 0 : i32
    %c0_i32_1 = arith.constant 0 : i32
    return %c0_i32, %c0_i32_0 : i32, i32
  }
  func.func @transform_20(%arg0: i32) -> (i32, i32) {
    %c0_i32 = arith.constant 0 : i32
    %c0_i32_0 = arith.constant 0 : i32
    %c0_i32_1 = arith.constant 0 : i32
    return %c0_i32, %c0_i32_0 : i32, i32
  }
  func.func @transform_21(%arg0: i32) -> (i32, i32) {
    %c0_i32 = arith.constant 0 : i32
    %c0_i32_0 = arith.constant 0 : i32
    %c0_i32_1 = arith.constant 0 : i32
    return %c0_i32, %c0_i32_0 : i32, i32
  }
  func.func @transform_22(%arg0: i32) -> (i32, i32) {
    %c0_i32 = arith.constant 0 : i32
    %c0_i32_0 = arith.constant 0 : i32
    %c0_i32_1 = arith.constant 0 : i32
    return %c0_i32, %c0_i32_0 : i32, i32
  }
  func.func @transform_23(%arg0: i32) -> (i32, i32) {
    %c0_i32 = arith.constant 0 : i32
    %c0_i32_0 = arith.constant 0 : i32
    %c0_i32_1 = arith.constant 0 : i32
    return %c0_i32, %c0_i32_0 : i32, i32
  }
  func.func @transform_24(%arg0: i32) -> (i32, i32) {
    %c0_i32 = arith.constant 0 : i32
    %c0_i32_0 = arith.constant 0 : i32
    %c0_i32_1 = arith.constant 0 : i32
    return %c0_i32, %c0_i32_0 : i32, i32
  }
  func.func @transform_25(%arg0: i32) -> (i32, i32) {
    %c0_i32 = arith.constant 0 : i32
    %c0_i32_0 = arith.constant 0 : i32
    %c0_i32_1 = arith.constant 0 : i32
    return %c0_i32, %c0_i32_0 : i32, i32
  }
  func.func @transform_26(%arg0: i32) -> (i32, i32) {
    %c0_i32 = arith.constant 0 : i32
    %c0_i32_0 = arith.constant 0 : i32
    %c0_i32_1 = arith.constant 0 : i32
    return %c0_i32, %c0_i32_0 : i32, i32
  }
  func.func @transform_27(%arg0: i32) -> (i32, i32) {
    %c0_i32 = arith.constant 0 : i32
    %c0_i32_0 = arith.constant 0 : i32
    %c0_i32_1 = arith.constant 0 : i32
    return %c0_i32, %c0_i32_0 : i32, i32
  }
  func.func @transform_28(%arg0: i32) -> (i32, i32) {
    %c0_i32 = arith.constant 0 : i32
    %c0_i32_0 = arith.constant 0 : i32
    %c0_i32_1 = arith.constant 0 : i32
    return %c0_i32, %c0_i32_0 : i32, i32
  }
  func.func @transform_29(%arg0: i32) -> (i32, i32) {
    %c0_i32 = arith.constant 0 : i32
    %c0_i32_0 = arith.constant 0 : i32
    %c0_i32_1 = arith.constant 0 : i32
    return %c0_i32, %c0_i32_0 : i32, i32
  }
  func.func @transform_30(%arg0: i32) -> (i32, i32) {
    %c0_i32 = arith.constant 0 : i32
    %c0_i32_0 = arith.constant 0 : i32
    %c0_i32_1 = arith.constant 0 : i32
    return %c0_i32, %c0_i32_0 : i32, i32
  }
  func.func @transform_31(%arg0: i32) -> (i32, i32) {
    %c0_i32 = arith.constant 0 : i32
    %c0_i32_0 = arith.constant 0 : i32
    %c0_i32_1 = arith.constant 0 : i32
    return %c0_i32, %c0_i32_0 : i32, i32
  }
  func.func @transform_32(%arg0: i32) -> (i32, i32) {
    %c0_i32 = arith.constant 0 : i32
    %c0_i32_0 = arith.constant 0 : i32
    %c0_i32_1 = arith.constant 0 : i32
    return %c0_i32, %c0_i32_0 : i32, i32
  }
  func.func @transform_33(%arg0: i32) -> (i32, i32) {
    %c0_i32 = arith.constant 0 : i32
    %c0_i32_0 = arith.constant 0 : i32
    %c0_i32_1 = arith.constant 0 : i32
    return %c0_i32, %c0_i32_0 : i32, i32
  }
  func.func @transform_34(%arg0: i32) -> (i32, i32) {
    %c0_i32 = arith.constant 0 : i32
    %c0_i32_0 = arith.constant 0 : i32
    %c0_i32_1 = arith.constant 0 : i32
    return %c0_i32, %c0_i32_0 : i32, i32
  }
  func.func @transform_35(%arg0: i32) -> (i32, i32, i32) {
    %c0_i32 = arith.constant 0 : i32
    %c0_i32_0 = arith.constant 0 : i32
    %c0_i32_1 = arith.constant 0 : i32
    return %arg0, %c0_i32, %c0_i32_0 : i32, i32, i32
  }
}

</mosaic_0001>

<llo_original>
// kernel: decoder_sublayer.1
$region0: #{decoder_sublayer.1}
  #allocation0 [shape = 'u32[]', space=smem, size = 0x4, offset = 0x4, fixed_abs, tag = 'smem constant byte address 0x4 - core index']
  #allocation1 [shape = 'u32[72,128]{1,0:T(1,128)}', space=vmem, size = 0x9000, scoped, tag = 'internal scratch']
  %s0 = inlined_call_operand.smem [shape: u32[36], index: -1, kind: input, shape index: {}]
  %s1 = sld [smem:[%s0]]
  %s2 = scalar_lea.smem %s0, 1
  %s3 = sld [smem:[%s2]]
  %s4 = scalar_lea.smem %s0, 2
  %s5 = sld [smem:[%s4]]
  %s6 = scalar_lea.smem %s0, 3
  %s7 = sld [smem:[%s6]]
  %s8 = scalar_lea.smem %s0, 4
  %s9 = sld [smem:[%s8]]
  %s10 = scalar_lea.smem %s0, 5
  %s11 = sld [smem:[%s10]]
  %s12 = scalar_lea.smem %s0, 6
  %s13 = sld [smem:[%s12]]
  %s14 = scalar_lea.smem %s0, 7
  %s15 = sld [smem:[%s14]]
  %s16 = scalar_lea.smem %s0, 8
  %s17 = sld [smem:[%s16]]
  %s18 = scalar_lea.smem %s0, 9
  %s19 = sld [smem:[%s18]]
  %s20 = scalar_lea.smem %s0, 10
  %s21 = sld [smem:[%s20]]
  %s22 = scalar_lea.smem %s0, 11
  %s23 = sld [smem:[%s22]]
  %s24 = scalar_lea.smem %s0, 12
  %s25 = sld [smem:[%s24]]
  %s26 = scalar_lea.smem %s0, 13
  %s27 = sld [smem:[%s26]]
  %s28 = scalar_lea.smem %s0, 14
  %s29 = sld [smem:[%s28]]
  %s30 = scalar_lea.smem %s0, 15
  %s31 = sld [smem:[%s30]]
  %s32 = scalar_lea.smem %s0, 16
  %s33 = sld [smem:[%s32]]
  %s34 = scalar_lea.smem %s0, 17
  %s35 = sld [smem:[%s34]]
  %s36 = scalar_lea.smem %s0, 18
  %s37 = sld [smem:[%s36]]
  %s38 = scalar_lea.smem %s0, 19
  %s39 = sld [smem:[%s38]]
  %s40 = scalar_lea.smem %s0, 20
  %s41 = sld [smem:[%s40]]
  %s42 = scalar_lea.smem %s0, 21
  %s43 = sld [smem:[%s42]]
  %s44 = scalar_lea.smem %s0, 22
  %s45 = sld [smem:[%s44]]
  %s46 = scalar_lea.smem %s0, 23
  %s47 = sld [smem:[%s46]]
  %s48 = scalar_lea.smem %s0, 24
  %s49 = sld [smem:[%s48]]
  %s50 = scalar_lea.smem %s0, 25
  %s51 = sld [smem:[%s50]]
  %s52 = scalar_lea.smem %s0, 26
  %s53 = sld [smem:[%s52]]
  %s54 = scalar_lea.smem %s0, 27
  %s55 = sld [smem:[%s54]]
  %s56 = scalar_lea.smem %s0, 28
  %s57 = sld [smem:[%s56]]
  %s58 = scalar_lea.smem %s0, 29
  %s59 = sld [smem:[%s58]]
  %s60 = scalar_lea.smem %s0, 30
  %s61 = sld [smem:[%s60]]
  %s62 = scalar_lea.smem %s0, 31
  %s63 = sld [smem:[%s62]]
  %s64 = scalar_lea.smem %s0, 32
  %s65 = sld [smem:[%s64]]
  %s66 = scalar_lea.smem %s0, 33
  %s67 = sld [smem:[%s66]]
  %s68 = scalar_lea.smem %s0, 34
  %s69 = sld [smem:[%s68]]
  %s70 = scalar_lea.smem %s0, 35
  %s71 = sld [smem:[%s70]]
  %s72 = sld [smem:[#allocation0]]
  $region173: #{decoder_sublayer.1} parent=0
    _
  %s74 = ssub.s32 1, %s72
  %s75 = scalar_select 0, %s74, %s72
  $region1: #{decoder_sublayer.1} parent=0
    #allocation2 [shape = 'u8[8192]{0}', space=vmem, size = 0x2000, scoped, tag = 'output window, operand 0']
    #allocation3 [shape = 's32[2]{0}', space=sflag, size = 0x8, scoped, tag = 'scoped memory for decoder_sublayer.1']
    %76 = vsyncpa [#allocation3], 0
    %s77 = scalar_lea.sflag [#allocation3], 1
    %78 = vsyncpa %s77, 0
    loop: start=0, step=1, limit=4
    $region2: #{decoder_sublayer.1} parent=1 // loop_pre_header
      _
    $region3: #{decoder_sublayer.1} parent=1 // loop_header
      %s80 = sphi 0, %s84
      %p81 = scmp.ge.s32.totalorder %s80, 4
      %s90 = sphi 0, %s92
      %s93 = sphi 0, %s90
      %s94 = sphi 0, %s93
      %s110 = sphi 0, %s94
      %s116 = sphi 0, %s118
      %s119 = sphi 0, %s116
      %s120 = sphi 0, %s119
      %s136 = sphi 0, %s120
      %s142 = sphi 0, %s144
      %s145 = sphi 0, %s142
      %s146 = sphi 0, %s145
      %s162 = sphi 0, %s146
      %s168 = sphi 0, %s170
      %s171 = sphi 0, %s168
      %s172 = sphi 0, %s171
      %s188 = sphi 0, %s172
      %s192 = sphi 0, %s192
      %s194 = sphi 0, %s192
      %s195 = sphi 0, %s194
      %s209 = sphi 0, %s195
      %s213 = sphi 0, %s213
      %s215 = sphi 0, %s213
      %s216 = sphi 0, %s215
      %s230 = sphi 0, %s216
      %s234 = sphi 0, %s234
      %s236 = sphi 0, %s234
      %s237 = sphi 0, %s236
      %s251 = sphi 0, %s237
      %s255 = sphi 0, %s255
      %s257 = sphi 0, %s255
      %s258 = sphi 0, %s257
      %s272 = sphi 0, %s258
      %s276 = sphi 0, %s276
      %s278 = sphi 0, %s276
      %s279 = sphi 0, %s278
      %s293 = sphi 0, %s279
      %s297 = sphi 0, %s297
      %s299 = sphi 0, %s297
      %s300 = sphi 0, %s299
      %s314 = sphi 0, %s300
      %s318 = sphi 0, %s318
      %s320 = sphi 0, %s318
      %s321 = sphi 0, %s320
      %s335 = sphi 0, %s321
      %s339 = sphi 0, %s339
      %s341 = sphi 0, %s339
      %s342 = sphi 0, %s341
      %s356 = sphi 0, %s342
      %s360 = sphi 0, %s360
      %s362 = sphi 0, %s360
      %s363 = sphi 0, %s362
      %s377 = sphi 0, %s363
      %s381 = sphi 0, %s381
      %s383 = sphi 0, %s381
      %s384 = sphi 0, %s383
      %s398 = sphi 0, %s384
      %s402 = sphi 0, %s402
      %s404 = sphi 0, %s402
      %s405 = sphi 0, %s404
      %s419 = sphi 0, %s405
      %s423 = sphi 0, %s423
      %s425 = sphi 0, %s423
      %s426 = sphi 0, %s425
      %s440 = sphi 0, %s426
      %s444 = sphi 0, %s444
      %s446 = sphi 0, %s444
      %s447 = sphi 0, %s446
      %s461 = sphi 0, %s447
      %s465 = sphi 0, %s465
      %s467 = sphi 0, %s465
      %s468 = sphi 0, %s467
      %s482 = sphi 0, %s468
      %s486 = sphi 0, %s486
      %s488 = sphi 0, %s486
      %s489 = sphi 0, %s488
      %s503 = sphi 0, %s489
      %s507 = sphi 0, %s507
      %s509 = sphi 0, %s507
      %s510 = sphi 0, %s509
      %s524 = sphi 0, %s510
      %s528 = sphi 0, %s528
      %s530 = sphi 0, %s528
      %s531 = sphi 0, %s530
      %s545 = sphi 0, %s531
      %s549 = sphi 0, %s549
      %s551 = sphi 0, %s549
      %s552 = sphi 0, %s551
      %s566 = sphi 0, %s552
      %s570 = sphi 0, %s570
      %s572 = sphi 0, %s570
      %s573 = sphi 0, %s572
      %s587 = sphi 0, %s573
      %s591 = sphi 0, %s591
      %s593 = sphi 0, %s591
      %s594 = sphi 0, %s593
      %s608 = sphi 0, %s594
      %s612 = sphi 0, %s612
      %s614 = sphi 0, %s612
      %s615 = sphi 0, %s614
      %s629 = sphi 0, %s615
      %s633 = sphi 0, %s633
      %s635 = sphi 0, %s633
      %s636 = sphi 0, %s635
      %s650 = sphi 0, %s636
      %s654 = sphi 0, %s654
      %s656 = sphi 0, %s654
      %s657 = sphi 0, %s656
      %s671 = sphi 0, %s657
      %s675 = sphi 0, %s675
      %s677 = sphi 0, %s675
      %s678 = sphi 0, %s677
      %s692 = sphi 0, %s678
      %s696 = sphi 0, %s696
      %s698 = sphi 0, %s696
      %s699 = sphi 0, %s698
      %s713 = sphi 0, %s699
      %s717 = sphi 0, %s717
      %s719 = sphi 0, %s717
      %s720 = sphi 0, %s719
      %s734 = sphi 0, %s720
      %s738 = sphi 0, %s738
      %s740 = sphi 0, %s738
      %s741 = sphi 0, %s740
      %s755 = sphi 0, %s741
      %s759 = sphi 0, %s759
      %s761 = sphi 0, %s759
      %s762 = sphi 0, %s761
      %s776 = sphi 0, %s762
      %s780 = sphi 0, %s780
      %s782 = sphi 0, %s780
      %s783 = sphi 0, %s782
      %s797 = sphi 0, %s783
      %s801 = sphi 0, %s801
      %s803 = sphi 0, %s801
      %s804 = sphi 0, %s803
      %s818 = sphi 0, %s804
      %s822 = sphi 0, %s822
      %s824 = sphi 0, %s822
      %s825 = sphi 0, %s824
      %s839 = sphi 0, %s825
      %s845 = sphi 0, %s847
      %s848 = sphi 0, %s845
      %s849 = sphi 0, %s848
      %s865 = sphi 0, %s849
    $region4: #{decoder_sublayer.1} parent=1 // loop_header_branch
      %83 = sbr.rel (%p81) target = $region8
    $region5: #{decoder_sublayer.1} parent=1 // loop_body
      %s85 = ssub.s32 %s80, 1
      %s86 = ssub.s32 %s80, 2
      %s87 = sadd.s32 %s80, 1
      %s88 = ssub.s32 %s80, %s87
      %p89 = scmp.eq.s32.totalorder %s88, 0
      %s91 = sadd.s32 %s90, 1
      %s92 = scalar_select %p89, %s90, %s91
      %p95 = pneg %p89
      %p96 = scmp.eq.s32.totalorder %s80, 1
      %p97 = por %p95, %p96
      %p98 = scmp.ne.s32.totalorder %s90, %s93
      %p99 = scmp.eq.s32.totalorder %s80, 0
      %p100 = por %p98, %p99
      %p101 = scmp.ne.s32.totalorder %s90, %s93
      %p102 = scmp.eq.s32.totalorder %s85, 1
      %p103 = por %p101, %p102
      %p104 = scmp.ne.s32.totalorder %s93, %s94
      %p105 = scmp.eq.s32.totalorder %s85, 0
      %p106 = por %p104, %p105
      %p107 = scmp.ne.s32.totalorder %s93, %s94
      %p108 = scmp.eq.s32.totalorder %s86, 1
      %p109 = por %p107, %p108
      %p111 = scmp.ne.s32.totalorder %s94, %s110
      %p112 = scmp.eq.s32.totalorder %s86, 0
      %p113 = por %p111, %p112
      %s114 = ssub.s32 %s80, %s87
      %p115 = scmp.eq.s32.totalorder %s114, 0
      %s117 = sadd.s32 %s116, 1
      %s118 = scalar_select %p115, %s116, %s117
      %p121 = pneg %p115
      %p122 = scmp.eq.s32.totalorder %s80, 1
      %p123 = por %p121, %p122
      %p124 = scmp.ne.s32.totalorder %s116, %s119
      %p125 = scmp.eq.s32.totalorder %s80, 0
      %p126 = por %p124, %p125
      %p127 = scmp.ne.s32.totalorder %s116, %s119
      %p128 = scmp.eq.s32.totalorder %s85, 1
      %p129 = por %p127, %p128
      %p130 = scmp.ne.s32.totalorder %s119, %s120
      %p131 = scmp.eq.s32.totalorder %s85, 0
      %p132 = por %p130, %p131
      %p133 = scmp.ne.s32.totalorder %s119, %s120
      %p134 = scmp.eq.s32.totalorder %s86, 1
      %p135 = por %p133, %p134
      %p137 = scmp.ne.s32.totalorder %s120, %s136
      %p138 = scmp.eq.s32.totalorder %s86, 0
      %p139 = por %p137, %p138
      %s140 = ssub.s32 %s80, %s87
      %p141 = scmp.eq.s32.totalorder %s140, 0
      %s143 = sadd.s32 %s142, 1
      %s144 = scalar_select %p141, %s142, %s143
      %p147 = pneg %p141
      %p148 = scmp.eq.s32.totalorder %s80, 1
      %p149 = por %p147, %p148
      %p150 = scmp.ne.s32.totalorder %s142, %s145
      %p151 = scmp.eq.s32.totalorder %s80, 0
      %p152 = por %p150, %p151
      %p153 = scmp.ne.s32.totalorder %s142, %s145
      %p154 = scmp.eq.s32.totalorder %s85, 1
      %p155 = por %p153, %p154
      %p156 = scmp.ne.s32.totalorder %s145, %s146
      %p157 = scmp.eq.s32.totalorder %s85, 0
      %p158 = por %p156, %p157
      %p159 = scmp.ne.s32.totalorder %s145, %s146
      %p160 = scmp.eq.s32.totalorder %s86, 1
      %p161 = por %p159, %p160
      %p163 = scmp.ne.s32.totalorder %s146, %s162
      %p164 = scmp.eq.s32.totalorder %s86, 0
      %p165 = por %p163, %p164
      %s166 = ssub.s32 %s80, %s87
      %p167 = scmp.eq.s32.totalorder %s166, 0
      %s169 = sadd.s32 %s168, 1
      %s170 = scalar_select %p167, %s168, %s169
      %p173 = pneg %p167
      %p174 = scmp.eq.s32.totalorder %s80, 1
      %p175 = por %p173, %p174
      %p176 = scmp.ne.s32.totalorder %s168, %s171
      %p177 = scmp.eq.s32.totalorder %s80, 0
      %p178 = por %p176, %p177
      %p179 = scmp.ne.s32.totalorder %s168, %s171
      %p180 = scmp.eq.s32.totalorder %s85, 1
      %p181 = por %p179, %p180
      %p182 = scmp.ne.s32.totalorder %s171, %s172
      %p183 = scmp.eq.s32.totalorder %s85, 0
      %p184 = por %p182, %p183
      %p185 = scmp.ne.s32.totalorder %s171, %s172
      %p186 = scmp.eq.s32.totalorder %s86, 1
      %p187 = por %p185, %p186
      %p189 = scmp.ne.s32.totalorder %s172, %s188
      %p190 = scmp.eq.s32.totalorder %s86, 0
      %p191 = por %p189, %p190
      %s193 = sadd.s32 %s192, 1
      %p196 = scmp.eq.s32.totalorder %s80, 1
      %p197 = scmp.ne.s32.totalorder %s192, %s194
      %p198 = scmp.eq.s32.totalorder %s80, 0
      %p199 = por %p197, %p198
      %p200 = scmp.ne.s32.totalorder %s192, %s194
      %p201 = scmp.eq.s32.totalorder %s85, 1
      %p202 = por %p200, %p201
      %p203 = scmp.ne.s32.totalorder %s194, %s195
      %p204 = scmp.eq.s32.totalorder %s85, 0
      %p205 = por %p203, %p204
      %p206 = scmp.ne.s32.totalorder %s194, %s195
      %p207 = scmp.eq.s32.totalorder %s86, 1
      %p208 = por %p206, %p207
      %p210 = scmp.ne.s32.totalorder %s195, %s209
      %p211 = scmp.eq.s32.totalorder %s86, 0
      %p212 = por %p210, %p211
      %s214 = sadd.s32 %s213, 1
      %p217 = scmp.eq.s32.totalorder %s80, 1
      %p218 = scmp.ne.s32.totalorder %s213, %s215
      %p219 = scmp.eq.s32.totalorder %s80, 0
      %p220 = por %p218, %p219
      %p221 = scmp.ne.s32.totalorder %s213, %s215
      %p222 = scmp.eq.s32.totalorder %s85, 1
      %p223 = por %p221, %p222
      %p224 = scmp.ne.s32.totalorder %s215, %s216
      %p225 = scmp.eq.s32.totalorder %s85, 0
      %p226 = por %p224, %p225
      %p227 = scmp.ne.s32.totalorder %s215, %s216
      %p228 = scmp.eq.s32.totalorder %s86, 1
      %p229 = por %p227, %p228
      %p231 = scmp.ne.s32.totalorder %s216, %s230
      %p232 = scmp.eq.s32.totalorder %s86, 0
      %p233 = por %p231, %p232
      %s235 = sadd.s32 %s234, 1
      %p238 = scmp.eq.s32.totalorder %s80, 1
      %p239 = scmp.ne.s32.totalorder %s234, %s236
      %p240 = scmp.eq.s32.totalorder %s80, 0
      %p241 = por %p239, %p240
      %p242 = scmp.ne.s32.totalorder %s234, %s236
      %p243 = scmp.eq.s32.totalorder %s85, 1
      %p244 = por %p242, %p243
      %p245 = scmp.ne.s32.totalorder %s236, %s237
      %p246 = scmp.eq.s32.totalorder %s85, 0
      %p247 = por %p245, %p246
      %p248 = scmp.ne.s32.totalorder %s236, %s237
      %p249 = scmp.eq.s32.totalorder %s86, 1
      %p250 = por %p248, %p249
      %p252 = scmp.ne.s32.totalorder %s237, %s251
      %p253 = scmp.eq.s32.totalorder %s86, 0
      %p254 = por %p252, %p253
      %s256 = sadd.s32 %s255, 1
      %p259 = scmp.eq.s32.totalorder %s80, 1
      %p260 = scmp.ne.s32.totalorder %s255, %s257
      %p261 = scmp.eq.s32.totalorder %s80, 0
      %p262 = por %p260, %p261
      %p263 = scmp.ne.s32.totalorder %s255, %s257
      %p264 = scmp.eq.s32.totalorder %s85, 1
      %p265 = por %p263, %p264
      %p266 = scmp.ne.s32.totalorder %s257, %s258
      %p267 = scmp.eq.s32.totalorder %s85, 0
      %p268 = por %p266, %p267
      %p269 = scmp.ne.s32.totalorder %s257, %s258
      %p270 = scmp.eq.s32.totalorder %s86, 1
      %p271 = por %p269, %p270
      %p273 = scmp.ne.s32.totalorder %s258, %s272
      %p274 = scmp.eq.s32.totalorder %s86, 0
      %p275 = por %p273, %p274
      %s277 = sadd.s32 %s276, 1
      %p280 = scmp.eq.s32.totalorder %s80, 1
      %p281 = scmp.ne.s32.totalorder %s276, %s278
      %p282 = scmp.eq.s32.totalorder %s80, 0
      %p283 = por %p281, %p282
      %p284 = scmp.ne.s32.totalorder %s276, %s278
      %p285 = scmp.eq.s32.totalorder %s85, 1
      %p286 = por %p284, %p285
      %p287 = scmp.ne.s32.totalorder %s278, %s279
      %p288 = scmp.eq.s32.totalorder %s85, 0
      %p289 = por %p287, %p288
      %p290 = scmp.ne.s32.totalorder %s278, %s279
      %p291 = scmp.eq.s32.totalorder %s86, 1
      %p292 = por %p290, %p291
      %p294 = scmp.ne.s32.totalorder %s279, %s293
      %p295 = scmp.eq.s32.totalorder %s86, 0
      %p296 = por %p294, %p295
      %s298 = sadd.s32 %s297, 1
      %p301 = scmp.eq.s32.totalorder %s80, 1
      %p302 = scmp.ne.s32.totalorder %s297, %s299
      %p303 = scmp.eq.s32.totalorder %s80, 0
      %p304 = por %p302, %p303
      %p305 = scmp.ne.s32.totalorder %s297, %s299
      %p306 = scmp.eq.s32.totalorder %s85, 1
      %p307 = por %p305, %p306
      %p308 = scmp.ne.s32.totalorder %s299, %s300
      %p309 = scmp.eq.s32.totalorder %s85, 0
      %p310 = por %p308, %p309
      %p311 = scmp.ne.s32.totalorder %s299, %s300
      %p312 = scmp.eq.s32.totalorder %s86, 1
      %p313 = por %p311, %p312
      %p315 = scmp.ne.s32.totalorder %s300, %s314
      %p316 = scmp.eq.s32.totalorder %s86, 0
      %p317 = por %p315, %p316
      %s319 = sadd.s32 %s318, 1
      %p322 = scmp.eq.s32.totalorder %s80, 1
      %p323 = scmp.ne.s32.totalorder %s318, %s320
      %p324 = scmp.eq.s32.totalorder %s80, 0
      %p325 = por %p323, %p324
      %p326 = scmp.ne.s32.totalorder %s318, %s320
      %p327 = scmp.eq.s32.totalorder %s85, 1
      %p328 = por %p326, %p327
      %p329 = scmp.ne.s32.totalorder %s320, %s321
      %p330 = scmp.eq.s32.totalorder %s85, 0
      %p331 = por %p329, %p330
      %p332 = scmp.ne.s32.totalorder %s320, %s321
      %p333 = scmp.eq.s32.totalorder %s86, 1
      %p334 = por %p332, %p333
      %p336 = scmp.ne.s32.totalorder %s321, %s335
      %p337 = scmp.eq.s32.totalorder %s86, 0
      %p338 = por %p336, %p337
      %s340 = sadd.s32 %s339, 1
      %p343 = scmp.eq.s32.totalorder %s80, 1
      %p344 = scmp.ne.s32.totalorder %s339, %s341
      %p345 = scmp.eq.s32.totalorder %s80, 0
      %p346 = por %p344, %p345
      %p347 = scmp.ne.s32.totalorder %s339, %s341
      %p348 = scmp.eq.s32.totalorder %s85, 1
      %p349 = por %p347, %p348
      %p350 = scmp.ne.s32.totalorder %s341, %s342
      %p351 = scmp.eq.s32.totalorder %s85, 0
      %p352 = por %p350, %p351
      %p353 = scmp.ne.s32.totalorder %s341, %s342
      %p354 = scmp.eq.s32.totalorder %s86, 1
      %p355 = por %p353, %p354
      %p357 = scmp.ne.s32.totalorder %s342, %s356
      %p358 = scmp.eq.s32.totalorder %s86, 0
      %p359 = por %p357, %p358
      %s361 = sadd.s32 %s360, 1
      %p364 = scmp.eq.s32.totalorder %s80, 1
      %p365 = scmp.ne.s32.totalorder %s360, %s362
      %p366 = scmp.eq.s32.totalorder %s80, 0
      %p367 = por %p365, %p366
      %p368 = scmp.ne.s32.totalorder %s360, %s362
      %p369 = scmp.eq.s32.totalorder %s85, 1
      %p370 = por %p368, %p369
      %p371 = scmp.ne.s32.totalorder %s362, %s363
      %p372 = scmp.eq.s32.totalorder %s85, 0
      %p373 = por %p371, %p372
      %p374 = scmp.ne.s32.totalorder %s362, %s363
      %p375 = scmp.eq.s32.totalorder %s86, 1
      %p376 = por %p374, %p375
      %p378 = scmp.ne.s32.totalorder %s363, %s377
      %p379 = scmp.eq.s32.totalorder %s86, 0
      %p380 = por %p378, %p379
      %s382 = sadd.s32 %s381, 1
      %p385 = scmp.eq.s32.totalorder %s80, 1
      %p386 = scmp.ne.s32.totalorder %s381, %s383
      %p387 = scmp.eq.s32.totalorder %s80, 0
      %p388 = por %p386, %p387
      %p389 = scmp.ne.s32.totalorder %s381, %s383
      %p390 = scmp.eq.s32.totalorder %s85, 1
      %p391 = por %p389, %p390
      %p392 = scmp.ne.s32.totalorder %s383, %s384
      %p393 = scmp.eq.s32.totalorder %s85, 0
      %p394 = por %p392, %p393
      %p395 = scmp.ne.s32.totalorder %s383, %s384
      %p396 = scmp.eq.s32.totalorder %s86, 1
      %p397 = por %p395, %p396
      %p399 = scmp.ne.s32.totalorder %s384, %s398
      %p400 = scmp.eq.s32.totalorder %s86, 0
      %p401 = por %p399, %p400
      %s403 = sadd.s32 %s402, 1
      %p406 = scmp.eq.s32.totalorder %s80, 1
      %p407 = scmp.ne.s32.totalorder %s402, %s404
      %p408 = scmp.eq.s32.totalorder %s80, 0
      %p409 = por %p407, %p408
      %p410 = scmp.ne.s32.totalorder %s402, %s404
      %p411 = scmp.eq.s32.totalorder %s85, 1
      %p412 = por %p410, %p411
      %p413 = scmp.ne.s32.totalorder %s404, %s405
      %p414 = scmp.eq.s32.totalorder %s85, 0
      %p415 = por %p413, %p414
      %p416 = scmp.ne.s32.totalorder %s404, %s405
      %p417 = scmp.eq.s32.totalorder %s86, 1
      %p418 = por %p416, %p417
      %p420 = scmp.ne.s32.totalorder %s405, %s419
      %p421 = scmp.eq.s32.totalorder %s86, 0
      %p422 = por %p420, %p421
      %s424 = sadd.s32 %s423, 1
      %p427 = scmp.eq.s32.totalorder %s80, 1
      %p428 = scmp.ne.s32.totalorder %s423, %s425
      %p429 = scmp.eq.s32.totalorder %s80, 0
      %p430 = por %p428, %p429
      %p431 = scmp.ne.s32.totalorder %s423, %s425
      %p432 = scmp.eq.s32.totalorder %s85, 1
      %p433 = por %p431, %p432
      %p434 = scmp.ne.s32.totalorder %s425, %s426
      %p435 = scmp.eq.s32.totalorder %s85, 0
      %p436 = por %p434, %p435
      %p437 = scmp.ne.s32.totalorder %s425, %s426
      %p438 = scmp.eq.s32.totalorder %s86, 1
      %p439 = por %p437, %p438
      %p441 = scmp.ne.s32.totalorder %s426, %s440
      %p442 = scmp.eq.s32.totalorder %s86, 0
      %p443 = por %p441, %p442
      %s445 = sadd.s32 %s444, 1
      %p448 = scmp.eq.s32.totalorder %s80, 1
      %p449 = scmp.ne.s32.totalorder %s444, %s446
      %p450 = scmp.eq.s32.totalorder %s80, 0
      %p451 = por %p449, %p450
      %p452 = scmp.ne.s32.totalorder %s444, %s446
      %p453 = scmp.eq.s32.totalorder %s85, 1
      %p454 = por %p452, %p453
      %p455 = scmp.ne.s32.totalorder %s446, %s447
      %p456 = scmp.eq.s32.totalorder %s85, 0
      %p457 = por %p455, %p456
      %p458 = scmp.ne.s32.totalorder %s446, %s447
      %p459 = scmp.eq.s32.totalorder %s86, 1
      %p460 = por %p458, %p459
      %p462 = scmp.ne.s32.totalorder %s447, %s461
      %p463 = scmp.eq.s32.totalorder %s86, 0
      %p464 = por %p462, %p463
      %s466 = sadd.s32 %s465, 1
      %p469 = scmp.eq.s32.totalorder %s80, 1
      %p470 = scmp.ne.s32.totalorder %s465, %s467
      %p471 = scmp.eq.s32.totalorder %s80, 0
      %p472 = por %p470, %p471
      %p473 = scmp.ne.s32.totalorder %s465, %s467
      %p474 = scmp.eq.s32.totalorder %s85, 1
      %p475 = por %p473, %p474
      %p476 = scmp.ne.s32.totalorder %s467, %s468
      %p477 = scmp.eq.s32.totalorder %s85, 0
      %p478 = por %p476, %p477
      %p479 = scmp.ne.s32.totalorder %s467, %s468
      %p480 = scmp.eq.s32.totalorder %s86, 1
      %p481 = por %p479, %p480
      %p483 = scmp.ne.s32.totalorder %s468, %s482
      %p484 = scmp.eq.s32.totalorder %s86, 0
      %p485 = por %p483, %p484
      %s487 = sadd.s32 %s486, 1
      %p490 = scmp.eq.s32.totalorder %s80, 1
      %p491 = scmp.ne.s32.totalorder %s486, %s488
      %p492 = scmp.eq.s32.totalorder %s80, 0
      %p493 = por %p491, %p492
      %p494 = scmp.ne.s32.totalorder %s486, %s488
      %p495 = scmp.eq.s32.totalorder %s85, 1
      %p496 = por %p494, %p495
      %p497 = scmp.ne.s32.totalorder %s488, %s489
      %p498 = scmp.eq.s32.totalorder %s85, 0
      %p499 = por %p497, %p498
      %p500 = scmp.ne.s32.totalorder %s488, %s489
      %p501 = scmp.eq.s32.totalorder %s86, 1
      %p502 = por %p500, %p501
      %p504 = scmp.ne.s32.totalorder %s489, %s503
      %p505 = scmp.eq.s32.totalorder %s86, 0
      %p506 = por %p504, %p505
      %s508 = sadd.s32 %s507, 1
      %p511 = scmp.eq.s32.totalorder %s80, 1
      %p512 = scmp.ne.s32.totalorder %s507, %s509
      %p513 = scmp.eq.s32.totalorder %s80, 0
      %p514 = por %p512, %p513
      %p515 = scmp.ne.s32.totalorder %s507, %s509
      %p516 = scmp.eq.s32.totalorder %s85, 1
      %p517 = por %p515, %p516
      %p518 = scmp.ne.s32.totalorder %s509, %s510
      %p519 = scmp.eq.s32.totalorder %s85, 0
      %p520 = por %p518, %p519
      %p521 = scmp.ne.s32.totalorder %s509, %s510
      %p522 = scmp.eq.s32.totalorder %s86, 1
      %p523 = por %p521, %p522
      %p525 = scmp.ne.s32.totalorder %s510, %s524
      %p526 = scmp.eq.s32.totalorder %s86, 0
      %p527 = por %p525, %p526
      %s529 = sadd.s32 %s528, 1
      %p532 = scmp.eq.s32.totalorder %s80, 1
      %p533 = scmp.ne.s32.totalorder %s528, %s530
      %p534 = scmp.eq.s32.totalorder %s80, 0
      %p535 = por %p533, %p534
      %p536 = scmp.ne.s32.totalorder %s528, %s530
      %p537 = scmp.eq.s32.totalorder %s85, 1
      %p538 = por %p536, %p537
      %p539 = scmp.ne.s32.totalorder %s530, %s531
      %p540 = scmp.eq.s32.totalorder %s85, 0
      %p541 = por %p539, %p540
      %p542 = scmp.ne.s32.totalorder %s530, %s531
      %p543 = scmp.eq.s32.totalorder %s86, 1
      %p544 = por %p542, %p543
      %p546 = scmp.ne.s32.totalorder %s531, %s545
      %p547 = scmp.eq.s32.totalorder %s86, 0
      %p548 = por %p546, %p547
      %s550 = sadd.s32 %s549, 1
      %p553 = scmp.eq.s32.totalorder %s80, 1
      %p554 = scmp.ne.s32.totalorder %s549, %s551
      %p555 = scmp.eq.s32.totalorder %s80, 0
      %p556 = por %p554, %p555
      %p557 = scmp.ne.s32.totalorder %s549, %s551
      %p558 = scmp.eq.s32.totalorder %s85, 1
      %p559 = por %p557, %p558
      %p560 = scmp.ne.s32.totalorder %s551, %s552
      %p561 = scmp.eq.s32.totalorder %s85, 0
      %p562 = por %p560, %p561
      %p563 = scmp.ne.s32.totalorder %s551, %s552
      %p564 = scmp.eq.s32.totalorder %s86, 1
      %p565 = por %p563, %p564
      %p567 = scmp.ne.s32.totalorder %s552, %s566
      %p568 = scmp.eq.s32.totalorder %s86, 0
      %p569 = por %p567, %p568
      %s571 = sadd.s32 %s570, 1
      %p574 = scmp.eq.s32.totalorder %s80, 1
      %p575 = scmp.ne.s32.totalorder %s570, %s572
      %p576 = scmp.eq.s32.totalorder %s80, 0
      %p577 = por %p575, %p576
      %p578 = scmp.ne.s32.totalorder %s570, %s572
      %p579 = scmp.eq.s32.totalorder %s85, 1
      %p580 = por %p578, %p579
      %p581 = scmp.ne.s32.totalorder %s572, %s573
      %p582 = scmp.eq.s32.totalorder %s85, 0
      %p583 = por %p581, %p582
      %p584 = scmp.ne.s32.totalorder %s572, %s573
      %p585 = scmp.eq.s32.totalorder %s86, 1
      %p586 = por %p584, %p585
      %p588 = scmp.ne.s32.totalorder %s573, %s587
      %p589 = scmp.eq.s32.totalorder %s86, 0
      %p590 = por %p588, %p589
      %s592 = sadd.s32 %s591, 1
      %p595 = scmp.eq.s32.totalorder %s80, 1
      %p596 = scmp.ne.s32.totalorder %s591, %s593
      %p597 = scmp.eq.s32.totalorder %s80, 0
      %p598 = por %p596, %p597
      %p599 = scmp.ne.s32.totalorder %s591, %s593
      %p600 = scmp.eq.s32.totalorder %s85, 1
      %p601 = por %p599, %p600
      %p602 = scmp.ne.s32.totalorder %s593, %s594
      %p603 = scmp.eq.s32.totalorder %s85, 0
      %p604 = por %p602, %p603
      %p605 = scmp.ne.s32.totalorder %s593, %s594
      %p606 = scmp.eq.s32.totalorder %s86, 1
      %p607 = por %p605, %p606
      %p609 = scmp.ne.s32.totalorder %s594, %s608
      %p610 = scmp.eq.s32.totalorder %s86, 0
      %p611 = por %p609, %p610
      %s613 = sadd.s32 %s612, 1
      %p616 = scmp.eq.s32.totalorder %s80, 1
      %p617 = scmp.ne.s32.totalorder %s612, %s614
      %p618 = scmp.eq.s32.totalorder %s80, 0
      %p619 = por %p617, %p618
      %p620 = scmp.ne.s32.totalorder %s612, %s614
      %p621 = scmp.eq.s32.totalorder %s85, 1
      %p622 = por %p620, %p621
      %p623 = scmp.ne.s32.totalorder %s614, %s615
      %p624 = scmp.eq.s32.totalorder %s85, 0
      %p625 = por %p623, %p624
      %p626 = scmp.ne.s32.totalorder %s614, %s615
      %p627 = scmp.eq.s32.totalorder %s86, 1
      %p628 = por %p626, %p627
      %p630 = scmp.ne.s32.totalorder %s615, %s629
      %p631 = scmp.eq.s32.totalorder %s86, 0
      %p632 = por %p630, %p631
      %s634 = sadd.s32 %s633, 1
      %p637 = scmp.eq.s32.totalorder %s80, 1
      %p638 = scmp.ne.s32.totalorder %s633, %s635
      %p639 = scmp.eq.s32.totalorder %s80, 0
      %p640 = por %p638, %p639
      %p641 = scmp.ne.s32.totalorder %s633, %s635
      %p642 = scmp.eq.s32.totalorder %s85, 1
      %p643 = por %p641, %p642
      %p644 = scmp.ne.s32.totalorder %s635, %s636
      %p645 = scmp.eq.s32.totalorder %s85, 0
      %p646 = por %p644, %p645
      %p647 = scmp.ne.s32.totalorder %s635, %s636
      %p648 = scmp.eq.s32.totalorder %s86, 1
      %p649 = por %p647, %p648
      %p651 = scmp.ne.s32.totalorder %s636, %s650
      %p652 = scmp.eq.s32.totalorder %s86, 0
      %p653 = por %p651, %p652
      %s655 = sadd.s32 %s654, 1
      %p658 = scmp.eq.s32.totalorder %s80, 1
      %p659 = scmp.ne.s32.totalorder %s654, %s656
      %p660 = scmp.eq.s32.totalorder %s80, 0
      %p661 = por %p659, %p660
      %p662 = scmp.ne.s32.totalorder %s654, %s656
      %p663 = scmp.eq.s32.totalorder %s85, 1
      %p664 = por %p662, %p663
      %p665 = scmp.ne.s32.totalorder %s656, %s657
      %p666 = scmp.eq.s32.totalorder %s85, 0
      %p667 = por %p665, %p666
      %p668 = scmp.ne.s32.totalorder %s656, %s657
      %p669 = scmp.eq.s32.totalorder %s86, 1
      %p670 = por %p668, %p669
      %p672 = scmp.ne.s32.totalorder %s657, %s671
      %p673 = scmp.eq.s32.totalorder %s86, 0
      %p674 = por %p672, %p673
      %s676 = sadd.s32 %s675, 1
      %p679 = scmp.eq.s32.totalorder %s80, 1
      %p680 = scmp.ne.s32.totalorder %s675, %s677
      %p681 = scmp.eq.s32.totalorder %s80, 0
      %p682 = por %p680, %p681
      %p683 = scmp.ne.s32.totalorder %s675, %s677
      %p684 = scmp.eq.s32.totalorder %s85, 1
      %p685 = por %p683, %p684
      %p686 = scmp.ne.s32.totalorder %s677, %s678
      %p687 = scmp.eq.s32.totalorder %s85, 0
      %p688 = por %p686, %p687
      %p689 = scmp.ne.s32.totalorder %s677, %s678
      %p690 = scmp.eq.s32.totalorder %s86, 1
      %p691 = por %p689, %p690
      %p693 = scmp.ne.s32.totalorder %s678, %s692
      %p694 = scmp.eq.s32.totalorder %s86, 0
      %p695 = por %p693, %p694
      %s697 = sadd.s32 %s696, 1
      %p700 = scmp.eq.s32.totalorder %s80, 1
      %p701 = scmp.ne.s32.totalorder %s696, %s698
      %p702 = scmp.eq.s32.totalorder %s80, 0
      %p703 = por %p701, %p702
      %p704 = scmp.ne.s32.totalorder %s696, %s698
      %p705 = scmp.eq.s32.totalorder %s85, 1
      %p706 = por %p704, %p705
      %p707 = scmp.ne.s32.totalorder %s698, %s699
      %p708 = scmp.eq.s32.totalorder %s85, 0
      %p709 = por %p707, %p708
      %p710 = scmp.ne.s32.totalorder %s698, %s699
      %p711 = scmp.eq.s32.totalorder %s86, 1
      %p712 = por %p710, %p711
      %p714 = scmp.ne.s32.totalorder %s699, %s713
      %p715 = scmp.eq.s32.totalorder %s86, 0
      %p716 = por %p714, %p715
      %s718 = sadd.s32 %s717, 1
      %p721 = scmp.eq.s32.totalorder %s80, 1
      %p722 = scmp.ne.s32.totalorder %s717, %s719
      %p723 = scmp.eq.s32.totalorder %s80, 0
      %p724 = por %p722, %p723
      %p725 = scmp.ne.s32.totalorder %s717, %s719
      %p726 = scmp.eq.s32.totalorder %s85, 1
      %p727 = por %p725, %p726
      %p728 = scmp.ne.s32.totalorder %s719, %s720
      %p729 = scmp.eq.s32.totalorder %s85, 0
      %p730 = por %p728, %p729
      %p731 = scmp.ne.s32.totalorder %s719, %s720
      %p732 = scmp.eq.s32.totalorder %s86, 1
      %p733 = por %p731, %p732
      %p735 = scmp.ne.s32.totalorder %s720, %s734
      %p736 = scmp.eq.s32.totalorder %s86, 0
      %p737 = por %p735, %p736
      %s739 = sadd.s32 %s738, 1
      %p742 = scmp.eq.s32.totalorder %s80, 1
      %p743 = scmp.ne.s32.totalorder %s738, %s740
      %p744 = scmp.eq.s32.totalorder %s80, 0
      %p745 = por %p743, %p744
      %p746 = scmp.ne.s32.totalorder %s738, %s740
      %p747 = scmp.eq.s32.totalorder %s85, 1
      %p748 = por %p746, %p747
      %p749 = scmp.ne.s32.totalorder %s740, %s741
      %p750 = scmp.eq.s32.totalorder %s85, 0
      %p751 = por %p749, %p750
      %p752 = scmp.ne.s32.totalorder %s740, %s741
      %p753 = scmp.eq.s32.totalorder %s86, 1
      %p754 = por %p752, %p753
      %p756 = scmp.ne.s32.totalorder %s741, %s755
      %p757 = scmp.eq.s32.totalorder %s86, 0
      %p758 = por %p756, %p757
      %s760 = sadd.s32 %s759, 1
      %p763 = scmp.eq.s32.totalorder %s80, 1
      %p764 = scmp.ne.s32.totalorder %s759, %s761
      %p765 = scmp.eq.s32.totalorder %s80, 0
      %p766 = por %p764, %p765
      %p767 = scmp.ne.s32.totalorder %s759, %s761
      %p768 = scmp.eq.s32.totalorder %s85, 1
      %p769 = por %p767, %p768
      %p770 = scmp.ne.s32.totalorder %s761, %s762
      %p771 = scmp.eq.s32.totalorder %s85, 0
      %p772 = por %p770, %p771
      %p773 = scmp.ne.s32.totalorder %s761, %s762
      %p774 = scmp.eq.s32.totalorder %s86, 1
      %p775 = por %p773, %p774
      %p777 = scmp.ne.s32.totalorder %s762, %s776
      %p778 = scmp.eq.s32.totalorder %s86, 0
      %p779 = por %p777, %p778
      %s781 = sadd.s32 %s780, 1
      %p784 = scmp.eq.s32.totalorder %s80, 1
      %p785 = scmp.ne.s32.totalorder %s780, %s782
      %p786 = scmp.eq.s32.totalorder %s80, 0
      %p787 = por %p785, %p786
      %p788 = scmp.ne.s32.totalorder %s780, %s782
      %p789 = scmp.eq.s32.totalorder %s85, 1
      %p790 = por %p788, %p789
      %p791 = scmp.ne.s32.totalorder %s782, %s783
      %p792 = scmp.eq.s32.totalorder %s85, 0
      %p793 = por %p791, %p792
      %p794 = scmp.ne.s32.totalorder %s782, %s783
      %p795 = scmp.eq.s32.totalorder %s86, 1
      %p796 = por %p794, %p795
      %p798 = scmp.ne.s32.totalorder %s783, %s797
      %p799 = scmp.eq.s32.totalorder %s86, 0
      %p800 = por %p798, %p799
      %s802 = sadd.s32 %s801, 1
      %p805 = scmp.eq.s32.totalorder %s80, 1
      %p806 = scmp.ne.s32.totalorder %s801, %s803
      %p807 = scmp.eq.s32.totalorder %s80, 0
      %p808 = por %p806, %p807
      %p809 = scmp.ne.s32.totalorder %s801, %s803
      %p810 = scmp.eq.s32.totalorder %s85, 1
      %p811 = por %p809, %p810
      %p812 = scmp.ne.s32.totalorder %s803, %s804
      %p813 = scmp.eq.s32.totalorder %s85, 0
      %p814 = por %p812, %p813
      %p815 = scmp.ne.s32.totalorder %s803, %s804
      %p816 = scmp.eq.s32.totalorder %s86, 1
      %p817 = por %p815, %p816
      %p819 = scmp.ne.s32.totalorder %s804, %s818
      %p820 = scmp.eq.s32.totalorder %s86, 0
      %p821 = por %p819, %p820
      %s823 = sadd.s32 %s822, 1
      %p826 = scmp.eq.s32.totalorder %s80, 1
      %p827 = scmp.ne.s32.totalorder %s822, %s824
      %p828 = scmp.eq.s32.totalorder %s80, 0
      %p829 = por %p827, %p828
      %p830 = scmp.ne.s32.totalorder %s822, %s824
      %p831 = scmp.eq.s32.totalorder %s85, 1
      %p832 = por %p830, %p831
      %p833 = scmp.ne.s32.totalorder %s824, %s825
      %p834 = scmp.eq.s32.totalorder %s85, 0
      %p835 = por %p833, %p834
      %p836 = scmp.ne.s32.totalorder %s824, %s825
      %p837 = scmp.eq.s32.totalorder %s86, 1
      %p838 = por %p836, %p837
      %p840 = scmp.ne.s32.totalorder %s825, %s839
      %p841 = scmp.eq.s32.totalorder %s86, 0
      %p842 = por %p840, %p841
      %s843 = ssub.s32 %s80, %s87
      %p844 = scmp.eq.s32.totalorder %s843, 0
      %s846 = sadd.s32 %s845, 1
      %s847 = scalar_select %p844, %s845, %s846
      %p850 = pneg %p844
      %p851 = scmp.eq.s32.totalorder %s80, 1
      %p852 = por %p850, %p851
      %p853 = scmp.ne.s32.totalorder %s845, %s848
      %p854 = scmp.eq.s32.totalorder %s80, 0
      %p855 = por %p853, %p854
      %p856 = scmp.ne.s32.totalorder %s845, %s848
      %p857 = scmp.eq.s32.totalorder %s85, 1
      %p858 = por %p856, %p857
      %p859 = scmp.ne.s32.totalorder %s848, %s849
      %p860 = scmp.eq.s32.totalorder %s85, 0
      %p861 = por %p859, %p860
      %p862 = scmp.ne.s32.totalorder %s848, %s849
      %p863 = scmp.eq.s32.totalorder %s86, 1
      %p864 = por %p862, %p863
      %p866 = scmp.ne.s32.totalorder %s849, %s865
      %p867 = scmp.eq.s32.totalorder %s86, 0
      %p868 = por %p866, %p867
      %p869 = scmp.le.s32.totalorder 1, %s80
      %p870 = scmp.lt.s32.totalorder %s80, 3
      %p871 = pnand %p869, %p870
      %p872 = pneg %p871
      // Predicated region
      $region9: #{decoder_sublayer.1} parent=5 // pred_check
        _
      $region10: #{decoder_sublayer.1} parent=5 // pred_check_branch
        %874 = sbr.rel (%p871) target = $region12
      $region11: #{decoder_sublayer.1} parent=5 // pred_region
        %s875 = ssub.s32 %s80, 1
        // Predicated region
        $region13: #{decoder_sublayer.1} parent=11 // pred_check
          %p876 = pneg %p205
        $region14: #{decoder_sublayer.1} parent=11 // pred_check_branch
          %878 = sbr.rel (%p876) target = $region16
        $region15: #{decoder_sublayer.1} parent=11 // pred_region
          _
        $region16: #{decoder_sublayer.1} parent=11 // pred_fallthru
          _
        // Predicated region
        $region17: #{decoder_sublayer.1} parent=11 // pred_check
          %p879 = pneg %p226
        $region18: #{decoder_sublayer.1} parent=11 // pred_check_branch
          %881 = sbr.rel (%p879) target = $region20
        $region19: #{decoder_sublayer.1} parent=11 // pred_region
          _
        $region20: #{decoder_sublayer.1} parent=11 // pred_fallthru
          _
        // Predicated region
        $region21: #{decoder_sublayer.1} parent=11 // pred_check
          %p882 = pneg %p247
        $region22: #{decoder_sublayer.1} parent=11 // pred_check_branch
          %884 = sbr.rel (%p882) target = $region24
        $region23: #{decoder_sublayer.1} parent=11 // pred_region
          _
        $region24: #{decoder_sublayer.1} parent=11 // pred_fallthru
          _
        // Predicated region
        $region25: #{decoder_sublayer.1} parent=11 // pred_check
          %p885 = pneg %p268
        $region26: #{decoder_sublayer.1} parent=11 // pred_check_branch
          %887 = sbr.rel (%p885) target = $region28
        $region27: #{decoder_sublayer.1} parent=11 // pred_region
          _
        $region28: #{decoder_sublayer.1} parent=11 // pred_fallthru
          _
        // Predicated region
        $region29: #{decoder_sublayer.1} parent=11 // pred_check
          %p888 = pneg %p289
        $region30: #{decoder_sublayer.1} parent=11 // pred_check_branch
          %890 = sbr.rel (%p888) target = $region32
        $region31: #{decoder_sublayer.1} parent=11 // pred_region
          _
        $region32: #{decoder_sublayer.1} parent=11 // pred_fallthru
          _
        // Predicated region
        $region33: #{decoder_sublayer.1} parent=11 // pred_check
          %p891 = pneg %p310
        $region34: #{decoder_sublayer.1} parent=11 // pred_check_branch
          %893 = sbr.rel (%p891) target = $region36
        $region35: #{decoder_sublayer.1} parent=11 // pred_region
          _
        $region36: #{decoder_sublayer.1} parent=11 // pred_fallthru
          _
        // Predicated region
        $region37: #{decoder_sublayer.1} parent=11 // pred_check
          %p894 = pneg %p331
        $region38: #{decoder_sublayer.1} parent=11 // pred_check_branch
          %896 = sbr.rel (%p894) target = $region40
        $region39: #{decoder_sublayer.1} parent=11 // pred_region
          _
        $region40: #{decoder_sublayer.1} parent=11 // pred_fallthru
          _
        // Predicated region
        $region41: #{decoder_sublayer.1} parent=11 // pred_check
          %p897 = pneg %p352
        $region42: #{decoder_sublayer.1} parent=11 // pred_check_branch
          %899 = sbr.rel (%p897) target = $region44
        $region43: #{decoder_sublayer.1} parent=11 // pred_region
          _
        $region44: #{decoder_sublayer.1} parent=11 // pred_fallthru
          _
        // Predicated region
        $region45: #{decoder_sublayer.1} parent=11 // pred_check
          %p900 = pneg %p373
        $region46: #{decoder_sublayer.1} parent=11 // pred_check_branch
          %902 = sbr.rel (%p900) target = $region48
        $region47: #{decoder_sublayer.1} parent=11 // pred_region
          _
        $region48: #{decoder_sublayer.1} parent=11 // pred_fallthru
          _
        // Predicated region
        $region49: #{decoder_sublayer.1} parent=11 // pred_check
          %p903 = pneg %p394
        $region50: #{decoder_sublayer.1} parent=11 // pred_check_branch
          %905 = sbr.rel (%p903) target = $region52
        $region51: #{decoder_sublayer.1} parent=11 // pred_region
          _
        $region52: #{decoder_sublayer.1} parent=11 // pred_fallthru
          _
        // Predicated region
        $region53: #{decoder_sublayer.1} parent=11 // pred_check
          %p906 = pneg %p415
        $region54: #{decoder_sublayer.1} parent=11 // pred_check_branch
          %908 = sbr.rel (%p906) target = $region56
        $region55: #{decoder_sublayer.1} parent=11 // pred_region
          _
        $region56: #{decoder_sublayer.1} parent=11 // pred_fallthru
          _
        // Predicated region
        $region57: #{decoder_sublayer.1} parent=11 // pred_check
          %p909 = pneg %p436
        $region58: #{decoder_sublayer.1} parent=11 // pred_check_branch
          %911 = sbr.rel (%p909) target = $region60
        $region59: #{decoder_sublayer.1} parent=11 // pred_region
          _
        $region60: #{decoder_sublayer.1} parent=11 // pred_fallthru
          _
        // Predicated region
        $region61: #{decoder_sublayer.1} parent=11 // pred_check
          %p912 = pneg %p457
        $region62: #{decoder_sublayer.1} parent=11 // pred_check_branch
          %914 = sbr.rel (%p912) target = $region64
        $region63: #{decoder_sublayer.1} parent=11 // pred_region
          _
        $region64: #{decoder_sublayer.1} parent=11 // pred_fallthru
          _
        // Predicated region
        $region65: #{decoder_sublayer.1} parent=11 // pred_check
          %p915 = pneg %p478
        $region66: #{decoder_sublayer.1} parent=11 // pred_check_branch
          %917 = sbr.rel (%p915) target = $region68
        $region67: #{decoder_sublayer.1} parent=11 // pred_region
          _
        $region68: #{decoder_sublayer.1} parent=11 // pred_fallthru
          _
        // Predicated region
        $region69: #{decoder_sublayer.1} parent=11 // pred_check
          %p918 = pneg %p499
        $region70: #{decoder_sublayer.1} parent=11 // pred_check_branch
          %920 = sbr.rel (%p918) target = $region72
        $region71: #{decoder_sublayer.1} parent=11 // pred_region
          _
        $region72: #{decoder_sublayer.1} parent=11 // pred_fallthru
          _
        // Predicated region
        $region73: #{decoder_sublayer.1} parent=11 // pred_check
          %p921 = pneg %p520
        $region74: #{decoder_sublayer.1} parent=11 // pred_check_branch
          %923 = sbr.rel (%p921) target = $region76
        $region75: #{decoder_sublayer.1} parent=11 // pred_region
          _
        $region76: #{decoder_sublayer.1} parent=11 // pred_fallthru
          _
        // Predicated region
        $region77: #{decoder_sublayer.1} parent=11 // pred_check
          %p924 = pneg %p541
        $region78: #{decoder_sublayer.1} parent=11 // pred_check_branch
          %926 = sbr.rel (%p924) target = $region80
        $region79: #{decoder_sublayer.1} parent=11 // pred_region
          _
        $region80: #{decoder_sublayer.1} parent=11 // pred_fallthru
          _
        // Predicated region
        $region81: #{decoder_sublayer.1} parent=11 // pred_check
          %p927 = pneg %p562
        $region82: #{decoder_sublayer.1} parent=11 // pred_check_branch
          %929 = sbr.rel (%p927) target = $region84
        $region83: #{decoder_sublayer.1} parent=11 // pred_region
          _
        $region84: #{decoder_sublayer.1} parent=11 // pred_fallthru
          _
        // Predicated region
        $region85: #{decoder_sublayer.1} parent=11 // pred_check
          %p930 = pneg %p583
        $region86: #{decoder_sublayer.1} parent=11 // pred_check_branch
          %932 = sbr.rel (%p930) target = $region88
        $region87: #{decoder_sublayer.1} parent=11 // pred_region
          _
        $region88: #{decoder_sublayer.1} parent=11 // pred_fallthru
          _
        // Predicated region
        $region89: #{decoder_sublayer.1} parent=11 // pred_check
          %p933 = pneg %p604
        $region90: #{decoder_sublayer.1} parent=11 // pred_check_branch
          %935 = sbr.rel (%p933) target = $region92
        $region91: #{decoder_sublayer.1} parent=11 // pred_region
          _
        $region92: #{decoder_sublayer.1} parent=11 // pred_fallthru
          _
        // Predicated region
        $region93: #{decoder_sublayer.1} parent=11 // pred_check
          %p936 = pneg %p625
        $region94: #{decoder_sublayer.1} parent=11 // pred_check_branch
          %938 = sbr.rel (%p936) target = $region96
        $region95: #{decoder_sublayer.1} parent=11 // pred_region
          _
        $region96: #{decoder_sublayer.1} parent=11 // pred_fallthru
          _
        // Predicated region
        $region97: #{decoder_sublayer.1} parent=11 // pred_check
          %p939 = pneg %p646
        $region98: #{decoder_sublayer.1} parent=11 // pred_check_branch
          %941 = sbr.rel (%p939) target = $region100
        $region99: #{decoder_sublayer.1} parent=11 // pred_region
          _
        $region100: #{decoder_sublayer.1} parent=11 // pred_fallthru
          _
        // Predicated region
        $region101: #{decoder_sublayer.1} parent=11 // pred_check
          %p942 = pneg %p667
        $region102: #{decoder_sublayer.1} parent=11 // pred_check_branch
          %944 = sbr.rel (%p942) target = $region104
        $region103: #{decoder_sublayer.1} parent=11 // pred_region
          _
        $region104: #{decoder_sublayer.1} parent=11 // pred_fallthru
          _
        // Predicated region
        $region105: #{decoder_sublayer.1} parent=11 // pred_check
          %p945 = pneg %p688
        $region106: #{decoder_sublayer.1} parent=11 // pred_check_branch
          %947 = sbr.rel (%p945) target = $region108
        $region107: #{decoder_sublayer.1} parent=11 // pred_region
          _
        $region108: #{decoder_sublayer.1} parent=11 // pred_fallthru
          _
        // Predicated region
        $region109: #{decoder_sublayer.1} parent=11 // pred_check
          %p948 = pneg %p709
        $region110: #{decoder_sublayer.1} parent=11 // pred_check_branch
          %950 = sbr.rel (%p948) target = $region112
        $region111: #{decoder_sublayer.1} parent=11 // pred_region
          _
        $region112: #{decoder_sublayer.1} parent=11 // pred_fallthru
          _
        // Predicated region
        $region113: #{decoder_sublayer.1} parent=11 // pred_check
          %p951 = pneg %p730
        $region114: #{decoder_sublayer.1} parent=11 // pred_check_branch
          %953 = sbr.rel (%p951) target = $region116
        $region115: #{decoder_sublayer.1} parent=11 // pred_region
          _
        $region116: #{decoder_sublayer.1} parent=11 // pred_fallthru
          _
        // Predicated region
        $region117: #{decoder_sublayer.1} parent=11 // pred_check
          %p954 = pneg %p751
        $region118: #{decoder_sublayer.1} parent=11 // pred_check_branch
          %956 = sbr.rel (%p954) target = $region120
        $region119: #{decoder_sublayer.1} parent=11 // pred_region
          _
        $region120: #{decoder_sublayer.1} parent=11 // pred_fallthru
          _
        // Predicated region
        $region121: #{decoder_sublayer.1} parent=11 // pred_check
          %p957 = pneg %p772
        $region122: #{decoder_sublayer.1} parent=11 // pred_check_branch
          %959 = sbr.rel (%p957) target = $region124
        $region123: #{decoder_sublayer.1} parent=11 // pred_region
          _
        $region124: #{decoder_sublayer.1} parent=11 // pred_fallthru
          _
        // Predicated region
        $region125: #{decoder_sublayer.1} parent=11 // pred_check
          %p960 = pneg %p793
        $region126: #{decoder_sublayer.1} parent=11 // pred_check_branch
          %962 = sbr.rel (%p960) target = $region128
        $region127: #{decoder_sublayer.1} parent=11 // pred_region
          _
        $region128: #{decoder_sublayer.1} parent=11 // pred_fallthru
          _
        // Predicated region
        $region129: #{decoder_sublayer.1} parent=11 // pred_check
          %p963 = pneg %p814
        $region130: #{decoder_sublayer.1} parent=11 // pred_check_branch
          %965 = sbr.rel (%p963) target = $region132
        $region131: #{decoder_sublayer.1} parent=11 // pred_region
          _
        $region132: #{decoder_sublayer.1} parent=11 // pred_fallthru
          _
        // Predicated region
        $region133: #{decoder_sublayer.1} parent=11 // pred_check
          %p966 = pneg %p835
        $region134: #{decoder_sublayer.1} parent=11 // pred_check_branch
          %968 = sbr.rel (%p966) target = $region136
        $region135: #{decoder_sublayer.1} parent=11 // pred_region
          _
        $region136: #{decoder_sublayer.1} parent=11 // pred_fallthru
          _
      $region12: #{decoder_sublayer.1} parent=5 // pred_fallthru
        _
      %p969 = scmp.lt.s32.totalorder %s80, 2
      // Predicated region
      $region137: #{decoder_sublayer.1} parent=5 // pred_check
        %p970 = pneg %p969
      $region138: #{decoder_sublayer.1} parent=5 // pred_check_branch
        %972 = sbr.rel (%p970) target = $region140
      $region139: #{decoder_sublayer.1} parent=5 // pred_region
        // Predicated region
        $region141: #{decoder_sublayer.1} parent=139 // pred_check
          %p973 = pneg %p100
        $region142: #{decoder_sublayer.1} parent=139 // pred_check_branch
          %975 = sbr.rel (%p973) target = $region144
        $region143: #{decoder_sublayer.1} parent=139 // pred_region
          %p976 = scmp.lt.s32.totalorder %s80, 1
          %s977 = scalar_select %p976, %s80, 1
          %s978 = smul.addr %s977, 8
          %s979 = scalar_lea.vmem %s1, %s978
        $region144: #{decoder_sublayer.1} parent=139 // pred_fallthru
          _
        // Predicated region
        $region145: #{decoder_sublayer.1} parent=139 // pred_check
          %p980 = pneg %p126
        $region146: #{decoder_sublayer.1} parent=139 // pred_check_branch
          %982 = sbr.rel (%p980) target = $region148
        $region147: #{decoder_sublayer.1} parent=139 // pred_region
          %p983 = scmp.lt.s32.totalorder %s80, 1
          %s984 = scalar_select %p983, %s80, 1
          %s985 = smul.addr %s984, 2
          %s986 = smul.addr %s985, 8
          %s987 = scalar_lea.vmem %s3, %s986
        $region148: #{decoder_sublayer.1} parent=139 // pred_fallthru
          _
        // Predicated region
        $region149: #{decoder_sublayer.1} parent=139 // pred_check
          %p988 = pneg %p152
        $region150: #{decoder_sublayer.1} parent=139 // pred_check_branch
          %990 = sbr.rel (%p988) target = $region152
        $region151: #{decoder_sublayer.1} parent=139 // pred_region
          %p991 = scmp.lt.s32.totalorder %s80, 1
          %s992 = scalar_select %p991, %s80, 1
          %s993 = smul.addr %s992, 4
          %s994 = smul.addr %s993, 8
          %s995 = scalar_lea.vmem %s5, %s994
        $region152: #{decoder_sublayer.1} parent=139 // pred_fallthru
          _
        // Predicated region
        $region153: #{decoder_sublayer.1} parent=139 // pred_check
          %p996 = pneg %p178
        $region154: #{decoder_sublayer.1} parent=139 // pred_check_branch
          %998 = sbr.rel (%p996) target = $region156
        $region155: #{decoder_sublayer.1} parent=139 // pred_region
          %p999 = scmp.lt.s32.totalorder %s80, 1
          %s1000 = scalar_select %p999, %s80, 1
          %s1001 = smul.addr %s1000, 4
          %s1002 = smul.addr %s1001, 8
          %s1003 = scalar_lea.vmem %s7, %s1002
        $region156: #{decoder_sublayer.1} parent=139 // pred_fallthru
          _
      $region140: #{decoder_sublayer.1} parent=5 // pred_fallthru
        _
      %p1004 = scmp.le.s32.totalorder 1, %s80
      %p1005 = scmp.lt.s32.totalorder %s80, 3
      %p1006 = pnand %p1004, %p1005
      %p1007 = pneg %p1006
      // Predicated region
      $region157: #{decoder_sublayer.1} parent=5 // pred_check
        _
      $region158: #{decoder_sublayer.1} parent=5 // pred_check_branch
        %1009 = sbr.rel (%p1006) target = $region160
      $region159: #{decoder_sublayer.1} parent=5 // pred_region
        %s1010 = ssub.s32 %s80, 1
        %p1011 = scmp.lt.s32.totalorder %s85, 1
        %s1012 = scalar_select %p1011, %s85, 1
        %s1013 = smul.addr %s1012, 8
        %s1014 = scalar_lea.vmem %s1, %s1013
        %p1015 = pneg %p106
        %p1016 = pneg %p103
        %p1017 = scmp.lt.s32.totalorder %s85, 1
        %s1018 = scalar_select %p1017, %s85, 1
        %s1019 = smul.addr %s1018, 2
        %s1020 = smul.addr %s1019, 8
        %s1021 = scalar_lea.vmem %s3, %s1020
        %p1022 = pneg %p132
        %p1023 = pneg %p129
        %p1024 = scmp.lt.s32.totalorder %s85, 1
        %s1025 = scalar_select %p1024, %s85, 1
        %s1026 = smul.addr %s1025, 4
        %s1027 = smul.addr %s1026, 8
        %s1028 = scalar_lea.vmem %s5, %s1027
        %p1029 = pneg %p158
        %p1030 = pneg %p155
        %p1031 = scmp.lt.s32.totalorder %s85, 1
        %s1032 = scalar_select %p1031, %s85, 1
        %s1033 = smul.addr %s1032, 4
        %s1034 = smul.addr %s1033, 8
        %s1035 = scalar_lea.vmem %s7, %s1034
        %p1036 = pneg %p184
        %p1037 = pneg %p181
        %p1038 = pneg %p205
        %p1039 = pneg %p202
        %p1040 = pneg %p226
        %p1041 = pneg %p223
        %p1042 = pneg %p247
        %p1043 = pneg %p244
        %p1044 = pneg %p268
        %p1045 = pneg %p265
        %p1046 = pneg %p289
        %p1047 = pneg %p286
        %p1048 = pneg %p310
        %p1049 = pneg %p307
        %p1050 = pneg %p331
        %p1051 = pneg %p328
        %p1052 = pneg %p352
        %p1053 = pneg %p349
        %p1054 = pneg %p373
        %p1055 = pneg %p370
        %p1056 = pneg %p394
        %p1057 = pneg %p391
        %p1058 = pneg %p415
        %p1059 = pneg %p412
        %p1060 = pneg %p436
        %p1061 = pneg %p433
        %p1062 = pneg %p457
        %p1063 = pneg %p454
        %p1064 = pneg %p478
        %p1065 = pneg %p475
        %p1066 = pneg %p499
        %p1067 = pneg %p496
        %p1068 = pneg %p520
        %p1069 = pneg %p517
        %p1070 = pneg %p541
        %p1071 = pneg %p538
        %p1072 = pneg %p562
        %p1073 = pneg %p559
        %p1074 = pneg %p583
        %p1075 = pneg %p580
        %p1076 = pneg %p604
        %p1077 = pneg %p601
        %p1078 = pneg %p625
        %p1079 = pneg %p622
        %p1080 = pneg %p646
        %p1081 = pneg %p643
        %p1082 = pneg %p667
        %p1083 = pneg %p664
        %p1084 = pneg %p688
        %p1085 = pneg %p685
        %p1086 = pneg %p709
        %p1087 = pneg %p706
        %p1088 = pneg %p730
        %p1089 = pneg %p727
        %p1090 = pneg %p751
        %p1091 = pneg %p748
        %p1092 = pneg %p772
        %p1093 = pneg %p769
        %p1094 = pneg %p793
        %p1095 = pneg %p790
        %p1096 = pneg %p814
        %p1097 = pneg %p811
        %p1098 = pneg %p835
        %p1099 = pneg %p832
        %p1100 = pneg %p861
        %p1101 = pneg %p858
        %s1102 = sand.u32 %s848, 1
        %s1103 = scalar_lea.sflag [#allocation3], %s1102
        %s1104 = sand.u32 %s848, 1
        %s1105 = smul.addr %s1104, 8
        %s1106 = scalar_lea.vmem [#allocation2], %s1105
        %p1107 = scmp.lt.s32.totalorder %s85, 1
        %s1108 = scalar_select %p1107, %s85, 1
        %s1109 = smul.addr %s1108, 8
        %s1110 = scalar_lea.vmem %s1, %s1109
        %p1111 = scmp.lt.s32.totalorder %s85, 1
        %s1112 = scalar_select %p1111, %s85, 1
        %s1113 = smul.addr %s1112, 2
        %s1114 = smul.addr %s1113, 8
        %s1115 = scalar_lea.vmem %s3, %s1114
        %p1116 = scmp.lt.s32.totalorder %s85, 1
        %s1117 = scalar_select %p1116, %s85, 1
        %s1118 = smul.addr %s1117, 4
        %s1119 = smul.addr %s1118, 8
        %s1120 = scalar_lea.vmem %s5, %s1119
        %p1121 = scmp.lt.s32.totalorder %s85, 1
        %s1122 = scalar_select %p1121, %s85, 1
        %s1123 = smul.addr %s1122, 4
        %s1124 = smul.addr %s1123, 8
        %s1125 = scalar_lea.vmem %s7, %s1124
        %v1126 = vld [vmem:[%s1110] sm:$0xff]
        %v1127 = vld [vmem:[%s1115] sm:$0xff]
        %v1128 = vld [vmem:[%s1115 + $0x8] sm:$0xff]
        %v1129 = vld [vmem:[%s9] sm:$0xff]
        %v1130 = vld [vmem:[%s9 + $0x8] sm:$0xff]
        %v1131 = vld [vmem:[%s9 + $0x10] sm:$0xff]
        %v1132 = vld [vmem:[%s9 + $0x18] sm:$0xff]
        %v1133 = vld [vmem:[%s13] sm:$0xff]
        %v1134 = vld [vmem:[%s13 + $0x8] sm:$0xff]
        %v1135 = vld [vmem:[%s13 + $0x10] sm:$0xff]
        %v1136 = vld [vmem:[%s13 + $0x18] sm:$0xff]
        %v1137 = vld [vmem:[%s11] sm:$0xff]
        %v1138 = vld [vmem:[%s11 + $0x8] sm:$0xff]
        %v1139 = vld [vmem:[%s11 + $0x10] sm:$0xff]
        %v1140 = vld [vmem:[%s11 + $0x18] sm:$0xff]
        %v1141 = vld [vmem:[%s11 + $0x20] sm:$0xff]
        %v1142 = vld [vmem:[%s11 + $0x28] sm:$0xff]
        %v1143 = vld [vmem:[%s11 + $0x30] sm:$0xff]
        %v1144 = vld [vmem:[%s11 + $0x38] sm:$0xff]
        %v1145 = vld [vmem:[%s15] sm:$0xff]
        %v1146 = vld [vmem:[%s15 + $0x8] sm:$0xff]
        %v1147 = vld [vmem:[%s15 + $0x10] sm:$0xff]
        %v1148 = vld [vmem:[%s15 + $0x18] sm:$0xff]
        %v1149 = vld [vmem:[%s15 + $0x20] sm:$0xff]
        %v1150 = vld [vmem:[%s15 + $0x28] sm:$0xff]
        %v1151 = vld [vmem:[%s15 + $0x30] sm:$0xff]
        %v1152 = vld [vmem:[%s15 + $0x38] sm:$0xff]
        %v1153 = vld [vmem:[%s17] sm:$0xff]
        %v1154 = vld [vmem:[%s17 + $0x8] sm:$0xff]
        %v1155 = vld [vmem:[%s17 + $0x10] sm:$0xff]
        %v1156 = vld [vmem:[%s17 + $0x18] sm:$0xff]
        %v1157 = vld [vmem:[%s19] sm:$0xff]
        %v1158 = vld [vmem:[%s19 + $0x8] sm:$0xff]
        %v1159 = vld [vmem:[%s19 + $0x10] sm:$0xff]
        %v1160 = vld [vmem:[%s19 + $0x18] sm:$0xff]
        %v1161 = vld [vmem:[%s21] sm:$0x1]
        %v1163 = vperm.slane %v1161, 0
        %vm1165 = vcmask 261120
        %v1167 = vsel %vm1165, %v1126, 0
        %1169 = vmatpush.msra.mxu0 0.0
        %1170 = vmatpush.msra.mxu0 0.0
        %1171 = vmatpush.msra.mxu0 0.0
        %1172 = vmatpush.msra.mxu0 0.0
        %1173 = vmatpush.msra.mxu0 0.0
        %1174 = vmatpush.msra.mxu0 0.0
        %1175 = vmatpush.msra.mxu0 0.0
        %1176 = vmatpush.msra.mxu0 0.0
        %1177 = vmatpush.msra.mxu0 0.0
        %1178 = vmatpush.msra.mxu0 0.0
        %1179 = vmatpush.msra.mxu0 0.0
        %1180 = vmatpush.msra.mxu0 0.0
        %1181 = vmatpush.msra.mxu0 %v1160
        %1182 = vmatpush.msra.mxu0 %v1159
        %1183 = vmatpush.msra.mxu0 %v1158
        %1184 = vmatpush.msra.mxu0 %v1157
        %1185 = vmatmul.f32.gmra.mxu0 %v1167
        %v1186 = vpop.f32.mrf.mxu0
        %v1187 = vadd.f32 %v1163, %v1186
        %1188 = vdwg.mxu0
        %v1189 = vld [vmem:[%s23] sm:$0xff]
        %v1190 = vld [vmem:[%s23 + $0x8] sm:$0xff]
        %v1191 = vld [vmem:[%s23 + $0x10] sm:$0xff]
        %v1192 = vld [vmem:[%s23 + $0x18] sm:$0xff]
        %v1193 = vld [vmem:[%s25] sm:$0x1]
        %v1195 = vperm.slane %v1193, 0
        %1197 = vmatpush.msra.mxu0 0.0
        %1198 = vmatpush.msra.mxu0 0.0
        %1199 = vmatpush.msra.mxu0 0.0
        %1200 = vmatpush.msra.mxu0 0.0
        %1201 = vmatpush.msra.mxu0 0.0
        %1202 = vmatpush.msra.mxu0 0.0
        %1203 = vmatpush.msra.mxu0 0.0
        %1204 = vmatpush.msra.mxu0 0.0
        %1205 = vmatpush.msra.mxu0 0.0
        %1206 = vmatpush.msra.mxu0 0.0
        %1207 = vmatpush.msra.mxu0 0.0
        %1208 = vmatpush.msra.mxu0 0.0
        %1209 = vmatpush.msra.mxu0 %v1192
        %1210 = vmatpush.msra.mxu0 %v1191
        %1211 = vmatpush.msra.mxu0 %v1190
        %1212 = vmatpush.msra.mxu0 %v1189
        %1213 = vmatmul.f32.gmra.mxu0 %v1167
        %v1214 = vpop.f32.mrf.mxu0
        %v1215 = vadd.f32 %v1195, %v1214
        %1216 = vdwg.mxu0
        %v1217 = vld [vmem:[%s27] sm:$0xff]
        %v1218 = vld [vmem:[%s27 + $0x8] sm:$0xff]
        %v1219 = vld [vmem:[%s27 + $0x10] sm:$0xff]
        %v1220 = vld [vmem:[%s27 + $0x18] sm:$0xff]
        %v1221 = vld [vmem:[%s29] sm:$0x1]
        %v1223 = vperm.slane %v1221, 0
        %1225 = vmatpush.msra.mxu0 0.0
        %1226 = vmatpush.msra.mxu0 0.0
        %1227 = vmatpush.msra.mxu0 0.0
        %1228 = vmatpush.msra.mxu0 0.0
        %1229 = vmatpush.msra.mxu0 0.0
        %1230 = vmatpush.msra.mxu0 0.0
        %1231 = vmatpush.msra.mxu0 0.0
        %1232 = vmatpush.msra.mxu0 0.0
        %1233 = vmatpush.msra.mxu0 0.0
        %1234 = vmatpush.msra.mxu0 0.0
        %1235 = vmatpush.msra.mxu0 0.0
        %1236 = vmatpush.msra.mxu0 0.0
        %1237 = vmatpush.msra.mxu0 %v1220
        %1238 = vmatpush.msra.mxu0 %v1219
        %1239 = vmatpush.msra.mxu0 %v1218
        %1240 = vmatpush.msra.mxu0 %v1217
        %1241 = vmatmul.f32.gmra.mxu0 %v1167
        %v1242 = vpop.f32.mrf.mxu0
        %v1243 = vadd.f32 %v1223, %v1242
        %1244 = vdwg.mxu0
        %vm1245 = vcmask 64512
        %v1247 = vsel %vm1245, %v1129, 0
        %v1250 = vsel %vm1245, %v1130, 0
        %v1253 = vsel %vm1245, %v1131, 0
        %v1256 = vsel %vm1245, %v1132, 0
        %1258 = vmatpush.msra.mxu0 0.0
        %1259 = vmatpush.msra.mxu0 0.0
        %1260 = vmatpush.msra.mxu0 0.0
        %1261 = vmatpush.msra.mxu0 0.0
        %1262 = vmatpush.msra.mxu0 0.0
        %1263 = vmatpush.msra.mxu0 0.0
        %1264 = vmatpush.msra.mxu0 0.0
        %1265 = vmatpush.msra.mxu0 0.0
        %1266 = vmatpush.msra.mxu0 0.0
        %1267 = vmatpush.msra.mxu0 0.0
        %1268 = vmatpush.msra.mxu0 0.0
        %1269 = vmatpush.msra.mxu0 0.0
        %1270 = vmatpush.msra.mxu0 0.0
        %1271 = vmatpush.msra.mxu0 0.0
        %1272 = vmatpush.msra.mxu0 0.0
        %1273 = vmatpush.msra.mxu0 %v1187
        %1274 = vmatmul.f32.gmra.mxu0 %v1247
        %v1275 = vpop.f32.mrf.mxu0
        %v1276 = vadd.f32 0.0, %v1275
        %1277 = vmatmul.f32.gmra.mxu0 %v1250
        %v1278 = vpop.f32.mrf.mxu0
        %v1279 = vadd.f32 0.0, %v1278
        %1280 = vmatmul.f32.gmra.mxu0 %v1253
        %v1281 = vpop.f32.mrf.mxu0
        %v1282 = vadd.f32 0.0, %v1281
        %1283 = vmatmul.f32.gmra.mxu0 %v1256
        %v1284 = vpop.f32.mrf.mxu0
        %v1285 = vadd.f32 0.0, %v1284
        %1286 = vdwg.mxu0
        %v1287 = vmul.f32 %v1276, %v1133
        %v1288 = vmul.f32 %v1279, %v1134
        %v1289 = vmul.f32 %v1282, %v1135
        %v1290 = vmul.f32 %v1285, %v1136
        %v1292 = vsel %vm1165, %v1287, 0
        %v1295 = vsel %vm1165, %v1288, 0
        %v1298 = vsel %vm1165, %v1289, 0
        %v1301 = vsel %vm1165, %v1290, 0
        %1303 = vmatpush.msra.mxu0 0.0
        %1304 = vmatpush.msra.mxu0 0.0
        %1305 = vmatpush.msra.mxu0 0.0
        %1306 = vmatpush.msra.mxu0 0.0
        %1307 = vmatpush.msra.mxu0 0.0
        %1308 = vmatpush.msra.mxu0 0.0
        %1309 = vmatpush.msra.mxu0 0.0
        %1310 = vmatpush.msra.mxu0 0.0
        %1311 = vmatpush.msra.mxu0 0.0
        %1312 = vmatpush.msra.mxu0 0.0
        %1313 = vmatpush.msra.mxu0 0.0
        %1314 = vmatpush.msra.mxu0 0.0
        %1315 = vmatpush.msra.mxu0 %v1156
        %1316 = vmatpush.msra.mxu0 %v1155
        %1317 = vmatpush.msra.mxu0 %v1154
        %1318 = vmatpush.msra.mxu0 %v1153
        %1319 = vmatmul.f32.gmra.mxu0 %v1292
        %v1320 = vpop.f32.mrf.mxu0
        %v1321 = vadd.f32 0.0, %v1320
        %1322 = vmatmul.f32.gmra.mxu0 %v1295
        %v1323 = vpop.f32.mrf.mxu0
        %v1324 = vadd.f32 0.0, %v1323
        %1325 = vmatmul.f32.gmra.mxu0 %v1298
        %v1326 = vpop.f32.mrf.mxu0
        %v1327 = vadd.f32 0.0, %v1326
        %1328 = vmatmul.f32.gmra.mxu0 %v1301
        %v1329 = vpop.f32.mrf.mxu0
        %v1330 = vadd.f32 0.0, %v1329
        %1331 = vdwg.mxu0
        %1332 = vmatpush.msra.mxu0 0.0
        %1333 = vmatpush.msra.mxu0 0.0
        %1334 = vmatpush.msra.mxu0 0.0
        %1335 = vmatpush.msra.mxu0 0.0
        %1336 = vmatpush.msra.mxu0 0.0
        %1337 = vmatpush.msra.mxu0 0.0
        %1338 = vmatpush.msra.mxu0 0.0
        %1339 = vmatpush.msra.mxu0 0.0
        %1340 = vmatpush.msra.mxu0 0.0
        %1341 = vmatpush.msra.mxu0 0.0
        %1342 = vmatpush.msra.mxu0 0.0
        %1343 = vmatpush.msra.mxu0 0.0
        %1344 = vmatpush.msra.mxu0 0.0
        %1345 = vmatpush.msra.mxu0 0.0
        %1346 = vmatpush.msra.mxu0 0.0
        %1347 = vmatpush.msra.mxu0 %v1215
        %1348 = vmatmul.f32.gmra.mxu0 %v1247
        %v1349 = vpop.f32.mrf.mxu0
        %v1350 = vadd.f32 0.0, %v1349
        %1351 = vmatmul.f32.gmra.mxu0 %v1250
        %v1352 = vpop.f32.mrf.mxu0
        %v1353 = vadd.f32 0.0, %v1352
        %1354 = vmatmul.f32.gmra.mxu0 %v1253
        %v1355 = vpop.f32.mrf.mxu0
        %v1356 = vadd.f32 0.0, %v1355
        %1357 = vmatmul.f32.gmra.mxu0 %v1256
        %v1358 = vpop.f32.mrf.mxu0
        %v1359 = vadd.f32 0.0, %v1358
        %1360 = vdwg.mxu0
        %v1361 = vmul.f32 %v1350, %v1133
        %v1362 = vmul.f32 %v1353, %v1134
        %v1363 = vmul.f32 %v1356, %v1135
        %v1364 = vmul.f32 %v1359, %v1136
        %v1366 = vsel %vm1165, %v1361, 0
        %v1369 = vsel %vm1165, %v1362, 0
        %v1372 = vsel %vm1165, %v1363, 0
        %v1375 = vsel %vm1165, %v1364, 0
        %1377 = vmatpush.msra.mxu0 0.0
        %1378 = vmatpush.msra.mxu0 0.0
        %1379 = vmatpush.msra.mxu0 0.0
        %1380 = vmatpush.msra.mxu0 0.0
        %1381 = vmatpush.msra.mxu0 0.0
        %1382 = vmatpush.msra.mxu0 0.0
        %1383 = vmatpush.msra.mxu0 0.0
        %1384 = vmatpush.msra.mxu0 0.0
        %1385 = vmatpush.msra.mxu0 0.0
        %1386 = vmatpush.msra.mxu0 0.0
        %1387 = vmatpush.msra.mxu0 0.0
        %1388 = vmatpush.msra.mxu0 0.0
        %1389 = vmatpush.msra.mxu0 %v1156
        %1390 = vmatpush.msra.mxu0 %v1155
        %1391 = vmatpush.msra.mxu0 %v1154
        %1392 = vmatpush.msra.mxu0 %v1153
        %1393 = vmatmul.f32.gmra.mxu0 %v1366
        %v1394 = vpop.f32.mrf.mxu0
        %v1395 = vadd.f32 0.0, %v1394
        %1396 = vmatmul.f32.gmra.mxu0 %v1369
        %v1397 = vpop.f32.mrf.mxu0
        %v1398 = vadd.f32 0.0, %v1397
        %1399 = vmatmul.f32.gmra.mxu0 %v1372
        %v1400 = vpop.f32.mrf.mxu0
        %v1401 = vadd.f32 0.0, %v1400
        %1402 = vmatmul.f32.gmra.mxu0 %v1375
        %v1403 = vpop.f32.mrf.mxu0
        %v1404 = vadd.f32 0.0, %v1403
        %1405 = vdwg.mxu0
        %1406 = vmatpush.msra.mxu0 0.0
        %1407 = vmatpush.msra.mxu0 0.0
        %1408 = vmatpush.msra.mxu0 0.0
        %1409 = vmatpush.msra.mxu0 0.0
        %1410 = vmatpush.msra.mxu0 0.0
        %1411 = vmatpush.msra.mxu0 0.0
        %1412 = vmatpush.msra.mxu0 0.0
        %1413 = vmatpush.msra.mxu0 0.0
        %1414 = vmatpush.msra.mxu0 0.0
        %1415 = vmatpush.msra.mxu0 0.0
        %1416 = vmatpush.msra.mxu0 0.0
        %1417 = vmatpush.msra.mxu0 0.0
        %1418 = vmatpush.msra.mxu0 0.0
        %1419 = vmatpush.msra.mxu0 0.0
        %1420 = vmatpush.msra.mxu0 0.0
        %1421 = vmatpush.msra.mxu0 %v1243
        %1422 = vmatmul.f32.gmra.mxu0 %v1247
        %v1423 = vpop.f32.mrf.mxu0
        %v1424 = vadd.f32 0.0, %v1423
        %1425 = vmatmul.f32.gmra.mxu0 %v1250
        %v1426 = vpop.f32.mrf.mxu0
        %v1427 = vadd.f32 0.0, %v1426
        %1428 = vmatmul.f32.gmra.mxu0 %v1253
        %v1429 = vpop.f32.mrf.mxu0
        %v1430 = vadd.f32 0.0, %v1429
        %1431 = vmatmul.f32.gmra.mxu0 %v1256
        %v1432 = vpop.f32.mrf.mxu0
        %v1433 = vadd.f32 0.0, %v1432
        %1434 = vdwg.mxu0
        %v1435 = vmul.f32 %v1424, %v1133
        %v1436 = vmul.f32 %v1427, %v1134
        %v1437 = vmul.f32 %v1430, %v1135
        %v1438 = vmul.f32 %v1433, %v1136
        %v1440 = vsel %vm1165, %v1435, 0
        %v1443 = vsel %vm1165, %v1436, 0
        %v1446 = vsel %vm1165, %v1437, 0
        %v1449 = vsel %vm1165, %v1438, 0
        %1451 = vmatpush.msra.mxu0 0.0
        %1452 = vmatpush.msra.mxu0 0.0
        %1453 = vmatpush.msra.mxu0 0.0
        %1454 = vmatpush.msra.mxu0 0.0
        %1455 = vmatpush.msra.mxu0 0.0
        %1456 = vmatpush.msra.mxu0 0.0
        %1457 = vmatpush.msra.mxu0 0.0
        %1458 = vmatpush.msra.mxu0 0.0
        %1459 = vmatpush.msra.mxu0 0.0
        %1460 = vmatpush.msra.mxu0 0.0
        %1461 = vmatpush.msra.mxu0 0.0
        %1462 = vmatpush.msra.mxu0 0.0
        %1463 = vmatpush.msra.mxu0 %v1156
        %1464 = vmatpush.msra.mxu0 %v1155
        %1465 = vmatpush.msra.mxu0 %v1154
        %1466 = vmatpush.msra.mxu0 %v1153
        %1467 = vmatmul.f32.gmra.mxu0 %v1440
        %v1468 = vpop.f32.mrf.mxu0
        %v1469 = vadd.f32 0.0, %v1468
        %1470 = vmatmul.f32.gmra.mxu0 %v1443
        %v1471 = vpop.f32.mrf.mxu0
        %v1472 = vadd.f32 0.0, %v1471
        %1473 = vmatmul.f32.gmra.mxu0 %v1446
        %v1474 = vpop.f32.mrf.mxu0
        %v1475 = vadd.f32 0.0, %v1474
        %1476 = vmatmul.f32.gmra.mxu0 %v1449
        %v1477 = vpop.f32.mrf.mxu0
        %v1478 = vadd.f32 0.0, %v1477
        %1479 = vdwg.mxu0
        %v1480 = vld [vmem:[%s1120] sm:$0xff]
        %v1481 = vld [vmem:[%s1120 + $0x8] sm:$0xff]
        %v1482 = vld [vmem:[%s1120 + $0x10] sm:$0xff]
        %v1483 = vld [vmem:[%s1120 + $0x18] sm:$0xff]
        %v1485 = vsel %vm1245, %v1321, 0
        %v1488 = vsel %vm1245, %v1324, 0
        %v1491 = vsel %vm1245, %v1327, 0
        %v1494 = vsel %vm1245, %v1330, 0
        %v1497 = vsel %vm1245, %v1395, 0
        %v1500 = vsel %vm1245, %v1398, 0
        %v1503 = vsel %vm1245, %v1401, 0
        %v1506 = vsel %vm1245, %v1404, 0
        %1508 = vmatpush.xpose.msra.mxu0 0.0
        %1509 = vmatpush.xpose.msra.mxu0 0.0
        %1510 = vmatpush.xpose.msra.mxu0 0.0
        %1511 = vmatpush.xpose.msra.mxu0 0.0
        %1512 = vmatpush.xpose.msra.mxu0 0.0
        %1513 = vmatpush.xpose.msra.mxu0 0.0
        %1514 = vmatpush.xpose.msra.mxu0 0.0
        %1515 = vmatpush.xpose.msra.mxu0 0.0
        %1516 = vmatpush.xpose.msra.mxu0 0.0
        %1517 = vmatpush.xpose.msra.mxu0 0.0
        %1518 = vmatpush.xpose.msra.mxu0 0.0
        %1519 = vmatpush.xpose.msra.mxu0 0.0
        %1520 = vmatpush.xpose.msra.mxu0 %v1506
        %1521 = vmatpush.xpose.msra.mxu0 %v1503
        %1522 = vmatpush.xpose.msra.mxu0 %v1500
        %1523 = vmatpush.xpose.msra.mxu0 %v1497
        %1524 = vmatmul.f32.gmra.mxu0 %v1485
        %v1525 = vpop.f32.mrf.mxu0
        %v1526 = vadd.f32 0.0, %v1525
        %1527 = vmatmul.f32.gmra.mxu0 %v1488
        %v1528 = vpop.f32.mrf.mxu0
        %v1529 = vadd.f32 0.0, %v1528
        %1530 = vmatmul.f32.gmra.mxu0 %v1491
        %v1531 = vpop.f32.mrf.mxu0
        %v1532 = vadd.f32 0.0, %v1531
        %1533 = vmatmul.f32.gmra.mxu0 %v1494
        %v1534 = vpop.f32.mrf.mxu0
        %v1535 = vadd.f32 0.0, %v1534
        %1536 = vdwg.mxu0
        %v1537 = vmul.f32 %v1526, 0.35355338
        %v1538 = vmul.f32 %v1529, 0.35355338
        %v1539 = vmul.f32 %v1532, 0.35355338
        %v1540 = vmul.f32 %v1535, 0.35355338
        %v1541 = vadd.f32 %v1537, %v1480
        %v1542 = vadd.f32 %v1538, %v1481
        %v1543 = vadd.f32 %v1539, %v1482
        %v1544 = vadd.f32 %v1540, %v1483
        %v1545 = vsel %vm1165, %v1541, -inf
        %1546 = vmax.xlane.f32.xlu0 %v1545
        %v1547 = vpop.xlane.xlu0 %1546
        %v1548 = vsel %vm1165, %v1542, -inf
        %1549 = vmax.xlane.f32.xlu0 %v1548
        %v1550 = vpop.xlane.xlu0 %1549
        %v1551 = vsel %vm1165, %v1543, -inf
        %1552 = vmax.xlane.f32.xlu0 %v1551
        %v1553 = vpop.xlane.xlu0 %1552
        %v1554 = vsel %vm1165, %v1544, -inf
        %1555 = vmax.xlane.f32.xlu0 %v1554
        %v1556 = vpop.xlane.xlu0 %1555
        %v1557 = vsub.f32 %v1541, %v1547
        %v1558 = vsub.f32 %v1542, %v1550
        %v1559 = vsub.f32 %v1543, %v1553
        %v1560 = vsub.f32 %v1544, %v1556
        %v1561 = vmul.f32 %v1557, 1.442695
        %v1562 = vpow.pop %v1561
        %v1563 = vmul.f32 %v1558, 1.442695
        %v1564 = vpow.pop %v1563
        %v1565 = vmul.f32 %v1559, 1.442695
        %v1566 = vpow.pop %v1565
        %v1567 = vmul.f32 %v1560, 1.442695
        %v1568 = vpow.pop %v1567
        %v1569 = vsel %vm1165, %v1562, 0.0
        %1570 = vadd.xlane.f32.xlu0 %v1569
        %v1571 = vpop.xlane.xlu0 %1570
        %v1572 = vsel %vm1165, %v1564, 0.0
        %1573 = vadd.xlane.f32.xlu0 %v1572
        %v1574 = vpop.xlane.xlu0 %1573
        %v1575 = vsel %vm1165, %v1566, 0.0
        %1576 = vadd.xlane.f32.xlu0 %v1575
        %v1577 = vpop.xlane.xlu0 %1576
        %v1578 = vsel %vm1165, %v1568, 0.0
        %1579 = vadd.xlane.f32.xlu0 %v1578
        %v1580 = vpop.xlane.xlu0 %1579
        %v1581 = vrcp.pop %v1571
        %v1582 = vrcp.pop %v1574
        %v1583 = vrcp.pop %v1577
        %v1584 = vrcp.pop %v1580
        %v1585 = vmul.f32 %v1562, %v1581
        %v1586 = vmul.f32 %v1564, %v1582
        %v1587 = vmul.f32 %v1566, %v1583
        %v1588 = vmul.f32 %v1568, %v1584
        %v1590 = vsel %vm1165, %v1585, 0
        %v1593 = vsel %vm1165, %v1586, 0
        %v1596 = vsel %vm1165, %v1587, 0
        %v1599 = vsel %vm1165, %v1588, 0
        %1601 = vmatpush.msra.mxu0 0.0
        %1602 = vmatpush.msra.mxu0 0.0
        %1603 = vmatpush.msra.mxu0 0.0
        %1604 = vmatpush.msra.mxu0 0.0
        %1605 = vmatpush.msra.mxu0 0.0
        %1606 = vmatpush.msra.mxu0 0.0
        %1607 = vmatpush.msra.mxu0 0.0
        %1608 = vmatpush.msra.mxu0 0.0
        %1609 = vmatpush.msra.mxu0 0.0
        %1610 = vmatpush.msra.mxu0 0.0
        %1611 = vmatpush.msra.mxu0 0.0
        %1612 = vmatpush.msra.mxu0 0.0
        %1613 = vmatpush.msra.mxu0 %v1478
        %1614 = vmatpush.msra.mxu0 %v1475
        %1615 = vmatpush.msra.mxu0 %v1472
        %1616 = vmatpush.msra.mxu0 %v1469
        %1617 = vmatmul.f32.gmra.mxu0 %v1590
        %v1618 = vpop.f32.mrf.mxu0
        %v1619 = vadd.f32 0.0, %v1618
        %1620 = vmatmul.f32.gmra.mxu0 %v1593
        %v1621 = vpop.f32.mrf.mxu0
        %v1622 = vadd.f32 0.0, %v1621
        %1623 = vmatmul.f32.gmra.mxu0 %v1596
        %v1624 = vpop.f32.mrf.mxu0
        %v1625 = vadd.f32 0.0, %v1624
        %1626 = vmatmul.f32.gmra.mxu0 %v1599
        %v1627 = vpop.f32.mrf.mxu0
        %v1628 = vadd.f32 0.0, %v1627
        %1629 = vdwg.mxu0
        %v1630 = vld [vmem:[%s31] sm:$0xff]
        %v1631 = vld [vmem:[%s31 + $0x8] sm:$0xff]
        %v1633 = vsel %vm1245, %v1622, 0
        %1635 = vmatpush.msra.mxu0 0.0
        %1636 = vmatpush.msra.mxu0 0.0
        %1637 = vmatpush.msra.mxu0 0.0
        %1638 = vmatpush.msra.mxu0 0.0
        %1639 = vmatpush.msra.mxu0 0.0
        %1640 = vmatpush.msra.mxu0 0.0
        %1641 = vmatpush.msra.mxu0 0.0
        %1642 = vmatpush.msra.mxu0 0.0
        %1643 = vmatpush.msra.mxu0 0.0
        %1644 = vmatpush.msra.mxu0 0.0
        %1645 = vmatpush.msra.mxu0 0.0
        %1646 = vmatpush.msra.mxu0 0.0
        %1647 = vmatpush.msra.mxu0 0.0
        %1648 = vmatpush.msra.mxu0 0.0
        %1649 = vmatpush.msra.mxu0 0.0
        %1650 = vmatpush.msra.mxu0 %v1631
        %1651 = vmatmul.f32.gmra.mxu0 %v1633
        %v1652 = vpop.f32.mrf.mxu0
        %v1653 = vadd.f32 0.0, %v1652
        %1654 = vdwg.mxu0
        %v1656 = vsel %vm1245, %v1619, 0
        %1658 = vmatpush.msra.mxu0 0.0
        %1659 = vmatpush.msra.mxu0 0.0
        %1660 = vmatpush.msra.mxu0 0.0
        %1661 = vmatpush.msra.mxu0 0.0
        %1662 = vmatpush.msra.mxu0 0.0
        %1663 = vmatpush.msra.mxu0 0.0
        %1664 = vmatpush.msra.mxu0 0.0
        %1665 = vmatpush.msra.mxu0 0.0
        %1666 = vmatpush.msra.mxu0 0.0
        %1667 = vmatpush.msra.mxu0 0.0
        %1668 = vmatpush.msra.mxu0 0.0
        %1669 = vmatpush.msra.mxu0 0.0
        %1670 = vmatpush.msra.mxu0 0.0
        %1671 = vmatpush.msra.mxu0 0.0
        %1672 = vmatpush.msra.mxu0 0.0
        %1673 = vmatpush.msra.mxu0 %v1630
        %1674 = vmatmul.f32.gmra.mxu0 %v1656
        %v1675 = vpop.f32.mrf.mxu0
        %v1676 = vadd.f32 %v1653, %v1675
        %1677 = vdwg.mxu0
        %v1678 = vld [vmem:[%s31 + $0x10] sm:$0xff]
        %v1680 = vsel %vm1245, %v1625, 0
        %1682 = vmatpush.msra.mxu0 0.0
        %1683 = vmatpush.msra.mxu0 0.0
        %1684 = vmatpush.msra.mxu0 0.0
        %1685 = vmatpush.msra.mxu0 0.0
        %1686 = vmatpush.msra.mxu0 0.0
        %1687 = vmatpush.msra.mxu0 0.0
        %1688 = vmatpush.msra.mxu0 0.0
        %1689 = vmatpush.msra.mxu0 0.0
        %1690 = vmatpush.msra.mxu0 0.0
        %1691 = vmatpush.msra.mxu0 0.0
        %1692 = vmatpush.msra.mxu0 0.0
        %1693 = vmatpush.msra.mxu0 0.0
        %1694 = vmatpush.msra.mxu0 0.0
        %1695 = vmatpush.msra.mxu0 0.0
        %1696 = vmatpush.msra.mxu0 0.0
        %1697 = vmatpush.msra.mxu0 %v1678
        %1698 = vmatmul.f32.gmra.mxu0 %v1680
        %v1699 = vpop.f32.mrf.mxu0
        %v1700 = vadd.f32 0.0, %v1699
        %1701 = vdwg.mxu0
        %v1702 = vadd.f32 %v1676, %v1700
        %v1703 = vld [vmem:[%s31 + $0x18] sm:$0xff]
        %v1705 = vsel %vm1245, %v1628, 0
        %1707 = vmatpush.msra.mxu0 0.0
        %1708 = vmatpush.msra.mxu0 0.0
        %1709 = vmatpush.msra.mxu0 0.0
        %1710 = vmatpush.msra.mxu0 0.0
        %1711 = vmatpush.msra.mxu0 0.0
        %1712 = vmatpush.msra.mxu0 0.0
        %1713 = vmatpush.msra.mxu0 0.0
        %1714 = vmatpush.msra.mxu0 0.0
        %1715 = vmatpush.msra.mxu0 0.0
        %1716 = vmatpush.msra.mxu0 0.0
        %1717 = vmatpush.msra.mxu0 0.0
        %1718 = vmatpush.msra.mxu0 0.0
        %1719 = vmatpush.msra.mxu0 0.0
        %1720 = vmatpush.msra.mxu0 0.0
        %1721 = vmatpush.msra.mxu0 0.0
        %1722 = vmatpush.msra.mxu0 %v1703
        %1723 = vmatmul.f32.gmra.mxu0 %v1705
        %v1724 = vpop.f32.mrf.mxu0
        %v1725 = vadd.f32 0.0, %v1724
        %1726 = vdwg.mxu0
        %v1727 = vadd.f32 %v1702, %v1725
        %v1728 = vld [vmem:[%s33] sm:$0x1]
        %v1730 = vperm.slane %v1728, 0
        %v1732 = vadd.f32 %v1727, %v1730
        %v1733 = vadd.f32 %v1732, %v1126
        %v1734 = vld [vmem:[%s35] sm:$0x1]
        %v1735 = vld [vmem:[%s37] sm:$0x1]
        %v1736 = vsel %vm1165, %v1733, 0.0
        %1737 = vadd.xlane.f32.xlu0 %v1736
        %v1738 = vpop.xlane.xlu0 %1737
        %v1739 = vrcp.pop 32.0
        %v1740 = vmul.f32 32.0, %v1739
        %v1741 = vsub.f32 1.0, %v1740
        %v1742 = vmul.f32 %v1739, %v1741
        %v1743 = vadd.f32 %v1739, %v1742
        %vm1744 = vweird.f32 %v1739
        %v1745 = vsel %vm1744, %v1739, %v1743
        %v1746 = vmul.f32 %v1738, %v1745
        %v1747 = vsub.f32 %v1733, %v1746
        %v1748 = vmul.f32 %v1747, %v1747
        %v1749 = vsel %vm1165, %v1748, 0.0
        %1750 = vadd.xlane.f32.xlu0 %v1749
        %v1751 = vpop.xlane.xlu0 %1750
        %v1752 = vmul.f32 %v1751, %v1745
        %v1753 = vadd.f32 %v1752, 1e-05
        %v1754 = vrsqrt.pop %v1753
        %v1755 = vmul.f32 %v1754, %v1753
        %v1756 = vmul.f32 %v1755, %v1754
        %v1757 = vmul.f32 0.5, %v1756
        %v1758 = vsub.f32 1.5, %v1757
        %v1759 = vmul.f32 %v1754, %v1758
        %vm1760 = vweird.f32 %v1753
        %vm1761 = vweird.f32 %v1754
        %vm1762 = vmor %vm1760, %vm1761
        %v1763 = vsel %vm1762, %v1754, %v1759
        %v1764 = vmul.f32 %v1747, %v1763
        %v1766 = vperm.slane %v1734, 0
        %v1768 = vmul.f32 %v1764, %v1766
        %v1770 = vperm.slane %v1735, 0
        %v1772 = vadd.f32 %v1768, %v1770
        %v1773 = vld [vmem:[%s39] sm:$0xff]
        %v1774 = vld [vmem:[%s39 + $0x8] sm:$0xff]
        %v1775 = vld [vmem:[%s39 + $0x10] sm:$0xff]
        %v1776 = vld [vmem:[%s39 + $0x18] sm:$0xff]
        %v1777 = vld [vmem:[%s41] sm:$0x1]
        %v1779 = vperm.slane %v1777, 0
        %v1782 = vsel %vm1165, %v1772, 0
        %1784 = vmatpush.msra.mxu0 0.0
        %1785 = vmatpush.msra.mxu0 0.0
        %1786 = vmatpush.msra.mxu0 0.0
        %1787 = vmatpush.msra.mxu0 0.0
        %1788 = vmatpush.msra.mxu0 0.0
        %1789 = vmatpush.msra.mxu0 0.0
        %1790 = vmatpush.msra.mxu0 0.0
        %1791 = vmatpush.msra.mxu0 0.0
        %1792 = vmatpush.msra.mxu0 0.0
        %1793 = vmatpush.msra.mxu0 0.0
        %1794 = vmatpush.msra.mxu0 0.0
        %1795 = vmatpush.msra.mxu0 0.0
        %1796 = vmatpush.msra.mxu0 %v1776
        %1797 = vmatpush.msra.mxu0 %v1775
        %1798 = vmatpush.msra.mxu0 %v1774
        %1799 = vmatpush.msra.mxu0 %v1773
        %1800 = vmatmul.f32.gmra.mxu0 %v1782
        %v1801 = vpop.f32.mrf.mxu0
        %v1802 = vadd.f32 %v1779, %v1801
        %1803 = vdwg.mxu0
        %v1804 = vld [vmem:[%s43] sm:$0xff]
        %v1805 = vld [vmem:[%s43 + $0x8] sm:$0xff]
        %v1806 = vld [vmem:[%s43 + $0x10] sm:$0xff]
        %v1807 = vld [vmem:[%s43 + $0x18] sm:$0xff]
        %v1808 = vld [vmem:[%s45] sm:$0x1]
        %v1810 = vperm.slane %v1808, 0
        %v1813 = vsel %vm1165, %v1127, 0
        %v1816 = vsel %vm1165, %v1128, 0
        %1818 = vmatpush.msra.mxu0 0.0
        %1819 = vmatpush.msra.mxu0 0.0
        %1820 = vmatpush.msra.mxu0 0.0
        %1821 = vmatpush.msra.mxu0 0.0
        %1822 = vmatpush.msra.mxu0 0.0
        %1823 = vmatpush.msra.mxu0 0.0
        %1824 = vmatpush.msra.mxu0 0.0
        %1825 = vmatpush.msra.mxu0 0.0
        %1826 = vmatpush.msra.mxu0 0.0
        %1827 = vmatpush.msra.mxu0 0.0
        %1828 = vmatpush.msra.mxu0 0.0
        %1829 = vmatpush.msra.mxu0 0.0
        %1830 = vmatpush.msra.mxu0 %v1807
        %1831 = vmatpush.msra.mxu0 %v1806
        %1832 = vmatpush.msra.mxu0 %v1805
        %1833 = vmatpush.msra.mxu0 %v1804
        %1834 = vmatmul.f32.gmra.mxu0 %v1813
        %v1835 = vpop.f32.mrf.mxu0
        %v1836 = vadd.f32 %v1810, %v1835
        %1837 = vmatmul.f32.gmra.mxu0 %v1816
        %v1838 = vpop.f32.mrf.mxu0
        %v1839 = vadd.f32 %v1810, %v1838
        %1840 = vdwg.mxu0
        %v1841 = vld [vmem:[%s47] sm:$0xff]
        %v1842 = vld [vmem:[%s47 + $0x8] sm:$0xff]
        %v1843 = vld [vmem:[%s47 + $0x10] sm:$0xff]
        %v1844 = vld [vmem:[%s47 + $0x18] sm:$0xff]
        %v1845 = vld [vmem:[%s49] sm:$0x1]
        %v1847 = vperm.slane %v1845, 0
        %1849 = vmatpush.msra.mxu0 0.0
        %1850 = vmatpush.msra.mxu0 0.0
        %1851 = vmatpush.msra.mxu0 0.0
        %1852 = vmatpush.msra.mxu0 0.0
        %1853 = vmatpush.msra.mxu0 0.0
        %1854 = vmatpush.msra.mxu0 0.0
        %1855 = vmatpush.msra.mxu0 0.0
        %1856 = vmatpush.msra.mxu0 0.0
        %1857 = vmatpush.msra.mxu0 0.0
        %1858 = vmatpush.msra.mxu0 0.0
        %1859 = vmatpush.msra.mxu0 0.0
        %1860 = vmatpush.msra.mxu0 0.0
        %1861 = vmatpush.msra.mxu0 %v1844
        %1862 = vmatpush.msra.mxu0 %v1843
        %1863 = vmatpush.msra.mxu0 %v1842
        %1864 = vmatpush.msra.mxu0 %v1841
        %1865 = vmatmul.f32.gmra.mxu0 %v1813
        %v1866 = vpop.f32.mrf.mxu0
        %v1867 = vadd.f32 %v1847, %v1866
        %1868 = vmatmul.f32.gmra.mxu0 %v1816
        %v1869 = vpop.f32.mrf.mxu0
        %v1870 = vadd.f32 %v1847, %v1869
        %1871 = vdwg.mxu0
        %1872 = vmatpush.msra.mxu0 0.0
        %1873 = vmatpush.msra.mxu0 0.0
        %1874 = vmatpush.msra.mxu0 0.0
        %1875 = vmatpush.msra.mxu0 0.0
        %1876 = vmatpush.msra.mxu0 0.0
        %1877 = vmatpush.msra.mxu0 0.0
        %1878 = vmatpush.msra.mxu0 0.0
        %1879 = vmatpush.msra.mxu0 0.0
        %1880 = vmatpush.msra.mxu0 0.0
        %1881 = vmatpush.msra.mxu0 0.0
        %1882 = vmatpush.msra.mxu0 0.0
        %1883 = vmatpush.msra.mxu0 0.0
        %1884 = vmatpush.msra.mxu0 0.0
        %1885 = vmatpush.msra.mxu0 0.0
        %1886 = vmatpush.msra.mxu0 0.0
        %1887 = vmatpush.msra.mxu0 %v1802
        %1888 = vmatmul.f32.gmra.mxu0 %v1247
        %v1889 = vpop.f32.mrf.mxu0
        %v1890 = vadd.f32 0.0, %v1889
        %1891 = vmatmul.f32.gmra.mxu0 %v1250
        %v1892 = vpop.f32.mrf.mxu0
        %v1893 = vadd.f32 0.0, %v1892
        %1894 = vmatmul.f32.gmra.mxu0 %v1253
        %v1895 = vpop.f32.mrf.mxu0
        %v1896 = vadd.f32 0.0, %v1895
        %1897 = vmatmul.f32.gmra.mxu0 %v1256
        %v1898 = vpop.f32.mrf.mxu0
        %v1899 = vadd.f32 0.0, %v1898
        %1900 = vdwg.mxu0
        %v1901 = vmul.f32 %v1890, %v1133
        %v1902 = vmul.f32 %v1893, %v1134
        %v1903 = vmul.f32 %v1896, %v1135
        %v1904 = vmul.f32 %v1899, %v1136
        %v1906 = vsel %vm1165, %v1901, 0
        %v1909 = vsel %vm1165, %v1902, 0
        %v1912 = vsel %vm1165, %v1903, 0
        %v1915 = vsel %vm1165, %v1904, 0
        %1917 = vmatpush.msra.mxu0 0.0
        %1918 = vmatpush.msra.mxu0 0.0
        %1919 = vmatpush.msra.mxu0 0.0
        %1920 = vmatpush.msra.mxu0 0.0
        %1921 = vmatpush.msra.mxu0 0.0
        %1922 = vmatpush.msra.mxu0 0.0
        %1923 = vmatpush.msra.mxu0 0.0
        %1924 = vmatpush.msra.mxu0 0.0
        %1925 = vmatpush.msra.mxu0 0.0
        %1926 = vmatpush.msra.mxu0 0.0
        %1927 = vmatpush.msra.mxu0 0.0
        %1928 = vmatpush.msra.mxu0 0.0
        %1929 = vmatpush.msra.mxu0 %v1156
        %1930 = vmatpush.msra.mxu0 %v1155
        %1931 = vmatpush.msra.mxu0 %v1154
        %1932 = vmatpush.msra.mxu0 %v1153
        %1933 = vmatmul.f32.gmra.mxu0 %v1906
        %v1934 = vpop.f32.mrf.mxu0
        %v1935 = vadd.f32 0.0, %v1934
        %1936 = vmatmul.f32.gmra.mxu0 %v1909
        %v1937 = vpop.f32.mrf.mxu0
        %v1938 = vadd.f32 0.0, %v1937
        %1939 = vmatmul.f32.gmra.mxu0 %v1912
        %v1940 = vpop.f32.mrf.mxu0
        %v1941 = vadd.f32 0.0, %v1940
        %1942 = vmatmul.f32.gmra.mxu0 %v1915
        %v1943 = vpop.f32.mrf.mxu0
        %v1944 = vadd.f32 0.0, %v1943
        %1945 = vdwg.mxu0
        %vm1946 = vcmask 130048
        %v1948 = vsel %vm1946, %v1137, 0
        %v1951 = vsel %vm1946, %v1138, 0
        %v1954 = vsel %vm1946, %v1139, 0
        %v1957 = vsel %vm1946, %v1140, 0
        %v1960 = vsel %vm1946, %v1141, 0
        %v1963 = vsel %vm1946, %v1142, 0
        %v1966 = vsel %vm1946, %v1143, 0
        %v1969 = vsel %vm1946, %v1144, 0
        %1971 = vmatpush.msra.mxu0 0.0
        %1972 = vmatpush.msra.mxu0 0.0
        %1973 = vmatpush.msra.mxu0 0.0
        %1974 = vmatpush.msra.mxu0 0.0
        %1975 = vmatpush.msra.mxu0 0.0
        %1976 = vmatpush.msra.mxu0 0.0
        %1977 = vmatpush.msra.mxu0 0.0
        %1978 = vmatpush.msra.mxu0 0.0
        %1979 = vmatpush.msra.mxu0 0.0
        %1980 = vmatpush.msra.mxu0 0.0
        %1981 = vmatpush.msra.mxu0 0.0
        %1982 = vmatpush.msra.mxu0 0.0
        %1983 = vmatpush.msra.mxu0 0.0
        %1984 = vmatpush.msra.mxu0 0.0
        %1985 = vmatpush.msra.mxu0 %v1839
        %1986 = vmatpush.msra.mxu0 %v1836
        %1987 = vmatmul.f32.gmra.mxu0 %v1948
        %v1988 = vpop.f32.mrf.mxu0
        %v1989 = vadd.f32 0.0, %v1988
        %1990 = vmatmul.f32.gmra.mxu0 %v1951
        %v1991 = vpop.f32.mrf.mxu0
        %v1992 = vadd.f32 0.0, %v1991
        %1993 = vmatmul.f32.gmra.mxu0 %v1954
        %v1994 = vpop.f32.mrf.mxu0
        %v1995 = vadd.f32 0.0, %v1994
        %1996 = vmatmul.f32.gmra.mxu0 %v1957
        %v1997 = vpop.f32.mrf.mxu0
        %v1998 = vadd.f32 0.0, %v1997
        %1999 = vmatmul.f32.gmra.mxu0 %v1960
        %v2000 = vpop.f32.mrf.mxu0
        %v2001 = vadd.f32 0.0, %v2000
        %2002 = vmatmul.f32.gmra.mxu0 %v1963
        %v2003 = vpop.f32.mrf.mxu0
        %v2004 = vadd.f32 0.0, %v2003
        %2005 = vmatmul.f32.gmra.mxu0 %v1966
        %v2006 = vpop.f32.mrf.mxu0
        %v2007 = vadd.f32 0.0, %v2006
        %2008 = vmatmul.f32.gmra.mxu0 %v1969
        %v2009 = vpop.f32.mrf.mxu0
        %v2010 = vadd.f32 0.0, %v2009
        %2011 = vdwg.mxu0
        %v2012 = vmul.f32 %v1989, %v1145
        %v2013 = vmul.f32 %v1992, %v1146
        %v2014 = vmul.f32 %v1995, %v1147
        %v2015 = vmul.f32 %v1998, %v1148
        %v2016 = vmul.f32 %v2001, %v1149
        %v2017 = vmul.f32 %v2004, %v1150
        %v2018 = vmul.f32 %v2007, %v1151
        %v2019 = vmul.f32 %v2010, %v1152
        %v2021 = vsel %vm1165, %v2012, 0
        %v2024 = vsel %vm1165, %v2013, 0
        %v2027 = vsel %vm1165, %v2014, 0
        %v2030 = vsel %vm1165, %v2015, 0
        %v2033 = vsel %vm1165, %v2016, 0
        %v2036 = vsel %vm1165, %v2017, 0
        %v2039 = vsel %vm1165, %v2018, 0
        %v2042 = vsel %vm1165, %v2019, 0
        %2044 = vmatpush.msra.mxu0 0.0
        %2045 = vmatpush.msra.mxu0 0.0
        %2046 = vmatpush.msra.mxu0 0.0
        %2047 = vmatpush.msra.mxu0 0.0
        %2048 = vmatpush.msra.mxu0 0.0
        %2049 = vmatpush.msra.mxu0 0.0
        %2050 = vmatpush.msra.mxu0 0.0
        %2051 = vmatpush.msra.mxu0 0.0
        %2052 = vmatpush.msra.mxu0 0.0
        %2053 = vmatpush.msra.mxu0 0.0
        %2054 = vmatpush.msra.mxu0 0.0
        %2055 = vmatpush.msra.mxu0 0.0
        %2056 = vmatpush.msra.mxu0 %v1156
        %2057 = vmatpush.msra.mxu0 %v1155
        %2058 = vmatpush.msra.mxu0 %v1154
        %2059 = vmatpush.msra.mxu0 %v1153
        %2060 = vmatmul.f32.gmra.mxu0 %v2021
        %v2061 = vpop.f32.mrf.mxu0
        %v2062 = vadd.f32 0.0, %v2061
        %2063 = vmatmul.f32.gmra.mxu0 %v2024
        %v2064 = vpop.f32.mrf.mxu0
        %v2065 = vadd.f32 0.0, %v2064
        %2066 = vmatmul.f32.gmra.mxu0 %v2027
        %v2067 = vpop.f32.mrf.mxu0
        %v2068 = vadd.f32 0.0, %v2067
        %2069 = vmatmul.f32.gmra.mxu0 %v2030
        %v2070 = vpop.f32.mrf.mxu0
        %v2071 = vadd.f32 0.0, %v2070
        %2072 = vmatmul.f32.gmra.mxu0 %v2033
        %v2073 = vpop.f32.mrf.mxu0
        %v2074 = vadd.f32 0.0, %v2073
        %2075 = vmatmul.f32.gmra.mxu0 %v2036
        %v2076 = vpop.f32.mrf.mxu0
        %v2077 = vadd.f32 0.0, %v2076
        %2078 = vmatmul.f32.gmra.mxu0 %v2039
        %v2079 = vpop.f32.mrf.mxu0
        %v2080 = vadd.f32 0.0, %v2079
        %2081 = vmatmul.f32.gmra.mxu0 %v2042
        %v2082 = vpop.f32.mrf.mxu0
        %v2083 = vadd.f32 0.0, %v2082
        %2084 = vdwg.mxu0
        %2085 = vmatpush.msra.mxu0 0.0
        %2086 = vmatpush.msra.mxu0 0.0
        %2087 = vmatpush.msra.mxu0 0.0
        %2088 = vmatpush.msra.mxu0 0.0
        %2089 = vmatpush.msra.mxu0 0.0
        %2090 = vmatpush.msra.mxu0 0.0
        %2091 = vmatpush.msra.mxu0 0.0
        %2092 = vmatpush.msra.mxu0 0.0
        %2093 = vmatpush.msra.mxu0 0.0
        %2094 = vmatpush.msra.mxu0 0.0
        %2095 = vmatpush.msra.mxu0 0.0
        %2096 = vmatpush.msra.mxu0 0.0
        %2097 = vmatpush.msra.mxu0 0.0
        %2098 = vmatpush.msra.mxu0 0.0
        %2099 = vmatpush.msra.mxu0 %v1870
        %2100 = vmatpush.msra.mxu0 %v1867
        %2101 = vmatmul.f32.gmra.mxu0 %v1948
        %v2102 = vpop.f32.mrf.mxu0
        %v2103 = vadd.f32 0.0, %v2102
        %2104 = vmatmul.f32.gmra.mxu0 %v1951
        %v2105 = vpop.f32.mrf.mxu0
        %v2106 = vadd.f32 0.0, %v2105
        %2107 = vmatmul.f32.gmra.mxu0 %v1954
        %v2108 = vpop.f32.mrf.mxu0
        %v2109 = vadd.f32 0.0, %v2108
        %2110 = vmatmul.f32.gmra.mxu0 %v1957
        %v2111 = vpop.f32.mrf.mxu0
        %v2112 = vadd.f32 0.0, %v2111
        %2113 = vmatmul.f32.gmra.mxu0 %v1960
        %v2114 = vpop.f32.mrf.mxu0
        %v2115 = vadd.f32 0.0, %v2114
        %2116 = vmatmul.f32.gmra.mxu0 %v1963
        %v2117 = vpop.f32.mrf.mxu0
        %v2118 = vadd.f32 0.0, %v2117
        %2119 = vmatmul.f32.gmra.mxu0 %v1966
        %v2120 = vpop.f32.mrf.mxu0
        %v2121 = vadd.f32 0.0, %v2120
        %2122 = vmatmul.f32.gmra.mxu0 %v1969
        %v2123 = vpop.f32.mrf.mxu0
        %v2124 = vadd.f32 0.0, %v2123
        %2125 = vdwg.mxu0
        %v2126 = vmul.f32 %v2103, %v1145
        %v2127 = vmul.f32 %v2106, %v1146
        %v2128 = vmul.f32 %v2109, %v1147
        %v2129 = vmul.f32 %v2112, %v1148
        %v2130 = vmul.f32 %v2115, %v1149
        %v2131 = vmul.f32 %v2118, %v1150
        %v2132 = vmul.f32 %v2121, %v1151
        %v2133 = vmul.f32 %v2124, %v1152
        %v2135 = vsel %vm1165, %v2126, 0
        %v2138 = vsel %vm1165, %v2127, 0
        %v2141 = vsel %vm1165, %v2128, 0
        %v2144 = vsel %vm1165, %v2129, 0
        %v2147 = vsel %vm1165, %v2130, 0
        %v2150 = vsel %vm1165, %v2131, 0
        %v2153 = vsel %vm1165, %v2132, 0
        %v2156 = vsel %vm1165, %v2133, 0
        %2158 = vmatpush.msra.mxu0 0.0
        %2159 = vmatpush.msra.mxu0 0.0
        %2160 = vmatpush.msra.mxu0 0.0
        %2161 = vmatpush.msra.mxu0 0.0
        %2162 = vmatpush.msra.mxu0 0.0
        %2163 = vmatpush.msra.mxu0 0.0
        %2164 = vmatpush.msra.mxu0 0.0
        %2165 = vmatpush.msra.mxu0 0.0
        %2166 = vmatpush.msra.mxu0 0.0
        %2167 = vmatpush.msra.mxu0 0.0
        %2168 = vmatpush.msra.mxu0 0.0
        %2169 = vmatpush.msra.mxu0 0.0
        %2170 = vmatpush.msra.mxu0 %v1156
        %2171 = vmatpush.msra.mxu0 %v1155
        %2172 = vmatpush.msra.mxu0 %v1154
        %2173 = vmatpush.msra.mxu0 %v1153
        %2174 = vmatmul.f32.gmra.mxu0 %v2135
        %v2175 = vpop.f32.mrf.mxu0
        %v2176 = vadd.f32 0.0, %v2175
        %2177 = vmatmul.f32.gmra.mxu0 %v2138
        %v2178 = vpop.f32.mrf.mxu0
        %v2179 = vadd.f32 0.0, %v2178
        %2180 = vmatmul.f32.gmra.mxu0 %v2141
        %v2181 = vpop.f32.mrf.mxu0
        %v2182 = vadd.f32 0.0, %v2181
        %2183 = vmatmul.f32.gmra.mxu0 %v2144
        %v2184 = vpop.f32.mrf.mxu0
        %v2185 = vadd.f32 0.0, %v2184
        %2186 = vmatmul.f32.gmra.mxu0 %v2147
        %v2187 = vpop.f32.mrf.mxu0
        %v2188 = vadd.f32 0.0, %v2187
        %2189 = vmatmul.f32.gmra.mxu0 %v2150
        %v2190 = vpop.f32.mrf.mxu0
        %v2191 = vadd.f32 0.0, %v2190
        %2192 = vmatmul.f32.gmra.mxu0 %v2153
        %v2193 = vpop.f32.mrf.mxu0
        %v2194 = vadd.f32 0.0, %v2193
        %2195 = vmatmul.f32.gmra.mxu0 %v2156
        %v2196 = vpop.f32.mrf.mxu0
        %v2197 = vadd.f32 0.0, %v2196
        %2198 = vdwg.mxu0
        %v2199 = vld [vmem:[%s1125] sm:$0xff]
        %v2200 = vld [vmem:[%s1125 + $0x8] sm:$0xff]
        %v2201 = vld [vmem:[%s1125 + $0x10] sm:$0xff]
        %v2202 = vld [vmem:[%s1125 + $0x18] sm:$0xff]
        %v2204 = vsel %vm1245, %v1935, 0
        %v2207 = vsel %vm1245, %v1938, 0
        %v2210 = vsel %vm1245, %v1941, 0
        %v2213 = vsel %vm1245, %v1944, 0
        %v2216 = vsel %vm1245, %v2062, 0
        %v2219 = vsel %vm1245, %v2065, 0
        %v2222 = vsel %vm1245, %v2068, 0
        %v2225 = vsel %vm1245, %v2071, 0
        %v2228 = vsel %vm1245, %v2074, 0
        %v2231 = vsel %vm1245, %v2077, 0
        %v2234 = vsel %vm1245, %v2080, 0
        %v2237 = vsel %vm1245, %v2083, 0
        %2239 = vmatpush.xpose.msra.mxu0 0.0
        %2240 = vmatpush.xpose.msra.mxu0 0.0
        %2241 = vmatpush.xpose.msra.mxu0 0.0
        %2242 = vmatpush.xpose.msra.mxu0 0.0
        %2243 = vmatpush.xpose.msra.mxu0 0.0
        %2244 = vmatpush.xpose.msra.mxu0 0.0
        %2245 = vmatpush.xpose.msra.mxu0 0.0
        %2246 = vmatpush.xpose.msra.mxu0 0.0
        %2247 = vmatpush.xpose.msra.mxu0 %v2237
        %2248 = vmatpush.xpose.msra.mxu0 %v2234
        %2249 = vmatpush.xpose.msra.mxu0 %v2231
        %2250 = vmatpush.xpose.msra.mxu0 %v2228
        %2251 = vmatpush.xpose.msra.mxu0 %v2225
        %2252 = vmatpush.xpose.msra.mxu0 %v2222
        %2253 = vmatpush.xpose.msra.mxu0 %v2219
        %2254 = vmatpush.xpose.msra.mxu0 %v2216
        %2255 = vmatmul.f32.gmra.mxu0 %v2204
        %v2256 = vpop.f32.mrf.mxu0
        %v2257 = vadd.f32 0.0, %v2256
        %2258 = vmatmul.f32.gmra.mxu0 %v2207
        %v2259 = vpop.f32.mrf.mxu0
        %v2260 = vadd.f32 0.0, %v2259
        %2261 = vmatmul.f32.gmra.mxu0 %v2210
        %v2262 = vpop.f32.mrf.mxu0
        %v2263 = vadd.f32 0.0, %v2262
        %2264 = vmatmul.f32.gmra.mxu0 %v2213
        %v2265 = vpop.f32.mrf.mxu0
        %v2266 = vadd.f32 0.0, %v2265
        %2267 = vdwg.mxu0
        %v2268 = vmul.f32 %v2257, 0.35355338
        %v2269 = vmul.f32 %v2260, 0.35355338
        %v2270 = vmul.f32 %v2263, 0.35355338
        %v2271 = vmul.f32 %v2266, 0.35355338
        %v2272 = vadd.f32 %v2268, %v2199
        %v2273 = vadd.f32 %v2269, %v2200
        %v2274 = vadd.f32 %v2270, %v2201
        %v2275 = vadd.f32 %v2271, %v2202
        %vm2276 = vcmask 523264
        %v2277 = vsel %vm2276, %v2272, -inf
        %2278 = vmax.xlane.f32.xlu0 %v2277
        %v2279 = vpop.xlane.xlu0 %2278
        %v2280 = vsel %vm2276, %v2273, -inf
        %2281 = vmax.xlane.f32.xlu0 %v2280
        %v2282 = vpop.xlane.xlu0 %2281
        %v2283 = vsel %vm2276, %v2274, -inf
        %2284 = vmax.xlane.f32.xlu0 %v2283
        %v2285 = vpop.xlane.xlu0 %2284
        %v2286 = vsel %vm2276, %v2275, -inf
        %2287 = vmax.xlane.f32.xlu0 %v2286
        %v2288 = vpop.xlane.xlu0 %2287
        %v2289 = vsub.f32 %v2272, %v2279
        %v2290 = vsub.f32 %v2273, %v2282
        %v2291 = vsub.f32 %v2274, %v2285
        %v2292 = vsub.f32 %v2275, %v2288
        %v2293 = vmul.f32 %v2289, 1.442695
        %v2294 = vpow.pop %v2293
        %v2295 = vmul.f32 %v2290, 1.442695
        %v2296 = vpow.pop %v2295
        %v2297 = vmul.f32 %v2291, 1.442695
        %v2298 = vpow.pop %v2297
        %v2299 = vmul.f32 %v2292, 1.442695
        %v2300 = vpow.pop %v2299
        %v2301 = vsel %vm2276, %v2294, 0.0
        %2302 = vadd.xlane.f32.xlu0 %v2301
        %v2303 = vpop.xlane.xlu0 %2302
        %v2304 = vsel %vm2276, %v2296, 0.0
        %2305 = vadd.xlane.f32.xlu0 %v2304
        %v2306 = vpop.xlane.xlu0 %2305
        %v2307 = vsel %vm2276, %v2298, 0.0
        %2308 = vadd.xlane.f32.xlu0 %v2307
        %v2309 = vpop.xlane.xlu0 %2308
        %v2310 = vsel %vm2276, %v2300, 0.0
        %2311 = vadd.xlane.f32.xlu0 %v2310
        %v2312 = vpop.xlane.xlu0 %2311
        %v2313 = vrcp.pop %v2303
        %v2314 = vrcp.pop %v2306
        %v2315 = vrcp.pop %v2309
        %v2316 = vrcp.pop %v2312
        %v2317 = vmul.f32 %v2294, %v2313
        %v2318 = vmul.f32 %v2296, %v2314
        %v2319 = vmul.f32 %v2298, %v2315
        %v2320 = vmul.f32 %v2300, %v2316
        %v2322 = vsel %vm2276, %v2317, 0
        %v2325 = vsel %vm2276, %v2318, 0
        %v2328 = vsel %vm2276, %v2319, 0
        %v2331 = vsel %vm2276, %v2320, 0
        %2333 = vmatpush.msra.mxu0 0.0
        %2334 = vmatpush.msra.mxu0 0.0
        %2335 = vmatpush.msra.mxu0 0.0
        %2336 = vmatpush.msra.mxu0 0.0
        %2337 = vmatpush.msra.mxu0 0.0
        %2338 = vmatpush.msra.mxu0 0.0
        %2339 = vmatpush.msra.mxu0 0.0
        %2340 = vmatpush.msra.mxu0 0.0
        %2341 = vmatpush.msra.mxu0 %v2197
        %2342 = vmatpush.msra.mxu0 %v2194
        %2343 = vmatpush.msra.mxu0 %v2191
        %2344 = vmatpush.msra.mxu0 %v2188
        %2345 = vmatpush.msra.mxu0 %v2185
        %2346 = vmatpush.msra.mxu0 %v2182
        %2347 = vmatpush.msra.mxu0 %v2179
        %2348 = vmatpush.msra.mxu0 %v2176
        %2349 = vmatmul.f32.gmra.mxu0 %v2322
        %v2350 = vpop.f32.mrf.mxu0
        %v2351 = vadd.f32 0.0, %v2350
        %2352 = vmatmul.f32.gmra.mxu0 %v2325
        %v2353 = vpop.f32.mrf.mxu0
        %v2354 = vadd.f32 0.0, %v2353
        %2355 = vmatmul.f32.gmra.mxu0 %v2328
        %v2356 = vpop.f32.mrf.mxu0
        %v2357 = vadd.f32 0.0, %v2356
        %2358 = vmatmul.f32.gmra.mxu0 %v2331
        %v2359 = vpop.f32.mrf.mxu0
        %v2360 = vadd.f32 0.0, %v2359
        %2361 = vdwg.mxu0
        %v2362 = vld [vmem:[%s51] sm:$0xff]
        %v2363 = vld [vmem:[%s51 + $0x8] sm:$0xff]
        %v2365 = vsel %vm1245, %v2354, 0
        %2367 = vmatpush.msra.mxu0 0.0
        %2368 = vmatpush.msra.mxu0 0.0
        %2369 = vmatpush.msra.mxu0 0.0
        %2370 = vmatpush.msra.mxu0 0.0
        %2371 = vmatpush.msra.mxu0 0.0
        %2372 = vmatpush.msra.mxu0 0.0
        %2373 = vmatpush.msra.mxu0 0.0
        %2374 = vmatpush.msra.mxu0 0.0
        %2375 = vmatpush.msra.mxu0 0.0
        %2376 = vmatpush.msra.mxu0 0.0
        %2377 = vmatpush.msra.mxu0 0.0
        %2378 = vmatpush.msra.mxu0 0.0
        %2379 = vmatpush.msra.mxu0 0.0
        %2380 = vmatpush.msra.mxu0 0.0
        %2381 = vmatpush.msra.mxu0 0.0
        %2382 = vmatpush.msra.mxu0 %v2363
        %2383 = vmatmul.f32.gmra.mxu0 %v2365
        %v2384 = vpop.f32.mrf.mxu0
        %v2385 = vadd.f32 0.0, %v2384
        %2386 = vdwg.mxu0
        %v2388 = vsel %vm1245, %v2351, 0
        %2390 = vmatpush.msra.mxu0 0.0
        %2391 = vmatpush.msra.mxu0 0.0
        %2392 = vmatpush.msra.mxu0 0.0
        %2393 = vmatpush.msra.mxu0 0.0
        %2394 = vmatpush.msra.mxu0 0.0
        %2395 = vmatpush.msra.mxu0 0.0
        %2396 = vmatpush.msra.mxu0 0.0
        %2397 = vmatpush.msra.mxu0 0.0
        %2398 = vmatpush.msra.mxu0 0.0
        %2399 = vmatpush.msra.mxu0 0.0
        %2400 = vmatpush.msra.mxu0 0.0
        %2401 = vmatpush.msra.mxu0 0.0
        %2402 = vmatpush.msra.mxu0 0.0
        %2403 = vmatpush.msra.mxu0 0.0
        %2404 = vmatpush.msra.mxu0 0.0
        %2405 = vmatpush.msra.mxu0 %v2362
        %2406 = vmatmul.f32.gmra.mxu0 %v2388
        %v2407 = vpop.f32.mrf.mxu0
        %v2408 = vadd.f32 %v2385, %v2407
        %2409 = vdwg.mxu0
        %v2410 = vld [vmem:[%s51 + $0x10] sm:$0xff]
        %v2412 = vsel %vm1245, %v2357, 0
        %2414 = vmatpush.msra.mxu0 0.0
        %2415 = vmatpush.msra.mxu0 0.0
        %2416 = vmatpush.msra.mxu0 0.0
        %2417 = vmatpush.msra.mxu0 0.0
        %2418 = vmatpush.msra.mxu0 0.0
        %2419 = vmatpush.msra.mxu0 0.0
        %2420 = vmatpush.msra.mxu0 0.0
        %2421 = vmatpush.msra.mxu0 0.0
        %2422 = vmatpush.msra.mxu0 0.0
        %2423 = vmatpush.msra.mxu0 0.0
        %2424 = vmatpush.msra.mxu0 0.0
        %2425 = vmatpush.msra.mxu0 0.0
        %2426 = vmatpush.msra.mxu0 0.0
        %2427 = vmatpush.msra.mxu0 0.0
        %2428 = vmatpush.msra.mxu0 0.0
        %2429 = vmatpush.msra.mxu0 %v2410
        %2430 = vmatmul.f32.gmra.mxu0 %v2412
        %v2431 = vpop.f32.mrf.mxu0
        %v2432 = vadd.f32 0.0, %v2431
        %2433 = vdwg.mxu0
        %v2434 = vadd.f32 %v2408, %v2432
        %v2435 = vld [vmem:[%s51 + $0x18] sm:$0xff]
        %v2437 = vsel %vm1245, %v2360, 0
        %2439 = vmatpush.msra.mxu0 0.0
        %2440 = vmatpush.msra.mxu0 0.0
        %2441 = vmatpush.msra.mxu0 0.0
        %2442 = vmatpush.msra.mxu0 0.0
        %2443 = vmatpush.msra.mxu0 0.0
        %2444 = vmatpush.msra.mxu0 0.0
        %2445 = vmatpush.msra.mxu0 0.0
        %2446 = vmatpush.msra.mxu0 0.0
        %2447 = vmatpush.msra.mxu0 0.0
        %2448 = vmatpush.msra.mxu0 0.0
        %2449 = vmatpush.msra.mxu0 0.0
        %2450 = vmatpush.msra.mxu0 0.0
        %2451 = vmatpush.msra.mxu0 0.0
        %2452 = vmatpush.msra.mxu0 0.0
        %2453 = vmatpush.msra.mxu0 0.0
        %2454 = vmatpush.msra.mxu0 %v2435
        %2455 = vmatmul.f32.gmra.mxu0 %v2437
        %v2456 = vpop.f32.mrf.mxu0
        %v2457 = vadd.f32 0.0, %v2456
        %2458 = vdwg.mxu0
        %v2459 = vadd.f32 %v2434, %v2457
        %v2460 = vld [vmem:[%s53] sm:$0x1]
        %v2462 = vperm.slane %v2460, 0
        %v2464 = vadd.f32 %v2459, %v2462
        %v2465 = vadd.f32 %v2464, %v1772
        %v2466 = vld [vmem:[%s55] sm:$0x1]
        %v2467 = vld [vmem:[%s57] sm:$0x1]
        %v2468 = vsel %vm1165, %v2465, 0.0
        %2469 = vadd.xlane.f32.xlu0 %v2468
        %v2470 = vpop.xlane.xlu0 %2469
        %v2471 = vmul.f32 %v2470, %v1745
        %v2472 = vsub.f32 %v2465, %v2471
        %v2473 = vmul.f32 %v2472, %v2472
        %v2474 = vsel %vm1165, %v2473, 0.0
        %2475 = vadd.xlane.f32.xlu0 %v2474
        %v2476 = vpop.xlane.xlu0 %2475
        %v2477 = vmul.f32 %v2476, %v1745
        %v2478 = vadd.f32 %v2477, 1e-05
        %v2479 = vrsqrt.pop %v2478
        %v2480 = vmul.f32 %v2479, %v2478
        %v2481 = vmul.f32 %v2480, %v2479
        %v2482 = vmul.f32 0.5, %v2481
        %v2483 = vsub.f32 1.5, %v2482
        %v2484 = vmul.f32 %v2479, %v2483
        %vm2485 = vweird.f32 %v2478
        %vm2486 = vweird.f32 %v2479
        %vm2487 = vmor %vm2485, %vm2486
        %v2488 = vsel %vm2487, %v2479, %v2484
        %v2489 = vmul.f32 %v2472, %v2488
        %v2491 = vperm.slane %v2466, 0
        %v2493 = vmul.f32 %v2489, %v2491
        %v2495 = vperm.slane %v2467, 0
        %v2497 = vadd.f32 %v2493, %v2495
        %v2498 = vld [vmem:[%s59] sm:$0xff]
        %v2499 = vld [vmem:[%s59 + $0x8] sm:$0xff]
        %v2500 = vld [vmem:[%s59 + $0x10] sm:$0xff]
        %v2501 = vld [vmem:[%s59 + $0x18] sm:$0xff]
        %v2502 = vld [vmem:[%s61] sm:$0x1]
        %v2504 = vperm.slane %v2502, 0
        %v2507 = vsel %vm1165, %v2497, 0
        %2509 = vmatpush.msra.mxu0 0.0
        %2510 = vmatpush.msra.mxu0 0.0
        %2511 = vmatpush.msra.mxu0 0.0
        %2512 = vmatpush.msra.mxu0 0.0
        %2513 = vmatpush.msra.mxu0 0.0
        %2514 = vmatpush.msra.mxu0 0.0
        %2515 = vmatpush.msra.mxu0 0.0
        %2516 = vmatpush.msra.mxu0 0.0
        %2517 = vmatpush.msra.mxu0 0.0
        %2518 = vmatpush.msra.mxu0 0.0
        %2519 = vmatpush.msra.mxu0 0.0
        %2520 = vmatpush.msra.mxu0 0.0
        %2521 = vmatpush.msra.mxu0 %v2501
        %2522 = vmatpush.msra.mxu0 %v2500
        %2523 = vmatpush.msra.mxu0 %v2499
        %2524 = vmatpush.msra.mxu0 %v2498
        %2525 = vmatmul.f32.gmra.mxu0 %v2507
        %v2526 = vpop.f32.mrf.mxu0
        %v2527 = vadd.f32 %v2504, %v2526
        %2528 = vdwg.mxu0
        %v2529 = vmax.f32 %v2527, 0.0
        %v2530 = vld [vmem:[%s63] sm:$0xff]
        %v2531 = vld [vmem:[%s63 + $0x8] sm:$0xff]
        %v2532 = vld [vmem:[%s63 + $0x10] sm:$0xff]
        %v2533 = vld [vmem:[%s63 + $0x18] sm:$0xff]
        %v2534 = vld [vmem:[%s63 + $0x20] sm:$0xff]
        %v2535 = vld [vmem:[%s63 + $0x28] sm:$0xff]
        %v2536 = vld [vmem:[%s63 + $0x30] sm:$0xff]
        %v2537 = vld [vmem:[%s63 + $0x38] sm:$0xff]
        %v2538 = vld [vmem:[%s65] sm:$0x1]
        %v2540 = vperm.slane %v2538, 0
        %v2543 = vsel %vm2276, %v2529, 0
        %2545 = vmatpush.msra.mxu0 0.0
        %2546 = vmatpush.msra.mxu0 0.0
        %2547 = vmatpush.msra.mxu0 0.0
        %2548 = vmatpush.msra.mxu0 0.0
        %2549 = vmatpush.msra.mxu0 0.0
        %2550 = vmatpush.msra.mxu0 0.0
        %2551 = vmatpush.msra.mxu0 0.0
        %2552 = vmatpush.msra.mxu0 0.0
        %2553 = vmatpush.msra.mxu0 %v2537
        %2554 = vmatpush.msra.mxu0 %v2536
        %2555 = vmatpush.msra.mxu0 %v2535
        %2556 = vmatpush.msra.mxu0 %v2534
        %2557 = vmatpush.msra.mxu0 %v2533
        %2558 = vmatpush.msra.mxu0 %v2532
        %2559 = vmatpush.msra.mxu0 %v2531
        %2560 = vmatpush.msra.mxu0 %v2530
        %2561 = vmatmul.f32.gmra.mxu0 %v2543
        %v2562 = vpop.f32.mrf.mxu0
        %v2563 = vadd.f32 %v2540, %v2562
        %2564 = vdwg.mxu0
        %v2565 = vadd.f32 %v2563, %v2497
        %v2566 = vld [vmem:[%s67] sm:$0x1]
        %v2567 = vld [vmem:[%s69] sm:$0x1]
        %v2568 = vsel %vm1165, %v2565, 0.0
        %2569 = vadd.xlane.f32.xlu0 %v2568
        %v2570 = vpop.xlane.xlu0 %2569
        %v2571 = vmul.f32 %v2570, %v1745
        %v2572 = vsub.f32 %v2565, %v2571
        %v2573 = vmul.f32 %v2572, %v2572
        %v2574 = vsel %vm1165, %v2573, 0.0
        %2575 = vadd.xlane.f32.xlu0 %v2574
        %v2576 = vpop.xlane.xlu0 %2575
        %v2577 = vmul.f32 %v2576, %v1745
        %v2578 = vadd.f32 %v2577, 1e-05
        %v2579 = vrsqrt.pop %v2578
        %v2580 = vmul.f32 %v2579, %v2578
        %v2581 = vmul.f32 %v2580, %v2579
        %v2582 = vmul.f32 0.5, %v2581
        %v2583 = vsub.f32 1.5, %v2582
        %v2584 = vmul.f32 %v2579, %v2583
        %vm2585 = vweird.f32 %v2578
        %vm2586 = vweird.f32 %v2579
        %vm2587 = vmor %vm2585, %vm2586
        %v2588 = vsel %vm2587, %v2579, %v2584
        %v2589 = vmul.f32 %v2572, %v2588
        %v2591 = vperm.slane %v2566, 0
        %v2593 = vmul.f32 %v2589, %v2591
        %v2595 = vperm.slane %v2567, 0
        %v2597 = vadd.f32 %v2593, %v2595
        %2598 = vst.msk [vmem:[%s1106] sm:$0xff] %vm1165, %v2597
        %s2599 = sand.u32 %s848, 1
        %s2600 = scalar_lea.sflag [#allocation3], %s2599
        %s2601 = sand.u32 %s848, 1
        %s2602 = smul.addr %s2601, 8
        %s2603 = scalar_lea.vmem [#allocation2], %s2602
        // Predicated region
        $region161: #{decoder_sublayer.1} parent=159 // pred_check
          %p2604 = pneg %p858
        $region162: #{decoder_sublayer.1} parent=159 // pred_check_branch
          %2606 = sbr.rel (%p2604) target = $region164
        $region163: #{decoder_sublayer.1} parent=159 // pred_region
          %2608 = vsyncadd %s2600, 0
          %s2609 = smul.addr %s85, 8
          %s2610 = scalar_lea.hbm %s71, %s2609
          %s2612 = sshll.u32 %s2603, 4
          %s2613 = int_to_ptr.vmem [resolvable:$true] %s2612
          %s2614 = sshll.u32 %s2610, 4
          %s2615 = int_to_ptr.hbm [resolvable:$true] %s2614
          %2617 = dma.vmem_to_hbm [thread:$0]  %s2613, 128, %s2615, %s2600
        $region164: #{decoder_sublayer.1} parent=159 // pred_fallthru
          _
      $region160: #{decoder_sublayer.1} parent=5 // pred_fallthru
        _
      %p2618 = scmp.le.s32.totalorder 2, %s80
      // Predicated region
      $region165: #{decoder_sublayer.1} parent=5 // pred_check
        %p2619 = pneg %p2618
      $region166: #{decoder_sublayer.1} parent=5 // pred_check_branch
        %2621 = sbr.rel (%p2619) target = $region168
      $region167: #{decoder_sublayer.1} parent=5 // pred_region
        %s2622 = ssub.s32 %s80, 2
        // Predicated region
        $region169: #{decoder_sublayer.1} parent=167 // pred_check
          %p2623 = pneg %p864
        $region170: #{decoder_sublayer.1} parent=167 // pred_check_branch
          %2625 = sbr.rel (%p2623) target = $region172
        $region171: #{decoder_sublayer.1} parent=167 // pred_region
          %s2626 = sand.u32 %s849, 1
          %s2627 = scalar_lea.sflag [#allocation3], %s2626
          %s2628 = sand.u32 %s849, 1
          %s2629 = smul.addr %s2628, 8
          %s2630 = scalar_lea.vmem [#allocation2], %s2629
          %2632 = dma.done %s2627, 128
        $region172: #{decoder_sublayer.1} parent=167 // pred_fallthru
          _
      $region168: #{decoder_sublayer.1} parent=5 // pred_fallthru
        _
    $region6: #{decoder_sublayer.1} parent=1 // loop_footer
      %s84 = sadd.s32 1, %s80
    $region7: #{decoder_sublayer.1} parent=1 // loop_footer_branch
      %79 = sbr.rel target = $region3
    $region8: #{decoder_sublayer.1} parent=1 // loop_exit
      _
    %2633 = vsyncpa [#allocation3], 1
    %s2634 = scalar_lea.sflag [#allocation3], 1
    %2635 = vsyncpa %s2634, 1

</llo_original>
